<compile_context>
chip_gen: v7x
topology: tpu7x:2x2x1
jax: 0.10.0
libtpu: 0.0.40
codegen_flags: <defaults>
</compile_context>

<pallas_src>
import jax
import jax.numpy as jnp
from jax import lax
from jax.experimental import pallas as pl
from jax.experimental.pallas import tpu as pltpu

K = 5            # conv kernel size
PAD = 2          # conv padding
NEG_SLOPE = 0.2  # LeakyReLU slope
EPS = 1e-5       # BatchNorm eps
VMEM_LIMIT = 32 * 1024 * 1024  # explicit scoped-VMEM budget (safe on v5e/v6e/v7x)


def conv_residual_stats_kernel(xp_ref, w_ref, y_ref, stats_ref, patch_ref):
    """Pass 1: y = conv5x5(LeakyReLU(x)) + LeakyReLU(x), plus BN partial stats.

    xp_ref   : (1, H+2P, W+2P, Cin) f32   zero-padded input tile (one image)
    w_ref    : (K*K*Cin, Cout)      bf16  im2col weight matrix (VMEM-resident)
    y_ref    : (1, H, W, Cout)      f32   pre-normalization output tile
    stats_ref: (1, 2, Cout)         f32   per-image [sum(y), sum(y*y)] per channel
    patch_ref: (H, W, K*K*Cin)      f32   VMEM scratch: im2col buffer
    """
    xp = xp_ref[0]                                        # (Hp, Wp, Cin)
    a = jnp.where(xp >= 0.0, xp, NEG_SLOPE * xp)          # LeakyReLU, f32 (VPU)
    hp, wp, cin = a.shape
    h, w = hp - 2 * PAD, wp - 2 * PAD
    cout = y_ref.shape[-1]

    # im2col: column block t holds tap (kh, kw) of the activation.  These are
    # shifted H/W slices only -- no per-tap flatten/reshape relayouts.
    for kh in range(K):
        for kw in range(K):
            t = kh * K + kw
            patch_ref[:, :, t * cin:(t + 1) * cin] = a[kh:kh + h, kw:kw + w, :]

    # One consolidated MXU matmul over all taps and input channels:
    # (H*W, K*K*Cin) @ (K*K*Cin, Cout), bf16 inputs, f32 accumulation.
    patches = patch_ref[...].reshape(h * w, K * K * cin).astype(jnp.bfloat16)
    conv = jnp.dot(patches, w_ref[...], preferred_element_type=jnp.float32)
    conv = conv.reshape(h, w, cout)

    # Residual = LeakyReLU(x) interior (f32).  Conv bias omitted on purpose: a
    # per-channel constant is exactly cancelled by train-mode BN mean removal.
    y = conv + a[PAD:PAD + h, PAD:PAD + w, :]
    y_ref[0] = y

    # One-pass BN statistics: per-channel sum and sum of squares (f32).
    s = jnp.sum(jnp.sum(y, axis=0), axis=0, keepdims=True)          # (1, Cout)
    ss = jnp.sum(jnp.sum(y * y, axis=0), axis=0, keepdims=True)     # (1, Cout)
    stats_ref[0, 0:1, :] = s
    stats_ref[0, 1:2, :] = ss


def normalize_kernel(y_ref, scale_ref, shift_ref, o_ref):
    """Pass 2: out = y * scale + shift  (scale/shift fold BN mean/var/gamma/beta)."""
    o_ref[...] = y_ref[...] * scale_ref[...] + shift_ref[...]


@jax.jit
def skip_block_forward(x_nchw, w_oihw, bias, gamma, beta):
    """SkipBlock forward.  NCHW in / NCHW out (PyTorch convention)."""
    del bias  # exactly cancelled by the training-mode BN mean subtraction
    n, c, h, w = x_nchw.shape
    cout = w_oihw.shape[0]
    assert cout == c, "residual connection requires out_channels == in_channels"

    # Layout glue (see TODOs at top): NCHW -> NHWC + spatial zero-pad.
    # leaky_relu(0) == 0, so pad-then-activate inside the kernel is valid.
    x_nhwc = jnp.transpose(x_nchw, (0, 2, 3, 1)).astype(jnp.float32)
    xp = jnp.pad(x_nhwc, ((0, 0), (PAD, PAD), (PAD, PAD), (0, 0)))

    # (Cout, Cin, K, K) -> (K*K*Cin, Cout) im2col weight matrix, bf16 for MXU.
    w_col = (jnp.transpose(w_oihw, (2, 3, 1, 0))
             .reshape(K * K * c, cout).astype(jnp.bfloat16))

    # ---- pass 1: conv + residual tiles and per-image BN partial stats ------
    y_pre, stats = pl.pallas_call(
        conv_residual_stats_kernel,
        out_shape=(jax.ShapeDtypeStruct((n, h, w, cout), jnp.float32),
                   jax.ShapeDtypeStruct((n, 2, cout), jnp.float32)),
        grid_spec=pltpu.PrefetchScalarGridSpec(
            num_scalar_prefetch=0,
            grid=(n,),
            in_specs=[
                pl.BlockSpec((1, h + 2 * PAD, w + 2 * PAD, c),
                             lambda i: (i, 0, 0, 0)),
                pl.BlockSpec((K * K * c, cout), lambda i: (0, 0)),  # resident
            ],
            out_specs=[
                pl.BlockSpec((1, h, w, cout), lambda i: (i, 0, 0, 0)),
                pl.BlockSpec((1, 2, cout), lambda i: (i, 0, 0)),
            ],
            scratch_shapes=[pltpu.VMEM((h, w, K * K * c), jnp.float32)],
        ),
        compiler_params=pltpu.CompilerParams(
            dimension_semantics=("parallel",),
            vmem_limit_bytes=VMEM_LIMIT),
    )(xp, w_col)

    # ---- tiny O(C) stats combine: fold BN into per-channel scale / shift ---
    cnt = jnp.float32(n * h * w)
    sums = jnp.sum(stats, axis=0)                          # (2, C)
    mean = sums[0] / cnt
    var = jnp.maximum(sums[1] / cnt - mean * mean, 0.0)    # biased variance
    inv_std = lax.rsqrt(var + EPS)
    g = gamma.astype(jnp.float32)
    scale = (g * inv_std).reshape(1, 1, 1, cout)
    shift = (beta.astype(jnp.float32) - mean * g * inv_std).reshape(1, 1, 1, cout)

    # ---- pass 2: normalize --------------------------------------------------
    out_nhwc = pl.pallas_call(
        normalize_kernel,
        out_shape=jax.ShapeDtypeStruct((n, h, w, cout), jnp.float32),
        grid_spec=pltpu.PrefetchScalarGridSpec(
            num_scalar_prefetch=0,
            grid=(n,),
            in_specs=[
                pl.BlockSpec((1, h, w, cout), lambda i: (i, 0, 0, 0)),
                pl.BlockSpec((1, 1, 1, cout), lambda i: (0, 0, 0, 0)),  # resident
                pl.BlockSpec((1, 1, 1, cout), lambda i: (0, 0, 0, 0)),  # resident
            ],
            out_specs=pl.BlockSpec((1, h, w, cout), lambda i: (i, 0, 0, 0)),
        ),
        compiler_params=pltpu.CompilerParams(
            dimension_semantics=("parallel",),
            vmem_limit_bytes=VMEM_LIMIT),
    )(y_pre, scale, shift)

    return jnp.transpose(out_nhwc, (0, 3, 1, 2))  # back to NCHW


def ref_forward(x_nchw, w_oihw, bias, gamma, beta, matmul_bf16=False):
    """Pure-JAX reference mirroring the PyTorch forward."""
    a = jnp.where(x_nchw >= 0, x_nchw, NEG_SLOPE * x_nchw)
    if matmul_bf16:
        lhs, rhs = a.astype(jnp.bfloat16), w_oihw.astype(jnp.bfloat16)
    else:
        lhs, rhs = a, w_oihw
    conv = lax.conv_general_dilated(
        lhs, rhs, window_strides=(1, 1), padding=[(PAD, PAD), (PAD, PAD)],
        dimension_numbers=("NCHW", "OIHW", "NCHW"),
        preferred_element_type=jnp.float32)
    y = conv + bias[None, :, None, None] + a
    mean = jnp.mean(y, axis=(0, 2, 3), keepdims=True)
    var = jnp.mean((y - mean) ** 2, axis=(0, 2, 3), keepdims=True)
    y = (y - mean) * lax.rsqrt(var + EPS)
    return y * gamma[None, :, None, None] + beta[None, :, None, None]


if __name__ == "__main__":
    N, C, H, Wd = 2, 4, 16, 16

    key = jax.random.PRNGKey(0)
    kx, kw = jax.random.split(key)
    x = jax.random.normal(kx, (N, C, H, Wd), dtype=jnp.float32)

    # Deterministic parameter init matching the module __init__:
    w = 0.02 * jax.random.normal(kw, (C, C, K, K), dtype=jnp.float32)  # conv weight
    b = jnp.zeros((C,), jnp.float32)                                   # conv bias
    gamma = jnp.ones((C,), jnp.float32)                                # BN weight
    beta = jnp.zeros((C,), jnp.float32)                                # BN bias

    out = jax.block_until_ready(skip_block_forward(x, w, b, gamma, beta))
    assert out.shape == (N, C, H, Wd)

    # Tight check against a reference that mirrors the kernel's bf16 MXU inputs.
    ref_bf16 = jax.block_until_ready(
        ref_forward(x, w, b, gamma, beta, matmul_bf16=True))
    err_bf16 = float(jnp.max(jnp.abs(out - ref_bf16)))
    assert jnp.allclose(out, ref_bf16, atol=1e-4, rtol=1e-3), err_bf16

    # Fidelity check against the full-f32 PyTorch-equivalent reference
    # (difference is only the bf16 rounding of the MXU inputs).
    ref_f32 = jax.block_until_ready(ref_forward(x, w, b, gamma, beta))
    err_f32 = float(jnp.max(jnp.abs(out - ref_f32)))
    assert jnp.allclose(out, ref_f32, atol=2e-2, rtol=2e-2), err_f32

    print("KERNEL_OK")
</pallas_src>

<mosaic_0001>
module attributes {stable_mosaic.version = 11 : i64} {
  func.func @normalize_kernel(%arg0: i32, %arg1: memref<1x16x16x4xf32, #tpu.memory_space<vmem>>, %arg2: memref<1x1x1x4xf32, #tpu.memory_space<vmem>>, %arg3: memref<1x1x1x4xf32, #tpu.memory_space<vmem>>, %arg4: memref<1x16x16x4xf32, #tpu.memory_space<vmem>>) attributes {dimension_semantics = [#tpu.dimension_semantics<parallel>], iteration_bounds = array<i64: 2>, scalar_prefetch = 0 : i64, scratch_operands = 0 : i64, tpu.core_type = #tpu.core_type<tc>, window_params = [{transform_indices = @transform_0, window_bounds = array<i64: 1, 16, 16, 4>}, {pipeline_mode = #tpu.pipeline_mode<synchronous>, transform_indices = @transform_1, window_bounds = array<i64: 1, 1, 1, 4>}, {pipeline_mode = #tpu.pipeline_mode<synchronous>, transform_indices = @transform_2, window_bounds = array<i64: 1, 1, 1, 4>}, {transform_indices = @transform_3, window_bounds = array<i64: 1, 16, 16, 4>}]} {
    %c0 = arith.constant 0 : index
    %c0_0 = arith.constant 0 : index
    %c0_1 = arith.constant 0 : index
    %c0_2 = arith.constant 0 : index
    %0 = vector.load %arg1[%c0, %c0_0, %c0_1, %c0_2] : memref<1x16x16x4xf32, #tpu.memory_space<vmem>>, vector<1x16x16x4xf32>
    %c0_3 = arith.constant 0 : index
    %c0_4 = arith.constant 0 : index
    %c0_5 = arith.constant 0 : index
    %c0_6 = arith.constant 0 : index
    %1 = vector.load %arg2[%c0_3, %c0_4, %c0_5, %c0_6] : memref<1x1x1x4xf32, #tpu.memory_space<vmem>>, vector<1x1x1x4xf32>
    %2 = vector.broadcast %1 : vector<1x1x1x4xf32> to vector<1x16x16x4xf32>
    %3 = arith.mulf %0, %2 : vector<1x16x16x4xf32>
    %c0_7 = arith.constant 0 : index
    %c0_8 = arith.constant 0 : index
    %c0_9 = arith.constant 0 : index
    %c0_10 = arith.constant 0 : index
    %4 = vector.load %arg3[%c0_7, %c0_8, %c0_9, %c0_10] : memref<1x1x1x4xf32, #tpu.memory_space<vmem>>, vector<1x1x1x4xf32>
    %5 = vector.broadcast %4 : vector<1x1x1x4xf32> to vector<1x16x16x4xf32>
    %6 = arith.addf %3, %5 : vector<1x16x16x4xf32>
    %c0_11 = arith.constant 0 : index
    %c0_12 = arith.constant 0 : index
    %c0_13 = arith.constant 0 : index
    %c0_14 = arith.constant 0 : index
    %7 = vector.load %arg4[%c0_11, %c0_12, %c0_13, %c0_14] : memref<1x16x16x4xf32, #tpu.memory_space<vmem>>, vector<1x16x16x4xf32>
    tpu.vector_store %arg4[%c0_11, %c0_12, %c0_13, %c0_14], %6 {strides = array<i32>} : memref<1x16x16x4xf32, #tpu.memory_space<vmem>>, vector<1x16x16x4xf32>,
    return
  }
  func.func @transform_0(%arg0: i32) -> (i32, i32, i32, i32) {
    %c0_i32 = arith.constant 0 : i32
    %c0_i32_0 = arith.constant 0 : i32
    %c0_i32_1 = arith.constant 0 : i32
    %c0_i32_2 = arith.constant 0 : i32
    return %arg0, %c0_i32, %c0_i32_0, %c0_i32_1 : i32, i32, i32, i32
  }
  func.func @transform_1(%arg0: i32) -> (i32, i32, i32, i32) {
    %c0_i32 = arith.constant 0 : i32
    %c0_i32_0 = arith.constant 0 : i32
    %c0_i32_1 = arith.constant 0 : i32
    %c0_i32_2 = arith.constant 0 : i32
    %c0_i32_3 = arith.constant 0 : i32
    return %c0_i32, %c0_i32_0, %c0_i32_1, %c0_i32_2 : i32, i32, i32, i32
  }
  func.func @transform_2(%arg0: i32) -> (i32, i32, i32, i32) {
    %c0_i32 = arith.constant 0 : i32
    %c0_i32_0 = arith.constant 0 : i32
    %c0_i32_1 = arith.constant 0 : i32
    %c0_i32_2 = arith.constant 0 : i32
    %c0_i32_3 = arith.constant 0 : i32
    return %c0_i32, %c0_i32_0, %c0_i32_1, %c0_i32_2 : i32, i32, i32, i32
  }
  func.func @transform_3(%arg0: i32) -> (i32, i32, i32, i32) {
    %c0_i32 = arith.constant 0 : i32
    %c0_i32_0 = arith.constant 0 : i32
    %c0_i32_1 = arith.constant 0 : i32
    %c0_i32_2 = arith.constant 0 : i32
    return %arg0, %c0_i32, %c0_i32_0, %c0_i32_1 : i32, i32, i32, i32
  }
}

module attributes {stable_mosaic.version = 11 : i64} {
  func.func @conv_residual_stats_kernel(%arg0: i32, %arg1: memref<1x20x20x4xf32, #tpu.memory_space<vmem>>, %arg2: memref<100x4xbf16, #tpu.memory_space<vmem>>, %arg3: memref<1x16x16x4xf32, #tpu.memory_space<vmem>>, %arg4: memref<1x2x4xf32, #tpu.memory_space<vmem>>, %arg5: memref<16x16x100xf32, #tpu.memory_space<vmem>>) attributes {dimension_semantics = [#tpu.dimension_semantics<parallel>], iteration_bounds = array<i64: 2>, scalar_prefetch = 0 : i64, scratch_operands = 1 : i64, tpu.core_type = #tpu.core_type<tc>, window_params = [{transform_indices = @transform_0, window_bounds = array<i64: 1, 20, 20, 4>}, {pipeline_mode = #tpu.pipeline_mode<synchronous>, transform_indices = @transform_1, window_bounds = array<i64: 100, 4>}, {transform_indices = @transform_2, window_bounds = array<i64: 1, 16, 16, 4>}, {transform_indices = @transform_3, window_bounds = array<i64: 1, 2, 4>}]} {
    %c0 = arith.constant 0 : index
    %c0_0 = arith.constant 0 : index
    %c0_1 = arith.constant 0 : index
    %c0_2 = arith.constant 0 : index
    %0 = vector.load %arg1[%c0, %c0_0, %c0_1, %c0_2] : memref<1x20x20x4xf32, #tpu.memory_space<vmem>>, vector<1x20x20x4xf32>
    %1 = vector.shape_cast %0 : vector<1x20x20x4xf32> to vector<20x20x4xf32>
    %cst = arith.constant 0.000000e+00 : f32
    %2 = vector.broadcast %cst : f32 to vector<20x20x4xf32>
    %3 = arith.cmpf oge, %1, %2 : vector<20x20x4xf32>
    %cst_3 = arith.constant 2.000000e-01 : f32
    %4 = vector.broadcast %cst_3 : f32 to vector<20x20x4xf32>
    %5 = arith.mulf %4, %1 : vector<20x20x4xf32>
    %6 = arith.select %3, %1, %5 : vector<20x20x4xi1>, vector<20x20x4xf32>
    %7 = vector.extract_strided_slice %6 {offsets = [0, 0, 0], sizes = [16, 16, 4], strides = [1, 1, 1]} : vector<20x20x4xf32> to vector<16x16x4xf32>
    %c0_4 = arith.constant 0 : index
    %c0_5 = arith.constant 0 : index
    %c0_6 = arith.constant 0 : index
    %8 = vector.load %arg5[%c0_4, %c0_5, %c0_6] : memref<16x16x100xf32, #tpu.memory_space<vmem>>, vector<16x16x4xf32>
    tpu.vector_store %arg5[%c0_4, %c0_5, %c0_6], %7 {strides = array<i32>} : memref<16x16x100xf32, #tpu.memory_space<vmem>>, vector<16x16x4xf32>,
    %9 = vector.extract_strided_slice %6 {offsets = [0, 1, 0], sizes = [16, 16, 4], strides = [1, 1, 1]} : vector<20x20x4xf32> to vector<16x16x4xf32>
    %c0_7 = arith.constant 0 : index
    %c0_8 = arith.constant 0 : index
    %c4 = arith.constant 4 : index
    %10 = vector.load %arg5[%c0_7, %c0_8, %c4] : memref<16x16x100xf32, #tpu.memory_space<vmem>>, vector<16x16x4xf32>
    tpu.vector_store %arg5[%c0_7, %c0_8, %c4], %9 {strides = array<i32>} : memref<16x16x100xf32, #tpu.memory_space<vmem>>, vector<16x16x4xf32>,
    %11 = vector.extract_strided_slice %6 {offsets = [0, 2, 0], sizes = [16, 16, 4], strides = [1, 1, 1]} : vector<20x20x4xf32> to vector<16x16x4xf32>
    %c0_9 = arith.constant 0 : index
    %c0_10 = arith.constant 0 : index
    %c8 = arith.constant 8 : index
    %12 = vector.load %arg5[%c0_9, %c0_10, %c8] : memref<16x16x100xf32, #tpu.memory_space<vmem>>, vector<16x16x4xf32>
    tpu.vector_store %arg5[%c0_9, %c0_10, %c8], %11 {strides = array<i32>} : memref<16x16x100xf32, #tpu.memory_space<vmem>>, vector<16x16x4xf32>,
    %13 = vector.extract_strided_slice %6 {offsets = [0, 3, 0], sizes = [16, 16, 4], strides = [1, 1, 1]} : vector<20x20x4xf32> to vector<16x16x4xf32>
    %c0_11 = arith.constant 0 : index
    %c0_12 = arith.constant 0 : index
    %c12 = arith.constant 12 : index
    %14 = vector.load %arg5[%c0_11, %c0_12, %c12] : memref<16x16x100xf32, #tpu.memory_space<vmem>>, vector<16x16x4xf32>
    tpu.vector_store %arg5[%c0_11, %c0_12, %c12], %13 {strides = array<i32>} : memref<16x16x100xf32, #tpu.memory_space<vmem>>, vector<16x16x4xf32>,
    %15 = vector.extract_strided_slice %6 {offsets = [0, 4, 0], sizes = [16, 16, 4], strides = [1, 1, 1]} : vector<20x20x4xf32> to vector<16x16x4xf32>
    %c0_13 = arith.constant 0 : index
    %c0_14 = arith.constant 0 : index
    %c16 = arith.constant 16 : index
    %16 = vector.load %arg5[%c0_13, %c0_14, %c16] : memref<16x16x100xf32, #tpu.memory_space<vmem>>, vector<16x16x4xf32>
    tpu.vector_store %arg5[%c0_13, %c0_14, %c16], %15 {strides = array<i32>} : memref<16x16x100xf32, #tpu.memory_space<vmem>>, vector<16x16x4xf32>,
    %17 = vector.extract_strided_slice %6 {offsets = [1, 0, 0], sizes = [16, 16, 4], strides = [1, 1, 1]} : vector<20x20x4xf32> to vector<16x16x4xf32>
    %c0_15 = arith.constant 0 : index
    %c0_16 = arith.constant 0 : index
    %c20 = arith.constant 20 : index
    %18 = vector.load %arg5[%c0_15, %c0_16, %c20] : memref<16x16x100xf32, #tpu.memory_space<vmem>>, vector<16x16x4xf32>
    tpu.vector_store %arg5[%c0_15, %c0_16, %c20], %17 {strides = array<i32>} : memref<16x16x100xf32, #tpu.memory_space<vmem>>, vector<16x16x4xf32>,
    %19 = vector.extract_strided_slice %6 {offsets = [1, 1, 0], sizes = [16, 16, 4], strides = [1, 1, 1]} : vector<20x20x4xf32> to vector<16x16x4xf32>
    %c0_17 = arith.constant 0 : index
    %c0_18 = arith.constant 0 : index
    %c24 = arith.constant 24 : index
    %20 = vector.load %arg5[%c0_17, %c0_18, %c24] : memref<16x16x100xf32, #tpu.memory_space<vmem>>, vector<16x16x4xf32>
    tpu.vector_store %arg5[%c0_17, %c0_18, %c24], %19 {strides = array<i32>} : memref<16x16x100xf32, #tpu.memory_space<vmem>>, vector<16x16x4xf32>,
    %21 = vector.extract_strided_slice %6 {offsets = [1, 2, 0], sizes = [16, 16, 4], strides = [1, 1, 1]} : vector<20x20x4xf32> to vector<16x16x4xf32>
    %c0_19 = arith.constant 0 : index
    %c0_20 = arith.constant 0 : index
    %c28 = arith.constant 28 : index
    %22 = vector.load %arg5[%c0_19, %c0_20, %c28] : memref<16x16x100xf32, #tpu.memory_space<vmem>>, vector<16x16x4xf32>
    tpu.vector_store %arg5[%c0_19, %c0_20, %c28], %21 {strides = array<i32>} : memref<16x16x100xf32, #tpu.memory_space<vmem>>, vector<16x16x4xf32>,
    %23 = vector.extract_strided_slice %6 {offsets = [1, 3, 0], sizes = [16, 16, 4], strides = [1, 1, 1]} : vector<20x20x4xf32> to vector<16x16x4xf32>
    %c0_21 = arith.constant 0 : index
    %c0_22 = arith.constant 0 : index
    %c32 = arith.constant 32 : index
    %24 = vector.load %arg5[%c0_21, %c0_22, %c32] : memref<16x16x100xf32, #tpu.memory_space<vmem>>, vector<16x16x4xf32>
    tpu.vector_store %arg5[%c0_21, %c0_22, %c32], %23 {strides = array<i32>} : memref<16x16x100xf32, #tpu.memory_space<vmem>>, vector<16x16x4xf32>,
    %25 = vector.extract_strided_slice %6 {offsets = [1, 4, 0], sizes = [16, 16, 4], strides = [1, 1, 1]} : vector<20x20x4xf32> to vector<16x16x4xf32>
    %c0_23 = arith.constant 0 : index
    %c0_24 = arith.constant 0 : index
    %c36 = arith.constant 36 : index
    %26 = vector.load %arg5[%c0_23, %c0_24, %c36] : memref<16x16x100xf32, #tpu.memory_space<vmem>>, vector<16x16x4xf32>
    tpu.vector_store %arg5[%c0_23, %c0_24, %c36], %25 {strides = array<i32>} : memref<16x16x100xf32, #tpu.memory_space<vmem>>, vector<16x16x4xf32>,
    %27 = vector.extract_strided_slice %6 {offsets = [2, 0, 0], sizes = [16, 16, 4], strides = [1, 1, 1]} : vector<20x20x4xf32> to vector<16x16x4xf32>
    %c0_25 = arith.constant 0 : index
    %c0_26 = arith.constant 0 : index
    %c40 = arith.constant 40 : index
    %28 = vector.load %arg5[%c0_25, %c0_26, %c40] : memref<16x16x100xf32, #tpu.memory_space<vmem>>, vector<16x16x4xf32>
    tpu.vector_store %arg5[%c0_25, %c0_26, %c40], %27 {strides = array<i32>} : memref<16x16x100xf32, #tpu.memory_space<vmem>>, vector<16x16x4xf32>,
    %29 = vector.extract_strided_slice %6 {offsets = [2, 1, 0], sizes = [16, 16, 4], strides = [1, 1, 1]} : vector<20x20x4xf32> to vector<16x16x4xf32>
    %c0_27 = arith.constant 0 : index
    %c0_28 = arith.constant 0 : index
    %c44 = arith.constant 44 : index
    %30 = vector.load %arg5[%c0_27, %c0_28, %c44] : memref<16x16x100xf32, #tpu.memory_space<vmem>>, vector<16x16x4xf32>
    tpu.vector_store %arg5[%c0_27, %c0_28, %c44], %29 {strides = array<i32>} : memref<16x16x100xf32, #tpu.memory_space<vmem>>, vector<16x16x4xf32>,
    %31 = vector.extract_strided_slice %6 {offsets = [2, 2, 0], sizes = [16, 16, 4], strides = [1, 1, 1]} : vector<20x20x4xf32> to vector<16x16x4xf32>
    %c0_29 = arith.constant 0 : index
    %c0_30 = arith.constant 0 : index
    %c48 = arith.constant 48 : index
    %32 = vector.load %arg5[%c0_29, %c0_30, %c48] : memref<16x16x100xf32, #tpu.memory_space<vmem>>, vector<16x16x4xf32>
    tpu.vector_store %arg5[%c0_29, %c0_30, %c48], %31 {strides = array<i32>} : memref<16x16x100xf32, #tpu.memory_space<vmem>>, vector<16x16x4xf32>,
    %33 = vector.extract_strided_slice %6 {offsets = [2, 3, 0], sizes = [16, 16, 4], strides = [1, 1, 1]} : vector<20x20x4xf32> to vector<16x16x4xf32>
    %c0_31 = arith.constant 0 : index
    %c0_32 = arith.constant 0 : index
    %c52 = arith.constant 52 : index
    %34 = vector.load %arg5[%c0_31, %c0_32, %c52] : memref<16x16x100xf32, #tpu.memory_space<vmem>>, vector<16x16x4xf32>
    tpu.vector_store %arg5[%c0_31, %c0_32, %c52], %33 {strides = array<i32>} : memref<16x16x100xf32, #tpu.memory_space<vmem>>, vector<16x16x4xf32>,
    %35 = vector.extract_strided_slice %6 {offsets = [2, 4, 0], sizes = [16, 16, 4], strides = [1, 1, 1]} : vector<20x20x4xf32> to vector<16x16x4xf32>
    %c0_33 = arith.constant 0 : index
    %c0_34 = arith.constant 0 : index
    %c56 = arith.constant 56 : index
    %36 = vector.load %arg5[%c0_33, %c0_34, %c56] : memref<16x16x100xf32, #tpu.memory_space<vmem>>, vector<16x16x4xf32>
    tpu.vector_store %arg5[%c0_33, %c0_34, %c56], %35 {strides = array<i32>} : memref<16x16x100xf32, #tpu.memory_space<vmem>>, vector<16x16x4xf32>,
    %37 = vector.extract_strided_slice %6 {offsets = [3, 0, 0], sizes = [16, 16, 4], strides = [1, 1, 1]} : vector<20x20x4xf32> to vector<16x16x4xf32>
    %c0_35 = arith.constant 0 : index
    %c0_36 = arith.constant 0 : index
    %c60 = arith.constant 60 : index
    %38 = vector.load %arg5[%c0_35, %c0_36, %c60] : memref<16x16x100xf32, #tpu.memory_space<vmem>>, vector<16x16x4xf32>
    tpu.vector_store %arg5[%c0_35, %c0_36, %c60], %37 {strides = array<i32>} : memref<16x16x100xf32, #tpu.memory_space<vmem>>, vector<16x16x4xf32>,
    %39 = vector.extract_strided_slice %6 {offsets = [3, 1, 0], sizes = [16, 16, 4], strides = [1, 1, 1]} : vector<20x20x4xf32> to vector<16x16x4xf32>
    %c0_37 = arith.constant 0 : index
    %c0_38 = arith.constant 0 : index
    %c64 = arith.constant 64 : index
    %40 = vector.load %arg5[%c0_37, %c0_38, %c64] : memref<16x16x100xf32, #tpu.memory_space<vmem>>, vector<16x16x4xf32>
    tpu.vector_store %arg5[%c0_37, %c0_38, %c64], %39 {strides = array<i32>} : memref<16x16x100xf32, #tpu.memory_space<vmem>>, vector<16x16x4xf32>,
    %41 = vector.extract_strided_slice %6 {offsets = [3, 2, 0], sizes = [16, 16, 4], strides = [1, 1, 1]} : vector<20x20x4xf32> to vector<16x16x4xf32>
    %c0_39 = arith.constant 0 : index
    %c0_40 = arith.constant 0 : index
    %c68 = arith.constant 68 : index
    %42 = vector.load %arg5[%c0_39, %c0_40, %c68] : memref<16x16x100xf32, #tpu.memory_space<vmem>>, vector<16x16x4xf32>
    tpu.vector_store %arg5[%c0_39, %c0_40, %c68], %41 {strides = array<i32>} : memref<16x16x100xf32, #tpu.memory_space<vmem>>, vector<16x16x4xf32>,
    %43 = vector.extract_strided_slice %6 {offsets = [3, 3, 0], sizes = [16, 16, 4], strides = [1, 1, 1]} : vector<20x20x4xf32> to vector<16x16x4xf32>
    %c0_41 = arith.constant 0 : index
    %c0_42 = arith.constant 0 : index
    %c72 = arith.constant 72 : index
    %44 = vector.load %arg5[%c0_41, %c0_42, %c72] : memref<16x16x100xf32, #tpu.memory_space<vmem>>, vector<16x16x4xf32>
    tpu.vector_store %arg5[%c0_41, %c0_42, %c72], %43 {strides = array<i32>} : memref<16x16x100xf32, #tpu.memory_space<vmem>>, vector<16x16x4xf32>,
    %45 = vector.extract_strided_slice %6 {offsets = [3, 4, 0], sizes = [16, 16, 4], strides = [1, 1, 1]} : vector<20x20x4xf32> to vector<16x16x4xf32>
    %c0_43 = arith.constant 0 : index
    %c0_44 = arith.constant 0 : index
    %c76 = arith.constant 76 : index
    %46 = vector.load %arg5[%c0_43, %c0_44, %c76] : memref<16x16x100xf32, #tpu.memory_space<vmem>>, vector<16x16x4xf32>
    tpu.vector_store %arg5[%c0_43, %c0_44, %c76], %45 {strides = array<i32>} : memref<16x16x100xf32, #tpu.memory_space<vmem>>, vector<16x16x4xf32>,
    %47 = vector.extract_strided_slice %6 {offsets = [4, 0, 0], sizes = [16, 16, 4], strides = [1, 1, 1]} : vector<20x20x4xf32> to vector<16x16x4xf32>
    %c0_45 = arith.constant 0 : index
    %c0_46 = arith.constant 0 : index
    %c80 = arith.constant 80 : index
    %48 = vector.load %arg5[%c0_45, %c0_46, %c80] : memref<16x16x100xf32, #tpu.memory_space<vmem>>, vector<16x16x4xf32>
    tpu.vector_store %arg5[%c0_45, %c0_46, %c80], %47 {strides = array<i32>} : memref<16x16x100xf32, #tpu.memory_space<vmem>>, vector<16x16x4xf32>,
    %49 = vector.extract_strided_slice %6 {offsets = [4, 1, 0], sizes = [16, 16, 4], strides = [1, 1, 1]} : vector<20x20x4xf32> to vector<16x16x4xf32>
    %c0_47 = arith.constant 0 : index
    %c0_48 = arith.constant 0 : index
    %c84 = arith.constant 84 : index
    %50 = vector.load %arg5[%c0_47, %c0_48, %c84] : memref<16x16x100xf32, #tpu.memory_space<vmem>>, vector<16x16x4xf32>
    tpu.vector_store %arg5[%c0_47, %c0_48, %c84], %49 {strides = array<i32>} : memref<16x16x100xf32, #tpu.memory_space<vmem>>, vector<16x16x4xf32>,
    %51 = vector.extract_strided_slice %6 {offsets = [4, 2, 0], sizes = [16, 16, 4], strides = [1, 1, 1]} : vector<20x20x4xf32> to vector<16x16x4xf32>
    %c0_49 = arith.constant 0 : index
    %c0_50 = arith.constant 0 : index
    %c88 = arith.constant 88 : index
    %52 = vector.load %arg5[%c0_49, %c0_50, %c88] : memref<16x16x100xf32, #tpu.memory_space<vmem>>, vector<16x16x4xf32>
    tpu.vector_store %arg5[%c0_49, %c0_50, %c88], %51 {strides = array<i32>} : memref<16x16x100xf32, #tpu.memory_space<vmem>>, vector<16x16x4xf32>,
    %53 = vector.extract_strided_slice %6 {offsets = [4, 3, 0], sizes = [16, 16, 4], strides = [1, 1, 1]} : vector<20x20x4xf32> to vector<16x16x4xf32>
    %c0_51 = arith.constant 0 : index
    %c0_52 = arith.constant 0 : index
    %c92 = arith.constant 92 : index
    %54 = vector.load %arg5[%c0_51, %c0_52, %c92] : memref<16x16x100xf32, #tpu.memory_space<vmem>>, vector<16x16x4xf32>
    tpu.vector_store %arg5[%c0_51, %c0_52, %c92], %53 {strides = array<i32>} : memref<16x16x100xf32, #tpu.memory_space<vmem>>, vector<16x16x4xf32>,
    %55 = vector.extract_strided_slice %6 {offsets = [4, 4, 0], sizes = [16, 16, 4], strides = [1, 1, 1]} : vector<20x20x4xf32> to vector<16x16x4xf32>
    %c0_53 = arith.constant 0 : index
    %c0_54 = arith.constant 0 : index
    %c96 = arith.constant 96 : index
    %56 = vector.load %arg5[%c0_53, %c0_54, %c96] : memref<16x16x100xf32, #tpu.memory_space<vmem>>, vector<16x16x4xf32>
    tpu.vector_store %arg5[%c0_53, %c0_54, %c96], %55 {strides = array<i32>} : memref<16x16x100xf32, #tpu.memory_space<vmem>>, vector<16x16x4xf32>,
    %c0_55 = arith.constant 0 : index
    %c0_56 = arith.constant 0 : index
    %c0_57 = arith.constant 0 : index
    %57 = vector.load %arg5[%c0_55, %c0_56, %c0_57] : memref<16x16x100xf32, #tpu.memory_space<vmem>>, vector<16x16x100xf32>
    %58 = vector.shape_cast %57 : vector<16x16x100xf32> to vector<256x100xf32>
    %59 = arith.truncf %58 : vector<256x100xf32> to vector<256x100xbf16>
    %c0_58 = arith.constant 0 : index
    %c0_59 = arith.constant 0 : index
    %60 = vector.load %arg2[%c0_58, %c0_59] : memref<100x4xbf16, #tpu.memory_space<vmem>>, vector<100x4xbf16>
    %cst_60 = arith.constant dense<0.000000e+00> : vector<256x4xf32>
    %61 = tpu.matmul %59, %60, %cst_60 {dimension_numbers = #tpu.dot_dimension_numbers<[1], [0], [0], [1], [0, 0, 1, 1], [], []>} : vector<256x100xbf16>, vector<100x4xbf16>, vector<256x4xf32> -> vector<256x4xf32>
    %62 = vector.shape_cast %61 : vector<256x4xf32> to vector<16x16x4xf32>
    %63 = vector.extract_strided_slice %6 {offsets = [2, 2, 0], sizes = [16, 16, 4], strides = [1, 1, 1]} : vector<20x20x4xf32> to vector<16x16x4xf32>
    %64 = arith.addf %62, %63 : vector<16x16x4xf32>
    %c0_61 = arith.constant 0 : index
    %c0_62 = arith.constant 0 : index
    %c0_63 = arith.constant 0 : index
    %c0_64 = arith.constant 0 : index
    %65 = vector.load %arg3[%c0_61, %c0_62, %c0_63, %c0_64] : memref<1x16x16x4xf32, #tpu.memory_space<vmem>>, vector<1x16x16x4xf32>
    %66 = vector.shape_cast %65 : vector<1x16x16x4xf32> to vector<16x16x4xf32>
    %67 = vector.shape_cast %64 : vector<16x16x4xf32> to vector<1x16x16x4xf32>
    tpu.vector_store %arg3[%c0_61, %c0_62, %c0_63, %c0_64], %67 {strides = array<i32>} : memref<1x16x16x4xf32, #tpu.memory_space<vmem>>, vector<1x16x16x4xf32>,
    %cst_65 = arith.constant dense<0.000000e+00> : vector<16x4xf32>
    %68 = vector.multi_reduction <add>, %64, %cst_65 [0] : vector<16x16x4xf32> to vector<16x4xf32>
    %cst_66 = arith.constant dense<0.000000e+00> : vector<4xf32>
    %69 = vector.multi_reduction <add>, %68, %cst_66 [0] : vector<16x4xf32> to vector<4xf32>
    %70 = vector.shape_cast %69 : vector<4xf32> to vector<1x4xf32>
    %71 = arith.mulf %64, %64 : vector<16x16x4xf32>
    %cst_67 = arith.constant dense<0.000000e+00> : vector<16x4xf32>
    %72 = vector.multi_reduction <add>, %71, %cst_67 [0] : vector<16x16x4xf32> to vector<16x4xf32>
    %cst_68 = arith.constant dense<0.000000e+00> : vector<4xf32>
    %73 = vector.multi_reduction <add>, %72, %cst_68 [0] : vector<16x4xf32> to vector<4xf32>
    %74 = vector.shape_cast %73 : vector<4xf32> to vector<1x4xf32>
    %c0_69 = arith.constant 0 : index
    %c0_70 = arith.constant 0 : index
    %c0_71 = arith.constant 0 : index
    %75 = vector.load %arg4[%c0_69, %c0_70, %c0_71] : memref<1x2x4xf32, #tpu.memory_space<vmem>>, vector<1x1x4xf32>
    %76 = vector.shape_cast %75 : vector<1x1x4xf32> to vector<1x4xf32>
    %77 = vector.shape_cast %70 : vector<1x4xf32> to vector<1x1x4xf32>
    tpu.vector_store %arg4[%c0_69, %c0_70, %c0_71], %77 {strides = array<i32>} : memref<1x2x4xf32, #tpu.memory_space<vmem>>, vector<1x1x4xf32>,
    %c0_72 = arith.constant 0 : index
    %c1 = arith.constant 1 : index
    %c0_73 = arith.constant 0 : index
    %78 = vector.load %arg4[%c0_72, %c1, %c0_73] : memref<1x2x4xf32, #tpu.memory_space<vmem>>, vector<1x1x4xf32>
    %79 = vector.shape_cast %78 : vector<1x1x4xf32> to vector<1x4xf32>
    %80 = vector.shape_cast %74 : vector<1x4xf32> to vector<1x1x4xf32>
    tpu.vector_store %arg4[%c0_72, %c1, %c0_73], %80 {strides = array<i32>} : memref<1x2x4xf32, #tpu.memory_space<vmem>>, vector<1x1x4xf32>,
    return
  }
  func.func @transform_0(%arg0: i32) -> (i32, i32, i32, i32) {
    %c0_i32 = arith.constant 0 : i32
    %c0_i32_0 = arith.constant 0 : i32
    %c0_i32_1 = arith.constant 0 : i32
    %c0_i32_2 = arith.constant 0 : i32
    return %arg0, %c0_i32, %c0_i32_0, %c0_i32_1 : i32, i32, i32, i32
  }
  func.func @transform_1(%arg0: i32) -> (i32, i32) {
    %c0_i32 = arith.constant 0 : i32
    %c0_i32_0 = arith.constant 0 : i32
    %c0_i32_1 = arith.constant 0 : i32
    return %c0_i32, %c0_i32_0 : i32, i32
  }
  func.func @transform_2(%arg0: i32) -> (i32, i32, i32, i32) {
    %c0_i32 = arith.constant 0 : i32
    %c0_i32_0 = arith.constant 0 : i32
    %c0_i32_1 = arith.constant 0 : i32
    %c0_i32_2 = arith.constant 0 : i32
    return %arg0, %c0_i32, %c0_i32_0, %c0_i32_1 : i32, i32, i32, i32
  }
  func.func @transform_3(%arg0: i32) -> (i32, i32, i32) {
    %c0_i32 = arith.constant 0 : i32
    %c0_i32_0 = arith.constant 0 : i32
    %c0_i32_1 = arith.constant 0 : i32
    return %arg0, %c0_i32, %c0_i32_0 : i32, i32, i32
  }
}

</mosaic_0001>

<llo_original>
// kernel: skip_block_forward.3
$region0: #{skip_block_forward.3}
  #allocation0 [shape = 'u32[]', space=smem, size = 0x4, offset = 0x4, fixed_abs, tag = 'smem constant byte address 0x4 - core index']
  #allocation1 [shape = 'u32[144,128]{1,0:T(1,128)}', space=vmem, size = 0x12000, scoped, tag = 'internal scratch']
  %s0 = inlined_call_operand.vmem [shape: f32[2,16,16,4], index: 0, kind: input, shape index: {}]
  %s1 = inlined_call_operand.vmem [shape: f32[1,1,1,4], index: 1, kind: input, shape index: {}]
  %s2 = inlined_call_operand.vmem [shape: f32[1,1,1,4], index: 2, kind: input, shape index: {}]
  %s3 = inlined_call_operand.vmem [shape: f32[2,16,16,4], index: 3, kind: output, shape index: {}]
  %s4 = sld [smem:[#allocation0]]
  $region45: #{skip_block_forward.3} parent=0
    _
  %s6 = ssub.s32 1, %s4
  %s7 = scalar_select 0, %s6, %s4
  loop: start=0, step=1, limit=4
  $region2: #{skip_block_forward.3} parent=0 // loop_pre_header
    _
  $region3: #{skip_block_forward.3} parent=0 // loop_header
    %s9 = sphi 0, %s13
    %p10 = scmp.ge.s32.totalorder %s9, 4
    %s19 = sphi 0, %s21
    %s22 = sphi 0, %s19
    %s23 = sphi 0, %s22
    %s39 = sphi 0, %s23
    %s43 = sphi 0, %s43
    %s45 = sphi 0, %s43
    %s46 = sphi 0, %s45
    %s60 = sphi 0, %s46
    %s64 = sphi 0, %s64
    %s66 = sphi 0, %s64
    %s67 = sphi 0, %s66
    %s81 = sphi 0, %s67
    %s87 = sphi 0, %s89
    %s90 = sphi 0, %s87
    %s91 = sphi 0, %s90
    %s107 = sphi 0, %s91
  $region4: #{skip_block_forward.3} parent=0 // loop_header_branch
    %12 = sbr.rel (%p10) target = $region8
  $region5: #{skip_block_forward.3} parent=0 // loop_body
    %s14 = ssub.s32 %s9, 1
    %s15 = ssub.s32 %s9, 2
    %s16 = sadd.s32 %s9, 1
    %s17 = ssub.s32 %s9, %s16
    %p18 = scmp.eq.s32.totalorder %s17, 0
    %s20 = sadd.s32 %s19, 1
    %s21 = scalar_select %p18, %s19, %s20
    %p24 = pneg %p18
    %p25 = scmp.eq.s32.totalorder %s9, 1
    %p26 = por %p24, %p25
    %p27 = scmp.ne.s32.totalorder %s19, %s22
    %p28 = scmp.eq.s32.totalorder %s9, 0
    %p29 = por %p27, %p28
    %p30 = scmp.ne.s32.totalorder %s19, %s22
    %p31 = scmp.eq.s32.totalorder %s14, 1
    %p32 = por %p30, %p31
    %p33 = scmp.ne.s32.totalorder %s22, %s23
    %p34 = scmp.eq.s32.totalorder %s14, 0
    %p35 = por %p33, %p34
    %p36 = scmp.ne.s32.totalorder %s22, %s23
    %p37 = scmp.eq.s32.totalorder %s15, 1
    %p38 = por %p36, %p37
    %p40 = scmp.ne.s32.totalorder %s23, %s39
    %p41 = scmp.eq.s32.totalorder %s15, 0
    %p42 = por %p40, %p41
    %s44 = sadd.s32 %s43, 1
    %p47 = scmp.eq.s32.totalorder %s9, 1
    %p48 = scmp.ne.s32.totalorder %s43, %s45
    %p49 = scmp.eq.s32.totalorder %s9, 0
    %p50 = por %p48, %p49
    %p51 = scmp.ne.s32.totalorder %s43, %s45
    %p52 = scmp.eq.s32.totalorder %s14, 1
    %p53 = por %p51, %p52
    %p54 = scmp.ne.s32.totalorder %s45, %s46
    %p55 = scmp.eq.s32.totalorder %s14, 0
    %p56 = por %p54, %p55
    %p57 = scmp.ne.s32.totalorder %s45, %s46
    %p58 = scmp.eq.s32.totalorder %s15, 1
    %p59 = por %p57, %p58
    %p61 = scmp.ne.s32.totalorder %s46, %s60
    %p62 = scmp.eq.s32.totalorder %s15, 0
    %p63 = por %p61, %p62
    %s65 = sadd.s32 %s64, 1
    %p68 = scmp.eq.s32.totalorder %s9, 1
    %p69 = scmp.ne.s32.totalorder %s64, %s66
    %p70 = scmp.eq.s32.totalorder %s9, 0
    %p71 = por %p69, %p70
    %p72 = scmp.ne.s32.totalorder %s64, %s66
    %p73 = scmp.eq.s32.totalorder %s14, 1
    %p74 = por %p72, %p73
    %p75 = scmp.ne.s32.totalorder %s66, %s67
    %p76 = scmp.eq.s32.totalorder %s14, 0
    %p77 = por %p75, %p76
    %p78 = scmp.ne.s32.totalorder %s66, %s67
    %p79 = scmp.eq.s32.totalorder %s15, 1
    %p80 = por %p78, %p79
    %p82 = scmp.ne.s32.totalorder %s67, %s81
    %p83 = scmp.eq.s32.totalorder %s15, 0
    %p84 = por %p82, %p83
    %s85 = ssub.s32 %s9, %s16
    %p86 = scmp.eq.s32.totalorder %s85, 0
    %s88 = sadd.s32 %s87, 1
    %s89 = scalar_select %p86, %s87, %s88
    %p92 = pneg %p86
    %p93 = scmp.eq.s32.totalorder %s9, 1
    %p94 = por %p92, %p93
    %p95 = scmp.ne.s32.totalorder %s87, %s90
    %p96 = scmp.eq.s32.totalorder %s9, 0
    %p97 = por %p95, %p96
    %p98 = scmp.ne.s32.totalorder %s87, %s90
    %p99 = scmp.eq.s32.totalorder %s14, 1
    %p100 = por %p98, %p99
    %p101 = scmp.ne.s32.totalorder %s90, %s91
    %p102 = scmp.eq.s32.totalorder %s14, 0
    %p103 = por %p101, %p102
    %p104 = scmp.ne.s32.totalorder %s90, %s91
    %p105 = scmp.eq.s32.totalorder %s15, 1
    %p106 = por %p104, %p105
    %p108 = scmp.ne.s32.totalorder %s91, %s107
    %p109 = scmp.eq.s32.totalorder %s15, 0
    %p110 = por %p108, %p109
    %p111 = scmp.le.s32.totalorder 1, %s9
    %p112 = scmp.lt.s32.totalorder %s9, 3
    %p113 = pnand %p111, %p112
    %p114 = pneg %p113
    // Predicated region
    $region9: #{skip_block_forward.3} parent=5 // pred_check
      _
    $region10: #{skip_block_forward.3} parent=5 // pred_check_branch
      %116 = sbr.rel (%p113) target = $region12
    $region11: #{skip_block_forward.3} parent=5 // pred_region
      %s117 = ssub.s32 %s9, 1
      // Predicated region
      $region13: #{skip_block_forward.3} parent=11 // pred_check
        %p118 = pneg %p56
      $region14: #{skip_block_forward.3} parent=11 // pred_check_branch
        %120 = sbr.rel (%p118) target = $region16
      $region15: #{skip_block_forward.3} parent=11 // pred_region
        _
      $region16: #{skip_block_forward.3} parent=11 // pred_fallthru
        _
      // Predicated region
      $region17: #{skip_block_forward.3} parent=11 // pred_check
        %p121 = pneg %p77
      $region18: #{skip_block_forward.3} parent=11 // pred_check_branch
        %123 = sbr.rel (%p121) target = $region20
      $region19: #{skip_block_forward.3} parent=11 // pred_region
        _
      $region20: #{skip_block_forward.3} parent=11 // pred_fallthru
        _
    $region12: #{skip_block_forward.3} parent=5 // pred_fallthru
      _
    %p124 = scmp.lt.s32.totalorder %s9, 2
    // Predicated region
    $region21: #{skip_block_forward.3} parent=5 // pred_check
      %p125 = pneg %p124
    $region22: #{skip_block_forward.3} parent=5 // pred_check_branch
      %127 = sbr.rel (%p125) target = $region24
    $region23: #{skip_block_forward.3} parent=5 // pred_region
      // Predicated region
      $region25: #{skip_block_forward.3} parent=23 // pred_check
        %p128 = pneg %p29
      $region26: #{skip_block_forward.3} parent=23 // pred_check_branch
        %130 = sbr.rel (%p128) target = $region28
      $region27: #{skip_block_forward.3} parent=23 // pred_region
        %p131 = scmp.lt.s32.totalorder %s9, 1
        %s132 = scalar_select %p131, %s9, 1
        %s133 = smul.addr %s132, 32
        %s134 = smul.addr %s133, 8
        %s135 = scalar_lea.vmem %s0, %s134
      $region28: #{skip_block_forward.3} parent=23 // pred_fallthru
        _
    $region24: #{skip_block_forward.3} parent=5 // pred_fallthru
      _
    %p136 = scmp.le.s32.totalorder 1, %s9
    %p137 = scmp.lt.s32.totalorder %s9, 3
    %p138 = pnand %p136, %p137
    %p139 = pneg %p138
    // Predicated region
    $region29: #{skip_block_forward.3} parent=5 // pred_check
      _
    $region30: #{skip_block_forward.3} parent=5 // pred_check_branch
      %141 = sbr.rel (%p138) target = $region32
    $region31: #{skip_block_forward.3} parent=5 // pred_region
      %s142 = ssub.s32 %s9, 1
      %p143 = scmp.lt.s32.totalorder %s14, 1
      %s144 = scalar_select %p143, %s14, 1
      %s145 = smul.addr %s144, 32
      %s146 = smul.addr %s145, 8
      %s147 = scalar_lea.vmem %s0, %s146
      %p148 = pneg %p35
      %p149 = pneg %p32
      %p150 = pneg %p56
      %p151 = pneg %p53
      %p152 = pneg %p77
      %p153 = pneg %p74
      %p154 = pneg %p103
      %p155 = pneg %p100
      %p156 = scmp.lt.s32.totalorder %s14, 1
      %s157 = scalar_select %p156, %s14, 1
      %s158 = smul.addr %s157, 32
      %s159 = smul.addr %s158, 8
      %s160 = scalar_lea.vmem %s3, %s159
      %p161 = scmp.lt.s32.totalorder %s14, 1
      %s162 = scalar_select %p161, %s14, 1
      %s163 = smul.addr %s162, 32
      %s164 = smul.addr %s163, 8
      %s165 = scalar_lea.vmem %s0, %s164
      %p166 = scmp.lt.s32.totalorder %s14, 1
      %s167 = scalar_select %p166, %s14, 1
      %s168 = smul.addr %s167, 32
      %s169 = smul.addr %s168, 8
      %s170 = scalar_lea.vmem %s3, %s169
      %v171 = vld [vmem:[%s165] sm:$0xff]
      %v172 = vld [vmem:[%s165 + $0x8] sm:$0xff]
      %v173 = vld [vmem:[%s165 + $0x10] sm:$0xff]
      %v174 = vld [vmem:[%s165 + $0x18] sm:$0xff]
      %v175 = vld [vmem:[%s165 + $0x20] sm:$0xff]
      %v176 = vld [vmem:[%s165 + $0x28] sm:$0xff]
      %v177 = vld [vmem:[%s165 + $0x30] sm:$0xff]
      %v178 = vld [vmem:[%s165 + $0x38] sm:$0xff]
      %v179 = vld [vmem:[%s165 + $0x40] sm:$0xff]
      %v180 = vld [vmem:[%s165 + $0x48] sm:$0xff]
      %v181 = vld [vmem:[%s165 + $0x50] sm:$0xff]
      %v182 = vld [vmem:[%s165 + $0x58] sm:$0xff]
      %v183 = vld [vmem:[%s165 + $0x60] sm:$0xff]
      %v184 = vld [vmem:[%s165 + $0x68] sm:$0xff]
      %v185 = vld [vmem:[%s165 + $0x70] sm:$0xff]
      %v186 = vld [vmem:[%s165 + $0x78] sm:$0xff]
      %v187 = vld [vmem:[%s165 + $0x80] sm:$0xff]
      %v188 = vld [vmem:[%s165 + $0x88] sm:$0xff]
      %v189 = vld [vmem:[%s165 + $0x90] sm:$0xff]
      %v190 = vld [vmem:[%s165 + $0x98] sm:$0xff]
      %v191 = vld [vmem:[%s165 + $0xa0] sm:$0xff]
      %v192 = vld [vmem:[%s165 + $0xa8] sm:$0xff]
      %v193 = vld [vmem:[%s165 + $0xb0] sm:$0xff]
      %v194 = vld [vmem:[%s165 + $0xb8] sm:$0xff]
      %v195 = vld [vmem:[%s165 + $0xc0] sm:$0xff]
      %v196 = vld [vmem:[%s165 + $0xc8] sm:$0xff]
      %v197 = vld [vmem:[%s165 + $0xd0] sm:$0xff]
      %v198 = vld [vmem:[%s165 + $0xd8] sm:$0xff]
      %v199 = vld [vmem:[%s165 + $0xe0] sm:$0xff]
      %v200 = vld [vmem:[%s165 + $0xe8] sm:$0xff]
      %v201 = vld [vmem:[%s165 + $0xf0] sm:$0xff]
      %v202 = vld [vmem:[%s165 + $0xf8] sm:$0xff]
      %v203 = vld [vmem:[%s1] sm:$0x1]
      %v205 = vlaneseq
      %v206 = vshrl.u32 %v205, 7
      %v207 = vsub.s32 0, %v206
      %v208 = vrot.slane %v203, %v207
      %v210 = vmul.f32 %v171, %v208
      %v211 = vmul.f32 %v172, %v208
      %v212 = vmul.f32 %v173, %v208
      %v213 = vmul.f32 %v174, %v208
      %v214 = vmul.f32 %v175, %v208
      %v215 = vmul.f32 %v176, %v208
      %v216 = vmul.f32 %v177, %v208
      %v217 = vmul.f32 %v178, %v208
      %v218 = vmul.f32 %v179, %v208
      %v219 = vmul.f32 %v180, %v208
      %v220 = vmul.f32 %v181, %v208
      %v221 = vmul.f32 %v182, %v208
      %v222 = vmul.f32 %v183, %v208
      %v223 = vmul.f32 %v184, %v208
      %v224 = vmul.f32 %v185, %v208
      %v225 = vmul.f32 %v186, %v208
      %v226 = vmul.f32 %v187, %v208
      %v227 = vmul.f32 %v188, %v208
      %v228 = vmul.f32 %v189, %v208
      %v229 = vmul.f32 %v190, %v208
      %v230 = vmul.f32 %v191, %v208
      %v231 = vmul.f32 %v192, %v208
      %v232 = vmul.f32 %v193, %v208
      %v233 = vmul.f32 %v194, %v208
      %v234 = vmul.f32 %v195, %v208
      %v235 = vmul.f32 %v196, %v208
      %v236 = vmul.f32 %v197, %v208
      %v237 = vmul.f32 %v198, %v208
      %v238 = vmul.f32 %v199, %v208
      %v239 = vmul.f32 %v200, %v208
      %v240 = vmul.f32 %v201, %v208
      %v241 = vmul.f32 %v202, %v208
      %v242 = vld [vmem:[%s2] sm:$0x1]
      %v244 = vlaneseq
      %v245 = vshrl.u32 %v244, 7
      %v246 = vsub.s32 0, %v245
      %v247 = vrot.slane %v242, %v246
      %v249 = vadd.f32 %v210, %v247
      %v250 = vadd.f32 %v211, %v247
      %v251 = vadd.f32 %v212, %v247
      %v252 = vadd.f32 %v213, %v247
      %v253 = vadd.f32 %v214, %v247
      %v254 = vadd.f32 %v215, %v247
      %v255 = vadd.f32 %v216, %v247
      %v256 = vadd.f32 %v217, %v247
      %v257 = vadd.f32 %v218, %v247
      %v258 = vadd.f32 %v219, %v247
      %v259 = vadd.f32 %v220, %v247
      %v260 = vadd.f32 %v221, %v247
      %v261 = vadd.f32 %v222, %v247
      %v262 = vadd.f32 %v223, %v247
      %v263 = vadd.f32 %v224, %v247
      %v264 = vadd.f32 %v225, %v247
      %v265 = vadd.f32 %v226, %v247
      %v266 = vadd.f32 %v227, %v247
      %v267 = vadd.f32 %v228, %v247
      %v268 = vadd.f32 %v229, %v247
      %v269 = vadd.f32 %v230, %v247
      %v270 = vadd.f32 %v231, %v247
      %v271 = vadd.f32 %v232, %v247
      %v272 = vadd.f32 %v233, %v247
      %v273 = vadd.f32 %v234, %v247
      %v274 = vadd.f32 %v235, %v247
      %v275 = vadd.f32 %v236, %v247
      %v276 = vadd.f32 %v237, %v247
      %v277 = vadd.f32 %v238, %v247
      %v278 = vadd.f32 %v239, %v247
      %v279 = vadd.f32 %v240, %v247
      %v280 = vadd.f32 %v241, %v247
      %vm281 = vcmask 31744
      %282 = vst.msk [vmem:[%s170] sm:$0xff] %vm281, %v249
      %283 = vst.msk [vmem:[%s170 + $0x8] sm:$0xff] %vm281, %v250
      %284 = vst.msk [vmem:[%s170 + $0x10] sm:$0xff] %vm281, %v251
      %285 = vst.msk [vmem:[%s170 + $0x18] sm:$0xff] %vm281, %v252
      %286 = vst.msk [vmem:[%s170 + $0x20] sm:$0xff] %vm281, %v253
      %287 = vst.msk [vmem:[%s170 + $0x28] sm:$0xff] %vm281, %v254
      %288 = vst.msk [vmem:[%s170 + $0x30] sm:$0xff] %vm281, %v255
      %289 = vst.msk [vmem:[%s170 + $0x38] sm:$0xff] %vm281, %v256
      %290 = vst.msk [vmem:[%s170 + $0x40] sm:$0xff] %vm281, %v257
      %291 = vst.msk [vmem:[%s170 + $0x48] sm:$0xff] %vm281, %v258
      %292 = vst.msk [vmem:[%s170 + $0x50] sm:$0xff] %vm281, %v259
      %293 = vst.msk [vmem:[%s170 + $0x58] sm:$0xff] %vm281, %v260
      %294 = vst.msk [vmem:[%s170 + $0x60] sm:$0xff] %vm281, %v261
      %295 = vst.msk [vmem:[%s170 + $0x68] sm:$0xff] %vm281, %v262
      %296 = vst.msk [vmem:[%s170 + $0x70] sm:$0xff] %vm281, %v263
      %297 = vst.msk [vmem:[%s170 + $0x78] sm:$0xff] %vm281, %v264
      %298 = vst.msk [vmem:[%s170 + $0x80] sm:$0xff] %vm281, %v265
      %299 = vst.msk [vmem:[%s170 + $0x88] sm:$0xff] %vm281, %v266
      %300 = vst.msk [vmem:[%s170 + $0x90] sm:$0xff] %vm281, %v267
      %301 = vst.msk [vmem:[%s170 + $0x98] sm:$0xff] %vm281, %v268
      %302 = vst.msk [vmem:[%s170 + $0xa0] sm:$0xff] %vm281, %v269
      %303 = vst.msk [vmem:[%s170 + $0xa8] sm:$0xff] %vm281, %v270
      %304 = vst.msk [vmem:[%s170 + $0xb0] sm:$0xff] %vm281, %v271
      %305 = vst.msk [vmem:[%s170 + $0xb8] sm:$0xff] %vm281, %v272
      %306 = vst.msk [vmem:[%s170 + $0xc0] sm:$0xff] %vm281, %v273
      %307 = vst.msk [vmem:[%s170 + $0xc8] sm:$0xff] %vm281, %v274
      %308 = vst.msk [vmem:[%s170 + $0xd0] sm:$0xff] %vm281, %v275
      %309 = vst.msk [vmem:[%s170 + $0xd8] sm:$0xff] %vm281, %v276
      %310 = vst.msk [vmem:[%s170 + $0xe0] sm:$0xff] %vm281, %v277
      %311 = vst.msk [vmem:[%s170 + $0xe8] sm:$0xff] %vm281, %v278
      %312 = vst.msk [vmem:[%s170 + $0xf0] sm:$0xff] %vm281, %v279
      %313 = vst.msk [vmem:[%s170 + $0xf8] sm:$0xff] %vm281, %v280
      %p314 = scmp.lt.s32.totalorder %s14, 1
      %s315 = scalar_select %p314, %s14, 1
      %s316 = smul.addr %s315, 32
      %s317 = smul.addr %s316, 8
      %s318 = scalar_lea.vmem %s3, %s317
      // Predicated region
      $region33: #{skip_block_forward.3} parent=31 // pred_check
        %p319 = pneg %p100
      $region34: #{skip_block_forward.3} parent=31 // pred_check_branch
        %321 = sbr.rel (%p319) target = $region36
      $region35: #{skip_block_forward.3} parent=31 // pred_region
        _
      $region36: #{skip_block_forward.3} parent=31 // pred_fallthru
        _
    $region32: #{skip_block_forward.3} parent=5 // pred_fallthru
      _
    %p322 = scmp.le.s32.totalorder 2, %s9
    // Predicated region
    $region37: #{skip_block_forward.3} parent=5 // pred_check
      %p323 = pneg %p322
    $region38: #{skip_block_forward.3} parent=5 // pred_check_branch
      %325 = sbr.rel (%p323) target = $region40
    $region39: #{skip_block_forward.3} parent=5 // pred_region
      %s326 = ssub.s32 %s9, 2
      // Predicated region
      $region41: #{skip_block_forward.3} parent=39 // pred_check
        %p327 = pneg %p106
      $region42: #{skip_block_forward.3} parent=39 // pred_check_branch
        %329 = sbr.rel (%p327) target = $region44
      $region43: #{skip_block_forward.3} parent=39 // pred_region
        %p330 = scmp.lt.s32.totalorder %s15, 1
        %s331 = scalar_select %p330, %s15, 1
        %s332 = smul.addr %s331, 32
        %s333 = smul.addr %s332, 8
        %s334 = scalar_lea.vmem %s3, %s333
      $region44: #{skip_block_forward.3} parent=39 // pred_fallthru
        _
    $region40: #{skip_block_forward.3} parent=5 // pred_fallthru
      _
  $region6: #{skip_block_forward.3} parent=0 // loop_footer
    %s13 = sadd.s32 1, %s9
  $region7: #{skip_block_forward.3} parent=0 // loop_footer_branch
    %8 = sbr.rel target = $region3
  $region8: #{skip_block_forward.3} parent=0 // loop_exit
    _

// kernel: skip_block_forward.2
$region0: #{skip_block_forward.2}
  #allocation0 [shape = 'u32[]', space=smem, size = 0x4, offset = 0x4, fixed_abs, tag = 'smem constant byte address 0x4 - core index']
  #allocation1 [shape = 'u32[144,128]{1,0:T(1,128)}', space=vmem, size = 0x12000, scoped, tag = 'internal scratch']
  #allocation2 [shape = 'f32[16,16,100]{2,1,0:T(8,128)}', space=vmem, size = 0x20000, scoped, tag = 'scratch operand']
  %s0 = inlined_call_operand.vmem [shape: f32[2,20,20,4], index: 0, kind: input, shape index: {}]
  %s1 = inlined_call_operand.vmem [shape: bf16[100,4], index: 1, kind: input, shape index: {}]
  %s2 = inlined_call_operand.vmem [shape: f32[2,16,16,4], index: 2, kind: output, shape index: {0}]
  %s3 = inlined_call_operand.vmem [shape: f32[2,2,4], index: 3, kind: output, shape index: {1}]
  %4 = xla_tuple %s2, %s3
  %s5 = sld [smem:[#allocation0]]
  $region49: #{skip_block_forward.2} parent=0
    _
  %s7 = ssub.s32 1, %s5
  %s8 = scalar_select 0, %s7, %s5
  loop: start=0, step=1, limit=4
  $region2: #{skip_block_forward.2} parent=0 // loop_pre_header
    _
  $region3: #{skip_block_forward.2} parent=0 // loop_header
    %s10 = sphi 0, %s14
    %p11 = scmp.ge.s32.totalorder %s10, 4
    %s20 = sphi 0, %s22
    %s23 = sphi 0, %s20
    %s24 = sphi 0, %s23
    %s40 = sphi 0, %s24
    %s44 = sphi 0, %s44
    %s46 = sphi 0, %s44
    %s47 = sphi 0, %s46
    %s61 = sphi 0, %s47
    %s67 = sphi 0, %s69
    %s70 = sphi 0, %s67
    %s71 = sphi 0, %s70
    %s87 = sphi 0, %s71
    %s93 = sphi 0, %s95
    %s96 = sphi 0, %s93
    %s97 = sphi 0, %s96
    %s113 = sphi 0, %s97
  $region4: #{skip_block_forward.2} parent=0 // loop_header_branch
    %13 = sbr.rel (%p11) target = $region8
  $region5: #{skip_block_forward.2} parent=0 // loop_body
    %s15 = ssub.s32 %s10, 1
    %s16 = ssub.s32 %s10, 2
    %s17 = sadd.s32 %s10, 1
    %s18 = ssub.s32 %s10, %s17
    %p19 = scmp.eq.s32.totalorder %s18, 0
    %s21 = sadd.s32 %s20, 1
    %s22 = scalar_select %p19, %s20, %s21
    %p25 = pneg %p19
    %p26 = scmp.eq.s32.totalorder %s10, 1
    %p27 = por %p25, %p26
    %p28 = scmp.ne.s32.totalorder %s20, %s23
    %p29 = scmp.eq.s32.totalorder %s10, 0
    %p30 = por %p28, %p29
    %p31 = scmp.ne.s32.totalorder %s20, %s23
    %p32 = scmp.eq.s32.totalorder %s15, 1
    %p33 = por %p31, %p32
    %p34 = scmp.ne.s32.totalorder %s23, %s24
    %p35 = scmp.eq.s32.totalorder %s15, 0
    %p36 = por %p34, %p35
    %p37 = scmp.ne.s32.totalorder %s23, %s24
    %p38 = scmp.eq.s32.totalorder %s16, 1
    %p39 = por %p37, %p38
    %p41 = scmp.ne.s32.totalorder %s24, %s40
    %p42 = scmp.eq.s32.totalorder %s16, 0
    %p43 = por %p41, %p42
    %s45 = sadd.s32 %s44, 1
    %p48 = scmp.eq.s32.totalorder %s10, 1
    %p49 = scmp.ne.s32.totalorder %s44, %s46
    %p50 = scmp.eq.s32.totalorder %s10, 0
    %p51 = por %p49, %p50
    %p52 = scmp.ne.s32.totalorder %s44, %s46
    %p53 = scmp.eq.s32.totalorder %s15, 1
    %p54 = por %p52, %p53
    %p55 = scmp.ne.s32.totalorder %s46, %s47
    %p56 = scmp.eq.s32.totalorder %s15, 0
    %p57 = por %p55, %p56
    %p58 = scmp.ne.s32.totalorder %s46, %s47
    %p59 = scmp.eq.s32.totalorder %s16, 1
    %p60 = por %p58, %p59
    %p62 = scmp.ne.s32.totalorder %s47, %s61
    %p63 = scmp.eq.s32.totalorder %s16, 0
    %p64 = por %p62, %p63
    %s65 = ssub.s32 %s10, %s17
    %p66 = scmp.eq.s32.totalorder %s65, 0
    %s68 = sadd.s32 %s67, 1
    %s69 = scalar_select %p66, %s67, %s68
    %p72 = pneg %p66
    %p73 = scmp.eq.s32.totalorder %s10, 1
    %p74 = por %p72, %p73
    %p75 = scmp.ne.s32.totalorder %s67, %s70
    %p76 = scmp.eq.s32.totalorder %s10, 0
    %p77 = por %p75, %p76
    %p78 = scmp.ne.s32.totalorder %s67, %s70
    %p79 = scmp.eq.s32.totalorder %s15, 1
    %p80 = por %p78, %p79
    %p81 = scmp.ne.s32.totalorder %s70, %s71
    %p82 = scmp.eq.s32.totalorder %s15, 0
    %p83 = por %p81, %p82
    %p84 = scmp.ne.s32.totalorder %s70, %s71
    %p85 = scmp.eq.s32.totalorder %s16, 1
    %p86 = por %p84, %p85
    %p88 = scmp.ne.s32.totalorder %s71, %s87
    %p89 = scmp.eq.s32.totalorder %s16, 0
    %p90 = por %p88, %p89
    %s91 = ssub.s32 %s10, %s17
    %p92 = scmp.eq.s32.totalorder %s91, 0
    %s94 = sadd.s32 %s93, 1
    %s95 = scalar_select %p92, %s93, %s94
    %p98 = pneg %p92
    %p99 = scmp.eq.s32.totalorder %s10, 1
    %p100 = por %p98, %p99
    %p101 = scmp.ne.s32.totalorder %s93, %s96
    %p102 = scmp.eq.s32.totalorder %s10, 0
    %p103 = por %p101, %p102
    %p104 = scmp.ne.s32.totalorder %s93, %s96
    %p105 = scmp.eq.s32.totalorder %s15, 1
    %p106 = por %p104, %p105
    %p107 = scmp.ne.s32.totalorder %s96, %s97
    %p108 = scmp.eq.s32.totalorder %s15, 0
    %p109 = por %p107, %p108
    %p110 = scmp.ne.s32.totalorder %s96, %s97
    %p111 = scmp.eq.s32.totalorder %s16, 1
    %p112 = por %p110, %p111
    %p114 = scmp.ne.s32.totalorder %s97, %s113
    %p115 = scmp.eq.s32.totalorder %s16, 0
    %p116 = por %p114, %p115
    %p117 = scmp.le.s32.totalorder 1, %s10
    %p118 = scmp.lt.s32.totalorder %s10, 3
    %p119 = pnand %p117, %p118
    %p120 = pneg %p119
    // Predicated region
    $region9: #{skip_block_forward.2} parent=5 // pred_check
      _
    $region10: #{skip_block_forward.2} parent=5 // pred_check_branch
      %122 = sbr.rel (%p119) target = $region12
    $region11: #{skip_block_forward.2} parent=5 // pred_region
      %s123 = ssub.s32 %s10, 1
      // Predicated region
      $region13: #{skip_block_forward.2} parent=11 // pred_check
        %p124 = pneg %p57
      $region14: #{skip_block_forward.2} parent=11 // pred_check_branch
        %126 = sbr.rel (%p124) target = $region16
      $region15: #{skip_block_forward.2} parent=11 // pred_region
        _
      $region16: #{skip_block_forward.2} parent=11 // pred_fallthru
        _
    $region12: #{skip_block_forward.2} parent=5 // pred_fallthru
      _
    %p127 = scmp.lt.s32.totalorder %s10, 2
    // Predicated region
    $region17: #{skip_block_forward.2} parent=5 // pred_check
      %p128 = pneg %p127
    $region18: #{skip_block_forward.2} parent=5 // pred_check_branch
      %130 = sbr.rel (%p128) target = $region20
    $region19: #{skip_block_forward.2} parent=5 // pred_region
      // Predicated region
      $region21: #{skip_block_forward.2} parent=19 // pred_check
        %p131 = pneg %p30
      $region22: #{skip_block_forward.2} parent=19 // pred_check_branch
        %133 = sbr.rel (%p131) target = $region24
      $region23: #{skip_block_forward.2} parent=19 // pred_region
        %p134 = scmp.lt.s32.totalorder %s10, 1
        %s135 = scalar_select %p134, %s10, 1
        %s136 = smul.addr %s135, 60
        %s137 = smul.addr %s136, 8
        %s138 = scalar_lea.vmem %s0, %s137
      $region24: #{skip_block_forward.2} parent=19 // pred_fallthru
        _
    $region20: #{skip_block_forward.2} parent=5 // pred_fallthru
      _
    %p139 = scmp.le.s32.totalorder 1, %s10
    %p140 = scmp.lt.s32.totalorder %s10, 3
    %p141 = pnand %p139, %p140
    %p142 = pneg %p141
    // Predicated region
    $region25: #{skip_block_forward.2} parent=5 // pred_check
      _
    $region26: #{skip_block_forward.2} parent=5 // pred_check_branch
      %144 = sbr.rel (%p141) target = $region28
    $region27: #{skip_block_forward.2} parent=5 // pred_region
      %s145 = ssub.s32 %s10, 1
      %p146 = scmp.lt.s32.totalorder %s15, 1
      %s147 = scalar_select %p146, %s15, 1
      %s148 = smul.addr %s147, 60
      %s149 = smul.addr %s148, 8
      %s150 = scalar_lea.vmem %s0, %s149
      %p151 = pneg %p36
      %p152 = pneg %p33
      %p153 = pneg %p57
      %p154 = pneg %p54
      %p155 = pneg %p83
      %p156 = pneg %p80
      %p157 = scmp.lt.s32.totalorder %s15, 1
      %s158 = scalar_select %p157, %s15, 1
      %s159 = smul.addr %s158, 32
      %s160 = smul.addr %s159, 8
      %s161 = scalar_lea.vmem %s2, %s160
      %p162 = pneg %p109
      %p163 = pneg %p106
      %p164 = scmp.lt.s32.totalorder %s15, 1
      %s165 = scalar_select %p164, %s15, 1
      %s166 = smul.addr %s165, 2
      %s167 = scalar_lea.vmem %s3, %s166
      %p168 = scmp.lt.s32.totalorder %s15, 1
      %s169 = scalar_select %p168, %s15, 1
      %s170 = smul.addr %s169, 60
      %s171 = smul.addr %s170, 8
      %s172 = scalar_lea.vmem %s0, %s171
      %p173 = scmp.lt.s32.totalorder %s15, 1
      %s174 = scalar_select %p173, %s15, 1
      %s175 = smul.addr %s174, 32
      %s176 = smul.addr %s175, 8
      %s177 = scalar_lea.vmem %s2, %s176
      %p178 = scmp.lt.s32.totalorder %s15, 1
      %s179 = scalar_select %p178, %s15, 1
      %s180 = smul.addr %s179, 2
      %s181 = scalar_lea.vmem %s3, %s180
      %v183 = vld [vmem:[%s172] sm:$0xff]
      %v184 = vld [vmem:[%s172 + $0x8] sm:$0xff]
      %v185 = vld [vmem:[%s172 + $0x10] sm:$0xf]
      %v186 = vld [vmem:[%s172 + $0x18] sm:$0xff]
      %v187 = vld [vmem:[%s172 + $0x20] sm:$0xff]
      %v188 = vld [vmem:[%s172 + $0x28] sm:$0xf]
      %v189 = vld [vmem:[%s172 + $0x30] sm:$0xff]
      %v190 = vld [vmem:[%s172 + $0x38] sm:$0xff]
      %v191 = vld [vmem:[%s172 + $0x40] sm:$0xf]
      %v192 = vld [vmem:[%s172 + $0x48] sm:$0xff]
      %v193 = vld [vmem:[%s172 + $0x50] sm:$0xff]
      %v194 = vld [vmem:[%s172 + $0x58] sm:$0xf]
      %v195 = vld [vmem:[%s172 + $0x60] sm:$0xff]
      %v196 = vld [vmem:[%s172 + $0x68] sm:$0xff]
      %v197 = vld [vmem:[%s172 + $0x70] sm:$0xf]
      %v198 = vld [vmem:[%s172 + $0x78] sm:$0xff]
      %v199 = vld [vmem:[%s172 + $0x80] sm:$0xff]
      %v200 = vld [vmem:[%s172 + $0x88] sm:$0xf]
      %v201 = vld [vmem:[%s172 + $0x90] sm:$0xff]
      %v202 = vld [vmem:[%s172 + $0x98] sm:$0xff]
      %v203 = vld [vmem:[%s172 + $0xa0] sm:$0xf]
      %v204 = vld [vmem:[%s172 + $0xa8] sm:$0xff]
      %v205 = vld [vmem:[%s172 + $0xb0] sm:$0xff]
      %v206 = vld [vmem:[%s172 + $0xb8] sm:$0xf]
      %v207 = vld [vmem:[%s172 + $0xc0] sm:$0xff]
      %v208 = vld [vmem:[%s172 + $0xc8] sm:$0xff]
      %v209 = vld [vmem:[%s172 + $0xd0] sm:$0xf]
      %v210 = vld [vmem:[%s172 + $0xd8] sm:$0xff]
      %v211 = vld [vmem:[%s172 + $0xe0] sm:$0xff]
      %v212 = vld [vmem:[%s172 + $0xe8] sm:$0xf]
      %v213 = vld [vmem:[%s172 + $0xf0] sm:$0xff]
      %v214 = vld [vmem:[%s172 + $0xf8] sm:$0xff]
      %v215 = vld [vmem:[%s172 + $0x100] sm:$0xf]
      %v216 = vld [vmem:[%s172 + $0x108] sm:$0xff]
      %v217 = vld [vmem:[%s172 + $0x110] sm:$0xff]
      %v218 = vld [vmem:[%s172 + $0x118] sm:$0xf]
      %v219 = vld [vmem:[%s172 + $0x120] sm:$0xff]
      %v220 = vld [vmem:[%s172 + $0x128] sm:$0xff]
      %v221 = vld [vmem:[%s172 + $0x130] sm:$0xf]
      %v222 = vld [vmem:[%s172 + $0x138] sm:$0xff]
      %v223 = vld [vmem:[%s172 + $0x140] sm:$0xff]
      %v224 = vld [vmem:[%s172 + $0x148] sm:$0xf]
      %v225 = vld [vmem:[%s172 + $0x150] sm:$0xff]
      %v226 = vld [vmem:[%s172 + $0x158] sm:$0xff]
      %v227 = vld [vmem:[%s172 + $0x160] sm:$0xf]
      %v228 = vld [vmem:[%s172 + $0x168] sm:$0xff]
      %v229 = vld [vmem:[%s172 + $0x170] sm:$0xff]
      %v230 = vld [vmem:[%s172 + $0x178] sm:$0xf]
      %v231 = vld [vmem:[%s172 + $0x180] sm:$0xff]
      %v232 = vld [vmem:[%s172 + $0x188] sm:$0xff]
      %v233 = vld [vmem:[%s172 + $0x190] sm:$0xf]
      %v234 = vld [vmem:[%s172 + $0x198] sm:$0xff]
      %v235 = vld [vmem:[%s172 + $0x1a0] sm:$0xff]
      %v236 = vld [vmem:[%s172 + $0x1a8] sm:$0xf]
      %v237 = vld [vmem:[%s172 + $0x1b0] sm:$0xff]
      %v238 = vld [vmem:[%s172 + $0x1b8] sm:$0xff]
      %v239 = vld [vmem:[%s172 + $0x1c0] sm:$0xf]
      %v240 = vld [vmem:[%s172 + $0x1c8] sm:$0xff]
      %v241 = vld [vmem:[%s172 + $0x1d0] sm:$0xff]
      %v242 = vld [vmem:[%s172 + $0x1d8] sm:$0xf]
      %vm243 = vcmp.ge.f32.partialorder %v183, 0.0
      %vm244 = vcmp.ge.f32.partialorder %v184, 0.0
      %vm245 = vcmp.ge.f32.partialorder %v185, 0.0
      %vm246 = vcmp.ge.f32.partialorder %v186, 0.0
      %vm247 = vcmp.ge.f32.partialorder %v187, 0.0
      %vm248 = vcmp.ge.f32.partialorder %v188, 0.0
      %vm249 = vcmp.ge.f32.partialorder %v189, 0.0
      %vm250 = vcmp.ge.f32.partialorder %v190, 0.0
      %vm251 = vcmp.ge.f32.partialorder %v191, 0.0
      %vm252 = vcmp.ge.f32.partialorder %v192, 0.0
      %vm253 = vcmp.ge.f32.partialorder %v193, 0.0
      %vm254 = vcmp.ge.f32.partialorder %v194, 0.0
      %vm255 = vcmp.ge.f32.partialorder %v195, 0.0
      %vm256 = vcmp.ge.f32.partialorder %v196, 0.0
      %vm257 = vcmp.ge.f32.partialorder %v197, 0.0
      %vm258 = vcmp.ge.f32.partialorder %v198, 0.0
      %vm259 = vcmp.ge.f32.partialorder %v199, 0.0
      %vm260 = vcmp.ge.f32.partialorder %v200, 0.0
      %vm261 = vcmp.ge.f32.partialorder %v201, 0.0
      %vm262 = vcmp.ge.f32.partialorder %v202, 0.0
      %vm263 = vcmp.ge.f32.partialorder %v203, 0.0
      %vm264 = vcmp.ge.f32.partialorder %v204, 0.0
      %vm265 = vcmp.ge.f32.partialorder %v205, 0.0
      %vm266 = vcmp.ge.f32.partialorder %v206, 0.0
      %vm267 = vcmp.ge.f32.partialorder %v207, 0.0
      %vm268 = vcmp.ge.f32.partialorder %v208, 0.0
      %vm269 = vcmp.ge.f32.partialorder %v209, 0.0
      %vm270 = vcmp.ge.f32.partialorder %v210, 0.0
      %vm271 = vcmp.ge.f32.partialorder %v211, 0.0
      %vm272 = vcmp.ge.f32.partialorder %v212, 0.0
      %vm273 = vcmp.ge.f32.partialorder %v213, 0.0
      %vm274 = vcmp.ge.f32.partialorder %v214, 0.0
      %vm275 = vcmp.ge.f32.partialorder %v215, 0.0
      %vm276 = vcmp.ge.f32.partialorder %v216, 0.0
      %vm277 = vcmp.ge.f32.partialorder %v217, 0.0
      %vm278 = vcmp.ge.f32.partialorder %v218, 0.0
      %vm279 = vcmp.ge.f32.partialorder %v219, 0.0
      %vm280 = vcmp.ge.f32.partialorder %v220, 0.0
      %vm281 = vcmp.ge.f32.partialorder %v221, 0.0
      %vm282 = vcmp.ge.f32.partialorder %v222, 0.0
      %vm283 = vcmp.ge.f32.partialorder %v223, 0.0
      %vm284 = vcmp.ge.f32.partialorder %v224, 0.0
      %vm285 = vcmp.ge.f32.partialorder %v225, 0.0
      %vm286 = vcmp.ge.f32.partialorder %v226, 0.0
      %vm287 = vcmp.ge.f32.partialorder %v227, 0.0
      %vm288 = vcmp.ge.f32.partialorder %v228, 0.0
      %vm289 = vcmp.ge.f32.partialorder %v229, 0.0
      %vm290 = vcmp.ge.f32.partialorder %v230, 0.0
      %vm291 = vcmp.ge.f32.partialorder %v231, 0.0
      %vm292 = vcmp.ge.f32.partialorder %v232, 0.0
      %vm293 = vcmp.ge.f32.partialorder %v233, 0.0
      %vm294 = vcmp.ge.f32.partialorder %v234, 0.0
      %vm295 = vcmp.ge.f32.partialorder %v235, 0.0
      %vm296 = vcmp.ge.f32.partialorder %v236, 0.0
      %vm297 = vcmp.ge.f32.partialorder %v237, 0.0
      %vm298 = vcmp.ge.f32.partialorder %v238, 0.0
      %vm299 = vcmp.ge.f32.partialorder %v239, 0.0
      %vm300 = vcmp.ge.f32.partialorder %v240, 0.0
      %vm301 = vcmp.ge.f32.partialorder %v241, 0.0
      %vm302 = vcmp.ge.f32.partialorder %v242, 0.0
      %v303 = vmul.f32 %v183, 0.2
      %v304 = vmul.f32 %v184, 0.2
      %v305 = vmul.f32 %v185, 0.2
      %v306 = vmul.f32 %v186, 0.2
      %v307 = vmul.f32 %v187, 0.2
      %v308 = vmul.f32 %v188, 0.2
      %v309 = vmul.f32 %v189, 0.2
      %v310 = vmul.f32 %v190, 0.2
      %v311 = vmul.f32 %v191, 0.2
      %v312 = vmul.f32 %v192, 0.2
      %v313 = vmul.f32 %v193, 0.2
      %v314 = vmul.f32 %v194, 0.2
      %v315 = vmul.f32 %v195, 0.2
      %v316 = vmul.f32 %v196, 0.2
      %v317 = vmul.f32 %v197, 0.2
      %v318 = vmul.f32 %v198, 0.2
      %v319 = vmul.f32 %v199, 0.2
      %v320 = vmul.f32 %v200, 0.2
      %v321 = vmul.f32 %v201, 0.2
      %v322 = vmul.f32 %v202, 0.2
      %v323 = vmul.f32 %v203, 0.2
      %v324 = vmul.f32 %v204, 0.2
      %v325 = vmul.f32 %v205, 0.2
      %v326 = vmul.f32 %v206, 0.2
      %v327 = vmul.f32 %v207, 0.2
      %v328 = vmul.f32 %v208, 0.2
      %v329 = vmul.f32 %v209, 0.2
      %v330 = vmul.f32 %v210, 0.2
      %v331 = vmul.f32 %v211, 0.2
      %v332 = vmul.f32 %v212, 0.2
      %v333 = vmul.f32 %v213, 0.2
      %v334 = vmul.f32 %v214, 0.2
      %v335 = vmul.f32 %v215, 0.2
      %v336 = vmul.f32 %v216, 0.2
      %v337 = vmul.f32 %v217, 0.2
      %v338 = vmul.f32 %v218, 0.2
      %v339 = vmul.f32 %v219, 0.2
      %v340 = vmul.f32 %v220, 0.2
      %v341 = vmul.f32 %v221, 0.2
      %v342 = vmul.f32 %v222, 0.2
      %v343 = vmul.f32 %v223, 0.2
      %v344 = vmul.f32 %v224, 0.2
      %v345 = vmul.f32 %v225, 0.2
      %v346 = vmul.f32 %v226, 0.2
      %v347 = vmul.f32 %v227, 0.2
      %v348 = vmul.f32 %v228, 0.2
      %v349 = vmul.f32 %v229, 0.2
      %v350 = vmul.f32 %v230, 0.2
      %v351 = vmul.f32 %v231, 0.2
      %v352 = vmul.f32 %v232, 0.2
      %v353 = vmul.f32 %v233, 0.2
      %v354 = vmul.f32 %v234, 0.2
      %v355 = vmul.f32 %v235, 0.2
      %v356 = vmul.f32 %v236, 0.2
      %v357 = vmul.f32 %v237, 0.2
      %v358 = vmul.f32 %v238, 0.2
      %v359 = vmul.f32 %v239, 0.2
      %v360 = vmul.f32 %v240, 0.2
      %v361 = vmul.f32 %v241, 0.2
      %v362 = vmul.f32 %v242, 0.2
      %v363 = vsel %vm243, %v183, %v303
      %v364 = vsel %vm244, %v184, %v304
      %v365 = vsel %vm245, %v185, %v305
      %v366 = vsel %vm246, %v186, %v306
      %v367 = vsel %vm247, %v187, %v307
      %v368 = vsel %vm248, %v188, %v308
      %v369 = vsel %vm249, %v189, %v309
      %v370 = vsel %vm250, %v190, %v310
      %v371 = vsel %vm251, %v191, %v311
      %v372 = vsel %vm252, %v192, %v312
      %v373 = vsel %vm253, %v193, %v313
      %v374 = vsel %vm254, %v194, %v314
      %v375 = vsel %vm255, %v195, %v315
      %v376 = vsel %vm256, %v196, %v316
      %v377 = vsel %vm257, %v197, %v317
      %v378 = vsel %vm258, %v198, %v318
      %v379 = vsel %vm259, %v199, %v319
      %v380 = vsel %vm260, %v200, %v320
      %v381 = vsel %vm261, %v201, %v321
      %v382 = vsel %vm262, %v202, %v322
      %v383 = vsel %vm263, %v203, %v323
      %v384 = vsel %vm264, %v204, %v324
      %v385 = vsel %vm265, %v205, %v325
      %v386 = vsel %vm266, %v206, %v326
      %v387 = vsel %vm267, %v207, %v327
      %v388 = vsel %vm268, %v208, %v328
      %v389 = vsel %vm269, %v209, %v329
      %v390 = vsel %vm270, %v210, %v330
      %v391 = vsel %vm271, %v211, %v331
      %v392 = vsel %vm272, %v212, %v332
      %v393 = vsel %vm273, %v213, %v333
      %v394 = vsel %vm274, %v214, %v334
      %v395 = vsel %vm275, %v215, %v335
      %v396 = vsel %vm276, %v216, %v336
      %v397 = vsel %vm277, %v217, %v337
      %v398 = vsel %vm278, %v218, %v338
      %v399 = vsel %vm279, %v219, %v339
      %v400 = vsel %vm280, %v220, %v340
      %v401 = vsel %vm281, %v221, %v341
      %v402 = vsel %vm282, %v222, %v342
      %v403 = vsel %vm283, %v223, %v343
      %v404 = vsel %vm284, %v224, %v344
      %v405 = vsel %vm285, %v225, %v345
      %v406 = vsel %vm286, %v226, %v346
      %v407 = vsel %vm287, %v227, %v347
      %v408 = vsel %vm288, %v228, %v348
      %v409 = vsel %vm289, %v229, %v349
      %v410 = vsel %vm290, %v230, %v350
      %v411 = vsel %vm291, %v231, %v351
      %v412 = vsel %vm292, %v232, %v352
      %v413 = vsel %vm293, %v233, %v353
      %v414 = vsel %vm294, %v234, %v354
      %v415 = vsel %vm295, %v235, %v355
      %v416 = vsel %vm296, %v236, %v356
      %v417 = vsel %vm297, %v237, %v357
      %v418 = vsel %vm298, %v238, %v358
      %v419 = vsel %vm299, %v239, %v359
      %v420 = vsel %vm300, %v240, %v360
      %v421 = vsel %vm301, %v241, %v361
      %v422 = vsel %vm302, %v242, %v362
      %vm423 = vcmask 31744
      %424 = vst.msk [vmem:[#allocation2] sm:$0xff] %vm423, %v363
      %425 = vst.msk [vmem:[#allocation2 + $0x8] sm:$0xff] %vm423, %v364
      %426 = vst.msk [vmem:[#allocation2 + $0x10] sm:$0xff] %vm423, %v366
      %427 = vst.msk [vmem:[#allocation2 + $0x18] sm:$0xff] %vm423, %v367
      %428 = vst.msk [vmem:[#allocation2 + $0x20] sm:$0xff] %vm423, %v369
      %429 = vst.msk [vmem:[#allocation2 + $0x28] sm:$0xff] %vm423, %v370
      %430 = vst.msk [vmem:[#allocation2 + $0x30] sm:$0xff] %vm423, %v372
      %431 = vst.msk [vmem:[#allocation2 + $0x38] sm:$0xff] %vm423, %v373
      %432 = vst.msk [vmem:[#allocation2 + $0x40] sm:$0xff] %vm423, %v375
      %433 = vst.msk [vmem:[#allocation2 + $0x48] sm:$0xff] %vm423, %v376
      %434 = vst.msk [vmem:[#allocation2 + $0x50] sm:$0xff] %vm423, %v378
      %435 = vst.msk [vmem:[#allocation2 + $0x58] sm:$0xff] %vm423, %v379
      %436 = vst.msk [vmem:[#allocation2 + $0x60] sm:$0xff] %vm423, %v381
      %437 = vst.msk [vmem:[#allocation2 + $0x68] sm:$0xff] %vm423, %v382
      %438 = vst.msk [vmem:[#allocation2 + $0x70] sm:$0xff] %vm423, %v384
      %439 = vst.msk [vmem:[#allocation2 + $0x78] sm:$0xff] %vm423, %v385
      %440 = vst.msk [vmem:[#allocation2 + $0x80] sm:$0xff] %vm423, %v387
      %441 = vst.msk [vmem:[#allocation2 + $0x88] sm:$0xff] %vm423, %v388
      %442 = vst.msk [vmem:[#allocation2 + $0x90] sm:$0xff] %vm423, %v390
      %443 = vst.msk [vmem:[#allocation2 + $0x98] sm:$0xff] %vm423, %v391
      %444 = vst.msk [vmem:[#allocation2 + $0xa0] sm:$0xff] %vm423, %v393
      %445 = vst.msk [vmem:[#allocation2 + $0xa8] sm:$0xff] %vm423, %v394
      %446 = vst.msk [vmem:[#allocation2 + $0xb0] sm:$0xff] %vm423, %v396
      %447 = vst.msk [vmem:[#allocation2 + $0xb8] sm:$0xff] %vm423, %v397
      %448 = vst.msk [vmem:[#allocation2 + $0xc0] sm:$0xff] %vm423, %v399
      %449 = vst.msk [vmem:[#allocation2 + $0xc8] sm:$0xff] %vm423, %v400
      %450 = vst.msk [vmem:[#allocation2 + $0xd0] sm:$0xff] %vm423, %v402
      %451 = vst.msk [vmem:[#allocation2 + $0xd8] sm:$0xff] %vm423, %v403
      %452 = vst.msk [vmem:[#allocation2 + $0xe0] sm:$0xff] %vm423, %v405
      %453 = vst.msk [vmem:[#allocation2 + $0xe8] sm:$0xff] %vm423, %v406
      %454 = vst.msk [vmem:[#allocation2 + $0xf0] sm:$0xff] %vm423, %v408
      %455 = vst.msk [vmem:[#allocation2 + $0xf8] sm:$0xff] %vm423, %v409
      %504 = vrot.lane.b32.xlu0 %v363, 4
      %v505 = vpop.permute.xlu0 %504
      %506 = vrot.lane.b32.xlu0 %v364, 4
      %v507 = vpop.permute.xlu0 %506
      %508 = vrot.lane.b32.xlu0 %v365, 4
      %v509 = vpop.permute.xlu0 %508
      %510 = vrot.lane.b32.xlu0 %v366, 4
      %v511 = vpop.permute.xlu0 %510
      %512 = vrot.lane.b32.xlu0 %v367, 4
      %v513 = vpop.permute.xlu0 %512
      %514 = vrot.lane.b32.xlu0 %v368, 4
      %v515 = vpop.permute.xlu0 %514
      %516 = vrot.lane.b32.xlu0 %v369, 4
      %v517 = vpop.permute.xlu0 %516
      %518 = vrot.lane.b32.xlu0 %v370, 4
      %v519 = vpop.permute.xlu0 %518
      %520 = vrot.lane.b32.xlu0 %v371, 4
      %v521 = vpop.permute.xlu0 %520
      %522 = vrot.lane.b32.xlu0 %v372, 4
      %v523 = vpop.permute.xlu0 %522
      %524 = vrot.lane.b32.xlu0 %v373, 4
      %v525 = vpop.permute.xlu0 %524
      %526 = vrot.lane.b32.xlu0 %v374, 4
      %v527 = vpop.permute.xlu0 %526
      %528 = vrot.lane.b32.xlu0 %v375, 4
      %v529 = vpop.permute.xlu0 %528
      %530 = vrot.lane.b32.xlu0 %v376, 4
      %v531 = vpop.permute.xlu0 %530
      %532 = vrot.lane.b32.xlu0 %v377, 4
      %v533 = vpop.permute.xlu0 %532
      %534 = vrot.lane.b32.xlu0 %v378, 4
      %v535 = vpop.permute.xlu0 %534
      %536 = vrot.lane.b32.xlu0 %v379, 4
      %v537 = vpop.permute.xlu0 %536
      %538 = vrot.lane.b32.xlu0 %v380, 4
      %v539 = vpop.permute.xlu0 %538
      %540 = vrot.lane.b32.xlu0 %v381, 4
      %v541 = vpop.permute.xlu0 %540
      %542 = vrot.lane.b32.xlu0 %v382, 4
      %v543 = vpop.permute.xlu0 %542
      %544 = vrot.lane.b32.xlu0 %v383, 4
      %v545 = vpop.permute.xlu0 %544
      %546 = vrot.lane.b32.xlu0 %v384, 4
      %v547 = vpop.permute.xlu0 %546
      %548 = vrot.lane.b32.xlu0 %v385, 4
      %v549 = vpop.permute.xlu0 %548
      %550 = vrot.lane.b32.xlu0 %v386, 4
      %v551 = vpop.permute.xlu0 %550
      %552 = vrot.lane.b32.xlu0 %v387, 4
      %v553 = vpop.permute.xlu0 %552
      %554 = vrot.lane.b32.xlu0 %v388, 4
      %v555 = vpop.permute.xlu0 %554
      %556 = vrot.lane.b32.xlu0 %v389, 4
      %v557 = vpop.permute.xlu0 %556
      %558 = vrot.lane.b32.xlu0 %v390, 4
      %v559 = vpop.permute.xlu0 %558
      %560 = vrot.lane.b32.xlu0 %v391, 4
      %v561 = vpop.permute.xlu0 %560
      %562 = vrot.lane.b32.xlu0 %v392, 4
      %v563 = vpop.permute.xlu0 %562
      %564 = vrot.lane.b32.xlu0 %v393, 4
      %v565 = vpop.permute.xlu0 %564
      %566 = vrot.lane.b32.xlu0 %v394, 4
      %v567 = vpop.permute.xlu0 %566
      %568 = vrot.lane.b32.xlu0 %v395, 4
      %v569 = vpop.permute.xlu0 %568
      %570 = vrot.lane.b32.xlu0 %v396, 4
      %v571 = vpop.permute.xlu0 %570
      %572 = vrot.lane.b32.xlu0 %v397, 4
      %v573 = vpop.permute.xlu0 %572
      %574 = vrot.lane.b32.xlu0 %v398, 4
      %v575 = vpop.permute.xlu0 %574
      %576 = vrot.lane.b32.xlu0 %v399, 4
      %v577 = vpop.permute.xlu0 %576
      %578 = vrot.lane.b32.xlu0 %v400, 4
      %v579 = vpop.permute.xlu0 %578
      %580 = vrot.lane.b32.xlu0 %v401, 4
      %v581 = vpop.permute.xlu0 %580
      %582 = vrot.lane.b32.xlu0 %v402, 4
      %v583 = vpop.permute.xlu0 %582
      %584 = vrot.lane.b32.xlu0 %v403, 4
      %v585 = vpop.permute.xlu0 %584
      %586 = vrot.lane.b32.xlu0 %v404, 4
      %v587 = vpop.permute.xlu0 %586
      %588 = vrot.lane.b32.xlu0 %v405, 4
      %v589 = vpop.permute.xlu0 %588
      %590 = vrot.lane.b32.xlu0 %v406, 4
      %v591 = vpop.permute.xlu0 %590
      %592 = vrot.lane.b32.xlu0 %v407, 4
      %v593 = vpop.permute.xlu0 %592
      %594 = vrot.lane.b32.xlu0 %v408, 4
      %v595 = vpop.permute.xlu0 %594
      %596 = vrot.lane.b32.xlu0 %v409, 4
      %v597 = vpop.permute.xlu0 %596
      %598 = vrot.lane.b32.xlu0 %v410, 4
      %v599 = vpop.permute.xlu0 %598
      %vm648 = vcmask 64545
      %649 = vst.msk [vmem:[#allocation2 - $0x1] sm:$0xfe] %vm648, %v505
      %vm650 = vcmask 64544
      %651 = vst.msk [vmem:[#allocation2 + $0x7] sm:$0xff] %vm650, %v507
      %vm652 = vcmask 57376
      %653 = vst.msk [vmem:[#allocation2 + $0xf] sm:$0x1] %vm652, %v509
      %654 = vst.msk [vmem:[#allocation2 + $0xf] sm:$0xfe] %vm648, %v511
      %655 = vst.msk [vmem:[#allocation2 + $0x17] sm:$0xff] %vm650, %v513
      %656 = vst.msk [vmem:[#allocation2 + $0x1f] sm:$0x1] %vm652, %v515
      %657 = vst.msk [vmem:[#allocation2 + $0x1f] sm:$0xfe] %vm648, %v517
      %658 = vst.msk [vmem:[#allocation2 + $0x27] sm:$0xff] %vm650, %v519
      %659 = vst.msk [vmem:[#allocation2 + $0x2f] sm:$0x1] %vm652, %v521
      %660 = vst.msk [vmem:[#allocation2 + $0x2f] sm:$0xfe] %vm648, %v523
      %661 = vst.msk [vmem:[#allocation2 + $0x37] sm:$0xff] %vm650, %v525
      %662 = vst.msk [vmem:[#allocation2 + $0x3f] sm:$0x1] %vm652, %v527
      %663 = vst.msk [vmem:[#allocation2 + $0x3f] sm:$0xfe] %vm648, %v529
      %664 = vst.msk [vmem:[#allocation2 + $0x47] sm:$0xff] %vm650, %v531
      %665 = vst.msk [vmem:[#allocation2 + $0x4f] sm:$0x1] %vm652, %v533
      %666 = vst.msk [vmem:[#allocation2 + $0x4f] sm:$0xfe] %vm648, %v535
      %667 = vst.msk [vmem:[#allocation2 + $0x57] sm:$0xff] %vm650, %v537
      %668 = vst.msk [vmem:[#allocation2 + $0x5f] sm:$0x1] %vm652, %v539
      %669 = vst.msk [vmem:[#allocation2 + $0x5f] sm:$0xfe] %vm648, %v541
      %670 = vst.msk [vmem:[#allocation2 + $0x67] sm:$0xff] %vm650, %v543
      %671 = vst.msk [vmem:[#allocation2 + $0x6f] sm:$0x1] %vm652, %v545
      %672 = vst.msk [vmem:[#allocation2 + $0x6f] sm:$0xfe] %vm648, %v547
      %673 = vst.msk [vmem:[#allocation2 + $0x77] sm:$0xff] %vm650, %v549
      %674 = vst.msk [vmem:[#allocation2 + $0x7f] sm:$0x1] %vm652, %v551
      %675 = vst.msk [vmem:[#allocation2 + $0x7f] sm:$0xfe] %vm648, %v553
      %676 = vst.msk [vmem:[#allocation2 + $0x87] sm:$0xff] %vm650, %v555
      %677 = vst.msk [vmem:[#allocation2 + $0x8f] sm:$0x1] %vm652, %v557
      %678 = vst.msk [vmem:[#allocation2 + $0x8f] sm:$0xfe] %vm648, %v559
      %679 = vst.msk [vmem:[#allocation2 + $0x97] sm:$0xff] %vm650, %v561
      %680 = vst.msk [vmem:[#allocation2 + $0x9f] sm:$0x1] %vm652, %v563
      %681 = vst.msk [vmem:[#allocation2 + $0x9f] sm:$0xfe] %vm648, %v565
      %682 = vst.msk [vmem:[#allocation2 + $0xa7] sm:$0xff] %vm650, %v567
      %683 = vst.msk [vmem:[#allocation2 + $0xaf] sm:$0x1] %vm652, %v569
      %684 = vst.msk [vmem:[#allocation2 + $0xaf] sm:$0xfe] %vm648, %v571
      %685 = vst.msk [vmem:[#allocation2 + $0xb7] sm:$0xff] %vm650, %v573
      %686 = vst.msk [vmem:[#allocation2 + $0xbf] sm:$0x1] %vm652, %v575
      %687 = vst.msk [vmem:[#allocation2 + $0xbf] sm:$0xfe] %vm648, %v577
      %688 = vst.msk [vmem:[#allocation2 + $0xc7] sm:$0xff] %vm650, %v579
      %689 = vst.msk [vmem:[#allocation2 + $0xcf] sm:$0x1] %vm652, %v581
      %690 = vst.msk [vmem:[#allocation2 + $0xcf] sm:$0xfe] %vm648, %v583
      %691 = vst.msk [vmem:[#allocation2 + $0xd7] sm:$0xff] %vm650, %v585
      %692 = vst.msk [vmem:[#allocation2 + $0xdf] sm:$0x1] %vm652, %v587
      %693 = vst.msk [vmem:[#allocation2 + $0xdf] sm:$0xfe] %vm648, %v589
      %694 = vst.msk [vmem:[#allocation2 + $0xe7] sm:$0xff] %vm650, %v591
      %695 = vst.msk [vmem:[#allocation2 + $0xef] sm:$0x1] %vm652, %v593
      %696 = vst.msk [vmem:[#allocation2 + $0xef] sm:$0xfe] %vm648, %v595
      %697 = vst.msk [vmem:[#allocation2 + $0xf7] sm:$0xff] %vm650, %v597
      %698 = vst.msk [vmem:[#allocation2 + $0xff] sm:$0x1] %vm652, %v599
      %699 = vrot.lane.b32.xlu0 %v363, 8
      %v700 = vpop.permute.xlu0 %699
      %701 = vrot.lane.b32.xlu0 %v364, 8
      %v702 = vpop.permute.xlu0 %701
      %703 = vrot.lane.b32.xlu0 %v365, 8
      %v704 = vpop.permute.xlu0 %703
      %705 = vrot.lane.b32.xlu0 %v366, 8
      %v706 = vpop.permute.xlu0 %705
      %707 = vrot.lane.b32.xlu0 %v367, 8
      %v708 = vpop.permute.xlu0 %707
      %709 = vrot.lane.b32.xlu0 %v368, 8
      %v710 = vpop.permute.xlu0 %709
      %711 = vrot.lane.b32.xlu0 %v369, 8
      %v712 = vpop.permute.xlu0 %711
      %713 = vrot.lane.b32.xlu0 %v370, 8
      %v714 = vpop.permute.xlu0 %713
      %715 = vrot.lane.b32.xlu0 %v371, 8
      %v716 = vpop.permute.xlu0 %715
      %717 = vrot.lane.b32.xlu0 %v372, 8
      %v718 = vpop.permute.xlu0 %717
      %719 = vrot.lane.b32.xlu0 %v373, 8
      %v720 = vpop.permute.xlu0 %719
      %721 = vrot.lane.b32.xlu0 %v374, 8
      %v722 = vpop.permute.xlu0 %721
      %723 = vrot.lane.b32.xlu0 %v375, 8
      %v724 = vpop.permute.xlu0 %723
      %725 = vrot.lane.b32.xlu0 %v376, 8
      %v726 = vpop.permute.xlu0 %725
      %727 = vrot.lane.b32.xlu0 %v377, 8
      %v728 = vpop.permute.xlu0 %727
      %729 = vrot.lane.b32.xlu0 %v378, 8
      %v730 = vpop.permute.xlu0 %729
      %731 = vrot.lane.b32.xlu0 %v379, 8
      %v732 = vpop.permute.xlu0 %731
      %733 = vrot.lane.b32.xlu0 %v380, 8
      %v734 = vpop.permute.xlu0 %733
      %735 = vrot.lane.b32.xlu0 %v381, 8
      %v736 = vpop.permute.xlu0 %735
      %737 = vrot.lane.b32.xlu0 %v382, 8
      %v738 = vpop.permute.xlu0 %737
      %739 = vrot.lane.b32.xlu0 %v383, 8
      %v740 = vpop.permute.xlu0 %739
      %741 = vrot.lane.b32.xlu0 %v384, 8
      %v742 = vpop.permute.xlu0 %741
      %743 = vrot.lane.b32.xlu0 %v385, 8
      %v744 = vpop.permute.xlu0 %743
      %745 = vrot.lane.b32.xlu0 %v386, 8
      %v746 = vpop.permute.xlu0 %745
      %747 = vrot.lane.b32.xlu0 %v387, 8
      %v748 = vpop.permute.xlu0 %747
      %749 = vrot.lane.b32.xlu0 %v388, 8
      %v750 = vpop.permute.xlu0 %749
      %751 = vrot.lane.b32.xlu0 %v389, 8
      %v752 = vpop.permute.xlu0 %751
      %753 = vrot.lane.b32.xlu0 %v390, 8
      %v754 = vpop.permute.xlu0 %753
      %755 = vrot.lane.b32.xlu0 %v391, 8
      %v756 = vpop.permute.xlu0 %755
      %757 = vrot.lane.b32.xlu0 %v392, 8
      %v758 = vpop.permute.xlu0 %757
      %759 = vrot.lane.b32.xlu0 %v393, 8
      %v760 = vpop.permute.xlu0 %759
      %761 = vrot.lane.b32.xlu0 %v394, 8
      %v762 = vpop.permute.xlu0 %761
      %763 = vrot.lane.b32.xlu0 %v395, 8
      %v764 = vpop.permute.xlu0 %763
      %765 = vrot.lane.b32.xlu0 %v396, 8
      %v766 = vpop.permute.xlu0 %765
      %767 = vrot.lane.b32.xlu0 %v397, 8
      %v768 = vpop.permute.xlu0 %767
      %769 = vrot.lane.b32.xlu0 %v398, 8
      %v770 = vpop.permute.xlu0 %769
      %771 = vrot.lane.b32.xlu0 %v399, 8
      %v772 = vpop.permute.xlu0 %771
      %773 = vrot.lane.b32.xlu0 %v400, 8
      %v774 = vpop.permute.xlu0 %773
      %775 = vrot.lane.b32.xlu0 %v401, 8
      %v776 = vpop.permute.xlu0 %775
      %777 = vrot.lane.b32.xlu0 %v402, 8
      %v778 = vpop.permute.xlu0 %777
      %779 = vrot.lane.b32.xlu0 %v403, 8
      %v780 = vpop.permute.xlu0 %779
      %781 = vrot.lane.b32.xlu0 %v404, 8
      %v782 = vpop.permute.xlu0 %781
      %783 = vrot.lane.b32.xlu0 %v405, 8
      %v784 = vpop.permute.xlu0 %783
      %785 = vrot.lane.b32.xlu0 %v406, 8
      %v786 = vpop.permute.xlu0 %785
      %787 = vrot.lane.b32.xlu0 %v407, 8
      %v788 = vpop.permute.xlu0 %787
      %789 = vrot.lane.b32.xlu0 %v408, 8
      %v790 = vpop.permute.xlu0 %789
      %791 = vrot.lane.b32.xlu0 %v409, 8
      %v792 = vpop.permute.xlu0 %791
      %793 = vrot.lane.b32.xlu0 %v410, 8
      %v794 = vpop.permute.xlu0 %793
      %vm843 = vcmask 97346
      %844 = vst.msk [vmem:[#allocation2 - $0x2] sm:$0xfc] %vm843, %v700
      %vm845 = vcmask 97344
      %846 = vst.msk [vmem:[#allocation2 + $0x6] sm:$0xff] %vm845, %v702
      %vm847 = vcmask 91200
      %848 = vst.msk [vmem:[#allocation2 + $0xe] sm:$0x3] %vm847, %v704
      %849 = vst.msk [vmem:[#allocation2 + $0xe] sm:$0xfc] %vm843, %v706
      %850 = vst.msk [vmem:[#allocation2 + $0x16] sm:$0xff] %vm845, %v708
      %851 = vst.msk [vmem:[#allocation2 + $0x1e] sm:$0x3] %vm847, %v710
      %852 = vst.msk [vmem:[#allocation2 + $0x1e] sm:$0xfc] %vm843, %v712
      %853 = vst.msk [vmem:[#allocation2 + $0x26] sm:$0xff] %vm845, %v714
      %854 = vst.msk [vmem:[#allocation2 + $0x2e] sm:$0x3] %vm847, %v716
      %855 = vst.msk [vmem:[#allocation2 + $0x2e] sm:$0xfc] %vm843, %v718
      %856 = vst.msk [vmem:[#allocation2 + $0x36] sm:$0xff] %vm845, %v720
      %857 = vst.msk [vmem:[#allocation2 + $0x3e] sm:$0x3] %vm847, %v722
      %858 = vst.msk [vmem:[#allocation2 + $0x3e] sm:$0xfc] %vm843, %v724
      %859 = vst.msk [vmem:[#allocation2 + $0x46] sm:$0xff] %vm845, %v726
      %860 = vst.msk [vmem:[#allocation2 + $0x4e] sm:$0x3] %vm847, %v728
      %861 = vst.msk [vmem:[#allocation2 + $0x4e] sm:$0xfc] %vm843, %v730
      %862 = vst.msk [vmem:[#allocation2 + $0x56] sm:$0xff] %vm845, %v732
      %863 = vst.msk [vmem:[#allocation2 + $0x5e] sm:$0x3] %vm847, %v734
      %864 = vst.msk [vmem:[#allocation2 + $0x5e] sm:$0xfc] %vm843, %v736
      %865 = vst.msk [vmem:[#allocation2 + $0x66] sm:$0xff] %vm845, %v738
      %866 = vst.msk [vmem:[#allocation2 + $0x6e] sm:$0x3] %vm847, %v740
      %867 = vst.msk [vmem:[#allocation2 + $0x6e] sm:$0xfc] %vm843, %v742
      %868 = vst.msk [vmem:[#allocation2 + $0x76] sm:$0xff] %vm845, %v744
      %869 = vst.msk [vmem:[#allocation2 + $0x7e] sm:$0x3] %vm847, %v746
      %870 = vst.msk [vmem:[#allocation2 + $0x7e] sm:$0xfc] %vm843, %v748
      %871 = vst.msk [vmem:[#allocation2 + $0x86] sm:$0xff] %vm845, %v750
      %872 = vst.msk [vmem:[#allocation2 + $0x8e] sm:$0x3] %vm847, %v752
      %873 = vst.msk [vmem:[#allocation2 + $0x8e] sm:$0xfc] %vm843, %v754
      %874 = vst.msk [vmem:[#allocation2 + $0x96] sm:$0xff] %vm845, %v756
      %875 = vst.msk [vmem:[#allocation2 + $0x9e] sm:$0x3] %vm847, %v758
      %876 = vst.msk [vmem:[#allocation2 + $0x9e] sm:$0xfc] %vm843, %v760
      %877 = vst.msk [vmem:[#allocation2 + $0xa6] sm:$0xff] %vm845, %v762
      %878 = vst.msk [vmem:[#allocation2 + $0xae] sm:$0x3] %vm847, %v764
      %879 = vst.msk [vmem:[#allocation2 + $0xae] sm:$0xfc] %vm843, %v766
      %880 = vst.msk [vmem:[#allocation2 + $0xb6] sm:$0xff] %vm845, %v768
      %881 = vst.msk [vmem:[#allocation2 + $0xbe] sm:$0x3] %vm847, %v770
      %882 = vst.msk [vmem:[#allocation2 + $0xbe] sm:$0xfc] %vm843, %v772
      %883 = vst.msk [vmem:[#allocation2 + $0xc6] sm:$0xff] %vm845, %v774
      %884 = vst.msk [vmem:[#allocation2 + $0xce] sm:$0x3] %vm847, %v776
      %885 = vst.msk [vmem:[#allocation2 + $0xce] sm:$0xfc] %vm843, %v778
      %886 = vst.msk [vmem:[#allocation2 + $0xd6] sm:$0xff] %vm845, %v780
      %887 = vst.msk [vmem:[#allocation2 + $0xde] sm:$0x3] %vm847, %v782
      %888 = vst.msk [vmem:[#allocation2 + $0xde] sm:$0xfc] %vm843, %v784
      %889 = vst.msk [vmem:[#allocation2 + $0xe6] sm:$0xff] %vm845, %v786
      %890 = vst.msk [vmem:[#allocation2 + $0xee] sm:$0x3] %vm847, %v788
      %891 = vst.msk [vmem:[#allocation2 + $0xee] sm:$0xfc] %vm843, %v790
      %892 = vst.msk [vmem:[#allocation2 + $0xf6] sm:$0xff] %vm845, %v792
      %893 = vst.msk [vmem:[#allocation2 + $0xfe] sm:$0x3] %vm847, %v794
      %894 = vrot.lane.b32.xlu0 %v363, 12
      %v895 = vpop.permute.xlu0 %894
      %896 = vrot.lane.b32.xlu0 %v364, 12
      %v897 = vpop.permute.xlu0 %896
      %898 = vrot.lane.b32.xlu0 %v365, 12
      %v899 = vpop.permute.xlu0 %898
      %900 = vrot.lane.b32.xlu0 %v366, 12
      %v901 = vpop.permute.xlu0 %900
      %902 = vrot.lane.b32.xlu0 %v367, 12
      %v903 = vpop.permute.xlu0 %902
      %904 = vrot.lane.b32.xlu0 %v368, 12
      %v905 = vpop.permute.xlu0 %904
      %906 = vrot.lane.b32.xlu0 %v369, 12
      %v907 = vpop.permute.xlu0 %906
      %908 = vrot.lane.b32.xlu0 %v370, 12
      %v909 = vpop.permute.xlu0 %908
      %910 = vrot.lane.b32.xlu0 %v371, 12
      %v911 = vpop.permute.xlu0 %910
      %912 = vrot.lane.b32.xlu0 %v372, 12
      %v913 = vpop.permute.xlu0 %912
      %914 = vrot.lane.b32.xlu0 %v373, 12
      %v915 = vpop.permute.xlu0 %914
      %916 = vrot.lane.b32.xlu0 %v374, 12
      %v917 = vpop.permute.xlu0 %916
      %918 = vrot.lane.b32.xlu0 %v375, 12
      %v919 = vpop.permute.xlu0 %918
      %920 = vrot.lane.b32.xlu0 %v376, 12
      %v921 = vpop.permute.xlu0 %920
      %922 = vrot.lane.b32.xlu0 %v377, 12
      %v923 = vpop.permute.xlu0 %922
      %924 = vrot.lane.b32.xlu0 %v378, 12
      %v925 = vpop.permute.xlu0 %924
      %926 = vrot.lane.b32.xlu0 %v379, 12
      %v927 = vpop.permute.xlu0 %926
      %928 = vrot.lane.b32.xlu0 %v380, 12
      %v929 = vpop.permute.xlu0 %928
      %930 = vrot.lane.b32.xlu0 %v381, 12
      %v931 = vpop.permute.xlu0 %930
      %932 = vrot.lane.b32.xlu0 %v382, 12
      %v933 = vpop.permute.xlu0 %932
      %934 = vrot.lane.b32.xlu0 %v383, 12
      %v935 = vpop.permute.xlu0 %934
      %936 = vrot.lane.b32.xlu0 %v384, 12
      %v937 = vpop.permute.xlu0 %936
      %938 = vrot.lane.b32.xlu0 %v385, 12
      %v939 = vpop.permute.xlu0 %938
      %940 = vrot.lane.b32.xlu0 %v386, 12
      %v941 = vpop.permute.xlu0 %940
      %942 = vrot.lane.b32.xlu0 %v387, 12
      %v943 = vpop.permute.xlu0 %942
      %944 = vrot.lane.b32.xlu0 %v388, 12
      %v945 = vpop.permute.xlu0 %944
      %946 = vrot.lane.b32.xlu0 %v389, 12
      %v947 = vpop.permute.xlu0 %946
      %948 = vrot.lane.b32.xlu0 %v390, 12
      %v949 = vpop.permute.xlu0 %948
      %950 = vrot.lane.b32.xlu0 %v391, 12
      %v951 = vpop.permute.xlu0 %950
      %952 = vrot.lane.b32.xlu0 %v392, 12
      %v953 = vpop.permute.xlu0 %952
      %954 = vrot.lane.b32.xlu0 %v393, 12
      %v955 = vpop.permute.xlu0 %954
      %956 = vrot.lane.b32.xlu0 %v394, 12
      %v957 = vpop.permute.xlu0 %956
      %958 = vrot.lane.b32.xlu0 %v395, 12
      %v959 = vpop.permute.xlu0 %958
      %960 = vrot.lane.b32.xlu0 %v396, 12
      %v961 = vpop.permute.xlu0 %960
      %962 = vrot.lane.b32.xlu0 %v397, 12
      %v963 = vpop.permute.xlu0 %962
      %964 = vrot.lane.b32.xlu0 %v398, 12
      %v965 = vpop.permute.xlu0 %964
      %966 = vrot.lane.b32.xlu0 %v399, 12
      %v967 = vpop.permute.xlu0 %966
      %968 = vrot.lane.b32.xlu0 %v400, 12
      %v969 = vpop.permute.xlu0 %968
      %970 = vrot.lane.b32.xlu0 %v401, 12
      %v971 = vpop.permute.xlu0 %970
      %972 = vrot.lane.b32.xlu0 %v402, 12
      %v973 = vpop.permute.xlu0 %972
      %974 = vrot.lane.b32.xlu0 %v403, 12
      %v975 = vpop.permute.xlu0 %974
      %976 = vrot.lane.b32.xlu0 %v404, 12
      %v977 = vpop.permute.xlu0 %976
      %978 = vrot.lane.b32.xlu0 %v405, 12
      %v979 = vpop.permute.xlu0 %978
      %980 = vrot.lane.b32.xlu0 %v406, 12
      %v981 = vpop.permute.xlu0 %980
      %982 = vrot.lane.b32.xlu0 %v407, 12
      %v983 = vpop.permute.xlu0 %982
      %984 = vrot.lane.b32.xlu0 %v408, 12
      %v985 = vpop.permute.xlu0 %984
      %986 = vrot.lane.b32.xlu0 %v409, 12
      %v987 = vpop.permute.xlu0 %986
      %988 = vrot.lane.b32.xlu0 %v410, 12
      %v989 = vpop.permute.xlu0 %988
      %vm1038 = vcmask 130147
      %1039 = vst.msk [vmem:[#allocation2 - $0x3] sm:$0xf8] %vm1038, %v895
      %vm1040 = vcmask 130144
      %1041 = vst.msk [vmem:[#allocation2 + $0x5] sm:$0xff] %vm1040, %v897
      %vm1042 = vcmask 125024
      %1043 = vst.msk [vmem:[#allocation2 + $0xd] sm:$0x7] %vm1042, %v899
      %1044 = vst.msk [vmem:[#allocation2 + $0xd] sm:$0xf8] %vm1038, %v901
      %1045 = vst.msk [vmem:[#allocation2 + $0x15] sm:$0xff] %vm1040, %v903
      %1046 = vst.msk [vmem:[#allocation2 + $0x1d] sm:$0x7] %vm1042, %v905
      %1047 = vst.msk [vmem:[#allocation2 + $0x1d] sm:$0xf8] %vm1038, %v907
      %1048 = vst.msk [vmem:[#allocation2 + $0x25] sm:$0xff] %vm1040, %v909
      %1049 = vst.msk [vmem:[#allocation2 + $0x2d] sm:$0x7] %vm1042, %v911
      %1050 = vst.msk [vmem:[#allocation2 + $0x2d] sm:$0xf8] %vm1038, %v913
      %1051 = vst.msk [vmem:[#allocation2 + $0x35] sm:$0xff] %vm1040, %v915
      %1052 = vst.msk [vmem:[#allocation2 + $0x3d] sm:$0x7] %vm1042, %v917
      %1053 = vst.msk [vmem:[#allocation2 + $0x3d] sm:$0xf8] %vm1038, %v919
      %1054 = vst.msk [vmem:[#allocation2 + $0x45] sm:$0xff] %vm1040, %v921
      %1055 = vst.msk [vmem:[#allocation2 + $0x4d] sm:$0x7] %vm1042, %v923
      %1056 = vst.msk [vmem:[#allocation2 + $0x4d] sm:$0xf8] %vm1038, %v925
      %1057 = vst.msk [vmem:[#allocation2 + $0x55] sm:$0xff] %vm1040, %v927
      %1058 = vst.msk [vmem:[#allocation2 + $0x5d] sm:$0x7] %vm1042, %v929
      %1059 = vst.msk [vmem:[#allocation2 + $0x5d] sm:$0xf8] %vm1038, %v931
      %1060 = vst.msk [vmem:[#allocation2 + $0x65] sm:$0xff] %vm1040, %v933
      %1061 = vst.msk [vmem:[#allocation2 + $0x6d] sm:$0x7] %vm1042, %v935
      %1062 = vst.msk [vmem:[#allocation2 + $0x6d] sm:$0xf8] %vm1038, %v937
      %1063 = vst.msk [vmem:[#allocation2 + $0x75] sm:$0xff] %vm1040, %v939
      %1064 = vst.msk [vmem:[#allocation2 + $0x7d] sm:$0x7] %vm1042, %v941
      %1065 = vst.msk [vmem:[#allocation2 + $0x7d] sm:$0xf8] %vm1038, %v943
      %1066 = vst.msk [vmem:[#allocation2 + $0x85] sm:$0xff] %vm1040, %v945
      %1067 = vst.msk [vmem:[#allocation2 + $0x8d] sm:$0x7] %vm1042, %v947
      %1068 = vst.msk [vmem:[#allocation2 + $0x8d] sm:$0xf8] %vm1038, %v949
      %1069 = vst.msk [vmem:[#allocation2 + $0x95] sm:$0xff] %vm1040, %v951
      %1070 = vst.msk [vmem:[#allocation2 + $0x9d] sm:$0x7] %vm1042, %v953
      %1071 = vst.msk [vmem:[#allocation2 + $0x9d] sm:$0xf8] %vm1038, %v955
      %1072 = vst.msk [vmem:[#allocation2 + $0xa5] sm:$0xff] %vm1040, %v957
      %1073 = vst.msk [vmem:[#allocation2 + $0xad] sm:$0x7] %vm1042, %v959
      %1074 = vst.msk [vmem:[#allocation2 + $0xad] sm:$0xf8] %vm1038, %v961
      %1075 = vst.msk [vmem:[#allocation2 + $0xb5] sm:$0xff] %vm1040, %v963
      %1076 = vst.msk [vmem:[#allocation2 + $0xbd] sm:$0x7] %vm1042, %v965
      %1077 = vst.msk [vmem:[#allocation2 + $0xbd] sm:$0xf8] %vm1038, %v967
      %1078 = vst.msk [vmem:[#allocation2 + $0xc5] sm:$0xff] %vm1040, %v969
      %1079 = vst.msk [vmem:[#allocation2 + $0xcd] sm:$0x7] %vm1042, %v971
      %1080 = vst.msk [vmem:[#allocation2 + $0xcd] sm:$0xf8] %vm1038, %v973
      %1081 = vst.msk [vmem:[#allocation2 + $0xd5] sm:$0xff] %vm1040, %v975
      %1082 = vst.msk [vmem:[#allocation2 + $0xdd] sm:$0x7] %vm1042, %v977
      %1083 = vst.msk [vmem:[#allocation2 + $0xdd] sm:$0xf8] %vm1038, %v979
      %1084 = vst.msk [vmem:[#allocation2 + $0xe5] sm:$0xff] %vm1040, %v981
      %1085 = vst.msk [vmem:[#allocation2 + $0xed] sm:$0x7] %vm1042, %v983
      %1086 = vst.msk [vmem:[#allocation2 + $0xed] sm:$0xf8] %vm1038, %v985
      %1087 = vst.msk [vmem:[#allocation2 + $0xf5] sm:$0xff] %vm1040, %v987
      %1088 = vst.msk [vmem:[#allocation2 + $0xfd] sm:$0x7] %vm1042, %v989
      %1089 = vrot.lane.b32.xlu0 %v363, 16
      %v1090 = vpop.permute.xlu0 %1089
      %1091 = vrot.lane.b32.xlu0 %v364, 16
      %v1092 = vpop.permute.xlu0 %1091
      %1093 = vrot.lane.b32.xlu0 %v365, 16
      %v1094 = vpop.permute.xlu0 %1093
      %1095 = vrot.lane.b32.xlu0 %v366, 16
      %v1096 = vpop.permute.xlu0 %1095
      %1097 = vrot.lane.b32.xlu0 %v367, 16
      %v1098 = vpop.permute.xlu0 %1097
      %1099 = vrot.lane.b32.xlu0 %v368, 16
      %v1100 = vpop.permute.xlu0 %1099
      %1101 = vrot.lane.b32.xlu0 %v369, 16
      %v1102 = vpop.permute.xlu0 %1101
      %1103 = vrot.lane.b32.xlu0 %v370, 16
      %v1104 = vpop.permute.xlu0 %1103
      %1105 = vrot.lane.b32.xlu0 %v371, 16
      %v1106 = vpop.permute.xlu0 %1105
      %1107 = vrot.lane.b32.xlu0 %v372, 16
      %v1108 = vpop.permute.xlu0 %1107
      %1109 = vrot.lane.b32.xlu0 %v373, 16
      %v1110 = vpop.permute.xlu0 %1109
      %1111 = vrot.lane.b32.xlu0 %v374, 16
      %v1112 = vpop.permute.xlu0 %1111
      %1113 = vrot.lane.b32.xlu0 %v375, 16
      %v1114 = vpop.permute.xlu0 %1113
      %1115 = vrot.lane.b32.xlu0 %v376, 16
      %v1116 = vpop.permute.xlu0 %1115
      %1117 = vrot.lane.b32.xlu0 %v377, 16
      %v1118 = vpop.permute.xlu0 %1117
      %1119 = vrot.lane.b32.xlu0 %v378, 16
      %v1120 = vpop.permute.xlu0 %1119
      %1121 = vrot.lane.b32.xlu0 %v379, 16
      %v1122 = vpop.permute.xlu0 %1121
      %1123 = vrot.lane.b32.xlu0 %v380, 16
      %v1124 = vpop.permute.xlu0 %1123
      %1125 = vrot.lane.b32.xlu0 %v381, 16
      %v1126 = vpop.permute.xlu0 %1125
      %1127 = vrot.lane.b32.xlu0 %v382, 16
      %v1128 = vpop.permute.xlu0 %1127
      %1129 = vrot.lane.b32.xlu0 %v383, 16
      %v1130 = vpop.permute.xlu0 %1129
      %1131 = vrot.lane.b32.xlu0 %v384, 16
      %v1132 = vpop.permute.xlu0 %1131
      %1133 = vrot.lane.b32.xlu0 %v385, 16
      %v1134 = vpop.permute.xlu0 %1133
      %1135 = vrot.lane.b32.xlu0 %v386, 16
      %v1136 = vpop.permute.xlu0 %1135
      %1137 = vrot.lane.b32.xlu0 %v387, 16
      %v1138 = vpop.permute.xlu0 %1137
      %1139 = vrot.lane.b32.xlu0 %v388, 16
      %v1140 = vpop.permute.xlu0 %1139
      %1141 = vrot.lane.b32.xlu0 %v389, 16
      %v1142 = vpop.permute.xlu0 %1141
      %1143 = vrot.lane.b32.xlu0 %v390, 16
      %v1144 = vpop.permute.xlu0 %1143
      %1145 = vrot.lane.b32.xlu0 %v391, 16
      %v1146 = vpop.permute.xlu0 %1145
      %1147 = vrot.lane.b32.xlu0 %v392, 16
      %v1148 = vpop.permute.xlu0 %1147
      %1149 = vrot.lane.b32.xlu0 %v393, 16
      %v1150 = vpop.permute.xlu0 %1149
      %1151 = vrot.lane.b32.xlu0 %v394, 16
      %v1152 = vpop.permute.xlu0 %1151
      %1153 = vrot.lane.b32.xlu0 %v395, 16
      %v1154 = vpop.permute.xlu0 %1153
      %1155 = vrot.lane.b32.xlu0 %v396, 16
      %v1156 = vpop.permute.xlu0 %1155
      %1157 = vrot.lane.b32.xlu0 %v397, 16
      %v1158 = vpop.permute.xlu0 %1157
      %1159 = vrot.lane.b32.xlu0 %v398, 16
      %v1160 = vpop.permute.xlu0 %1159
      %1161 = vrot.lane.b32.xlu0 %v399, 16
      %v1162 = vpop.permute.xlu0 %1161
      %1163 = vrot.lane.b32.xlu0 %v400, 16
      %v1164 = vpop.permute.xlu0 %1163
      %1165 = vrot.lane.b32.xlu0 %v401, 16
      %v1166 = vpop.permute.xlu0 %1165
      %1167 = vrot.lane.b32.xlu0 %v402, 16
      %v1168 = vpop.permute.xlu0 %1167
      %1169 = vrot.lane.b32.xlu0 %v403, 16
      %v1170 = vpop.permute.xlu0 %1169
      %1171 = vrot.lane.b32.xlu0 %v404, 16
      %v1172 = vpop.permute.xlu0 %1171
      %1173 = vrot.lane.b32.xlu0 %v405, 16
      %v1174 = vpop.permute.xlu0 %1173
      %1175 = vrot.lane.b32.xlu0 %v406, 16
      %v1176 = vpop.permute.xlu0 %1175
      %1177 = vrot.lane.b32.xlu0 %v407, 16
      %v1178 = vpop.permute.xlu0 %1177
      %1179 = vrot.lane.b32.xlu0 %v408, 16
      %v1180 = vpop.permute.xlu0 %1179
      %1181 = vrot.lane.b32.xlu0 %v409, 16
      %v1182 = vpop.permute.xlu0 %1181
      %1183 = vrot.lane.b32.xlu0 %v410, 16
      %v1184 = vpop.permute.xlu0 %1183
      %vm1233 = vcmask 162948
      %1234 = vst.msk [vmem:[#allocation2 - $0x4] sm:$0xf0] %vm1233, %v1090
      %vm1235 = vcmask 162944
      %1236 = vst.msk [vmem:[#allocation2 + $0x4] sm:$0xff] %vm1235, %v1092
      %vm1237 = vcmask 158848
      %1238 = vst.msk [vmem:[#allocation2 + $0xc] sm:$0xf] %vm1237, %v1094
      %1239 = vst.msk [vmem:[#allocation2 + $0xc] sm:$0xf0] %vm1233, %v1096
      %1240 = vst.msk [vmem:[#allocation2 + $0x14] sm:$0xff] %vm1235, %v1098
      %1241 = vst.msk [vmem:[#allocation2 + $0x1c] sm:$0xf] %vm1237, %v1100
      %1242 = vst.msk [vmem:[#allocation2 + $0x1c] sm:$0xf0] %vm1233, %v1102
      %1243 = vst.msk [vmem:[#allocation2 + $0x24] sm:$0xff] %vm1235, %v1104
      %1244 = vst.msk [vmem:[#allocation2 + $0x2c] sm:$0xf] %vm1237, %v1106
      %1245 = vst.msk [vmem:[#allocation2 + $0x2c] sm:$0xf0] %vm1233, %v1108
      %1246 = vst.msk [vmem:[#allocation2 + $0x34] sm:$0xff] %vm1235, %v1110
      %1247 = vst.msk [vmem:[#allocation2 + $0x3c] sm:$0xf] %vm1237, %v1112
      %1248 = vst.msk [vmem:[#allocation2 + $0x3c] sm:$0xf0] %vm1233, %v1114
      %1249 = vst.msk [vmem:[#allocation2 + $0x44] sm:$0xff] %vm1235, %v1116
      %1250 = vst.msk [vmem:[#allocation2 + $0x4c] sm:$0xf] %vm1237, %v1118
      %1251 = vst.msk [vmem:[#allocation2 + $0x4c] sm:$0xf0] %vm1233, %v1120
      %1252 = vst.msk [vmem:[#allocation2 + $0x54] sm:$0xff] %vm1235, %v1122
      %1253 = vst.msk [vmem:[#allocation2 + $0x5c] sm:$0xf] %vm1237, %v1124
      %1254 = vst.msk [vmem:[#allocation2 + $0x5c] sm:$0xf0] %vm1233, %v1126
      %1255 = vst.msk [vmem:[#allocation2 + $0x64] sm:$0xff] %vm1235, %v1128
      %1256 = vst.msk [vmem:[#allocation2 + $0x6c] sm:$0xf] %vm1237, %v1130
      %1257 = vst.msk [vmem:[#allocation2 + $0x6c] sm:$0xf0] %vm1233, %v1132
      %1258 = vst.msk [vmem:[#allocation2 + $0x74] sm:$0xff] %vm1235, %v1134
      %1259 = vst.msk [vmem:[#allocation2 + $0x7c] sm:$0xf] %vm1237, %v1136
      %1260 = vst.msk [vmem:[#allocation2 + $0x7c] sm:$0xf0] %vm1233, %v1138
      %1261 = vst.msk [vmem:[#allocation2 + $0x84] sm:$0xff] %vm1235, %v1140
      %1262 = vst.msk [vmem:[#allocation2 + $0x8c] sm:$0xf] %vm1237, %v1142
      %1263 = vst.msk [vmem:[#allocation2 + $0x8c] sm:$0xf0] %vm1233, %v1144
      %1264 = vst.msk [vmem:[#allocation2 + $0x94] sm:$0xff] %vm1235, %v1146
      %1265 = vst.msk [vmem:[#allocation2 + $0x9c] sm:$0xf] %vm1237, %v1148
      %1266 = vst.msk [vmem:[#allocation2 + $0x9c] sm:$0xf0] %vm1233, %v1150
      %1267 = vst.msk [vmem:[#allocation2 + $0xa4] sm:$0xff] %vm1235, %v1152
      %1268 = vst.msk [vmem:[#allocation2 + $0xac] sm:$0xf] %vm1237, %v1154
      %1269 = vst.msk [vmem:[#allocation2 + $0xac] sm:$0xf0] %vm1233, %v1156
      %1270 = vst.msk [vmem:[#allocation2 + $0xb4] sm:$0xff] %vm1235, %v1158
      %1271 = vst.msk [vmem:[#allocation2 + $0xbc] sm:$0xf] %vm1237, %v1160
      %1272 = vst.msk [vmem:[#allocation2 + $0xbc] sm:$0xf0] %vm1233, %v1162
      %1273 = vst.msk [vmem:[#allocation2 + $0xc4] sm:$0xff] %vm1235, %v1164
      %1274 = vst.msk [vmem:[#allocation2 + $0xcc] sm:$0xf] %vm1237, %v1166
      %1275 = vst.msk [vmem:[#allocation2 + $0xcc] sm:$0xf0] %vm1233, %v1168
      %1276 = vst.msk [vmem:[#allocation2 + $0xd4] sm:$0xff] %vm1235, %v1170
      %1277 = vst.msk [vmem:[#allocation2 + $0xdc] sm:$0xf] %vm1237, %v1172
      %1278 = vst.msk [vmem:[#allocation2 + $0xdc] sm:$0xf0] %vm1233, %v1174
      %1279 = vst.msk [vmem:[#allocation2 + $0xe4] sm:$0xff] %vm1235, %v1176
      %1280 = vst.msk [vmem:[#allocation2 + $0xec] sm:$0xf] %vm1237, %v1178
      %1281 = vst.msk [vmem:[#allocation2 + $0xec] sm:$0xf0] %vm1233, %v1180
      %1282 = vst.msk [vmem:[#allocation2 + $0xf4] sm:$0xff] %vm1235, %v1182
      %1283 = vst.msk [vmem:[#allocation2 + $0xfc] sm:$0xf] %vm1237, %v1184
      %1286 = vrot.lane.b32.xlu0 %v366, 20
      %v1287 = vpop.permute.xlu0 %1286
      %1288 = vrot.lane.b32.xlu0 %v367, 20
      %v1289 = vpop.permute.xlu0 %1288
      %1290 = vrot.lane.b32.xlu0 %v369, 20
      %v1291 = vpop.permute.xlu0 %1290
      %1292 = vrot.lane.b32.xlu0 %v370, 20
      %v1293 = vpop.permute.xlu0 %1292
      %1294 = vrot.lane.b32.xlu0 %v372, 20
      %v1295 = vpop.permute.xlu0 %1294
      %1296 = vrot.lane.b32.xlu0 %v373, 20
      %v1297 = vpop.permute.xlu0 %1296
      %1298 = vrot.lane.b32.xlu0 %v375, 20
      %v1299 = vpop.permute.xlu0 %1298
      %1300 = vrot.lane.b32.xlu0 %v376, 20
      %v1301 = vpop.permute.xlu0 %1300
      %1302 = vrot.lane.b32.xlu0 %v378, 20
      %v1303 = vpop.permute.xlu0 %1302
      %1304 = vrot.lane.b32.xlu0 %v379, 20
      %v1305 = vpop.permute.xlu0 %1304
      %1306 = vrot.lane.b32.xlu0 %v381, 20
      %v1307 = vpop.permute.xlu0 %1306
      %1308 = vrot.lane.b32.xlu0 %v382, 20
      %v1309 = vpop.permute.xlu0 %1308
      %1310 = vrot.lane.b32.xlu0 %v384, 20
      %v1311 = vpop.permute.xlu0 %1310
      %1312 = vrot.lane.b32.xlu0 %v385, 20
      %v1313 = vpop.permute.xlu0 %1312
      %1314 = vrot.lane.b32.xlu0 %v387, 20
      %v1315 = vpop.permute.xlu0 %1314
      %1316 = vrot.lane.b32.xlu0 %v388, 20
      %v1317 = vpop.permute.xlu0 %1316
      %1318 = vrot.lane.b32.xlu0 %v390, 20
      %v1319 = vpop.permute.xlu0 %1318
      %1320 = vrot.lane.b32.xlu0 %v391, 20
      %v1321 = vpop.permute.xlu0 %1320
      %1322 = vrot.lane.b32.xlu0 %v393, 20
      %v1323 = vpop.permute.xlu0 %1322
      %1324 = vrot.lane.b32.xlu0 %v394, 20
      %v1325 = vpop.permute.xlu0 %1324
      %1326 = vrot.lane.b32.xlu0 %v396, 20
      %v1327 = vpop.permute.xlu0 %1326
      %1328 = vrot.lane.b32.xlu0 %v397, 20
      %v1329 = vpop.permute.xlu0 %1328
      %1330 = vrot.lane.b32.xlu0 %v399, 20
      %v1331 = vpop.permute.xlu0 %1330
      %1332 = vrot.lane.b32.xlu0 %v400, 20
      %v1333 = vpop.permute.xlu0 %1332
      %1334 = vrot.lane.b32.xlu0 %v402, 20
      %v1335 = vpop.permute.xlu0 %1334
      %1336 = vrot.lane.b32.xlu0 %v403, 20
      %v1337 = vpop.permute.xlu0 %1336
      %1338 = vrot.lane.b32.xlu0 %v405, 20
      %v1339 = vpop.permute.xlu0 %1338
      %1340 = vrot.lane.b32.xlu0 %v406, 20
      %v1341 = vpop.permute.xlu0 %1340
      %1342 = vrot.lane.b32.xlu0 %v408, 20
      %v1343 = vpop.permute.xlu0 %1342
      %1344 = vrot.lane.b32.xlu0 %v409, 20
      %v1345 = vpop.permute.xlu0 %1344
      %1346 = vrot.lane.b32.xlu0 %v411, 20
      %v1347 = vpop.permute.xlu0 %1346
      %1348 = vrot.lane.b32.xlu0 %v412, 20
      %v1349 = vpop.permute.xlu0 %1348
      %vm1382 = vcmask 195744
      %1383 = vst.msk [vmem:[#allocation2] sm:$0xff] %vm1382, %v1287
      %1384 = vst.msk [vmem:[#allocation2 + $0x8] sm:$0xff] %vm1382, %v1289
      %1385 = vst.msk [vmem:[#allocation2 + $0x10] sm:$0xff] %vm1382, %v1291
      %1386 = vst.msk [vmem:[#allocation2 + $0x18] sm:$0xff] %vm1382, %v1293
      %1387 = vst.msk [vmem:[#allocation2 + $0x20] sm:$0xff] %vm1382, %v1295
      %1388 = vst.msk [vmem:[#allocation2 + $0x28] sm:$0xff] %vm1382, %v1297
      %1389 = vst.msk [vmem:[#allocation2 + $0x30] sm:$0xff] %vm1382, %v1299
      %1390 = vst.msk [vmem:[#allocation2 + $0x38] sm:$0xff] %vm1382, %v1301
      %1391 = vst.msk [vmem:[#allocation2 + $0x40] sm:$0xff] %vm1382, %v1303
      %1392 = vst.msk [vmem:[#allocation2 + $0x48] sm:$0xff] %vm1382, %v1305
      %1393 = vst.msk [vmem:[#allocation2 + $0x50] sm:$0xff] %vm1382, %v1307
      %1394 = vst.msk [vmem:[#allocation2 + $0x58] sm:$0xff] %vm1382, %v1309
      %1395 = vst.msk [vmem:[#allocation2 + $0x60] sm:$0xff] %vm1382, %v1311
      %1396 = vst.msk [vmem:[#allocation2 + $0x68] sm:$0xff] %vm1382, %v1313
      %1397 = vst.msk [vmem:[#allocation2 + $0x70] sm:$0xff] %vm1382, %v1315
      %1398 = vst.msk [vmem:[#allocation2 + $0x78] sm:$0xff] %vm1382, %v1317
      %1399 = vst.msk [vmem:[#allocation2 + $0x80] sm:$0xff] %vm1382, %v1319
      %1400 = vst.msk [vmem:[#allocation2 + $0x88] sm:$0xff] %vm1382, %v1321
      %1401 = vst.msk [vmem:[#allocation2 + $0x90] sm:$0xff] %vm1382, %v1323
      %1402 = vst.msk [vmem:[#allocation2 + $0x98] sm:$0xff] %vm1382, %v1325
      %1403 = vst.msk [vmem:[#allocation2 + $0xa0] sm:$0xff] %vm1382, %v1327
      %1404 = vst.msk [vmem:[#allocation2 + $0xa8] sm:$0xff] %vm1382, %v1329
      %1405 = vst.msk [vmem:[#allocation2 + $0xb0] sm:$0xff] %vm1382, %v1331
      %1406 = vst.msk [vmem:[#allocation2 + $0xb8] sm:$0xff] %vm1382, %v1333
      %1407 = vst.msk [vmem:[#allocation2 + $0xc0] sm:$0xff] %vm1382, %v1335
      %1408 = vst.msk [vmem:[#allocation2 + $0xc8] sm:$0xff] %vm1382, %v1337
      %1409 = vst.msk [vmem:[#allocation2 + $0xd0] sm:$0xff] %vm1382, %v1339
      %1410 = vst.msk [vmem:[#allocation2 + $0xd8] sm:$0xff] %vm1382, %v1341
      %1411 = vst.msk [vmem:[#allocation2 + $0xe0] sm:$0xff] %vm1382, %v1343
      %1412 = vst.msk [vmem:[#allocation2 + $0xe8] sm:$0xff] %vm1382, %v1345
      %1413 = vst.msk [vmem:[#allocation2 + $0xf0] sm:$0xff] %vm1382, %v1347
      %1414 = vst.msk [vmem:[#allocation2 + $0xf8] sm:$0xff] %vm1382, %v1349
      %1416 = vrot.lane.b32.xlu0 %v366, 24
      %v1417 = vpop.permute.xlu0 %1416
      %1418 = vrot.lane.b32.xlu0 %v367, 24
      %v1419 = vpop.permute.xlu0 %1418
      %1420 = vrot.lane.b32.xlu0 %v368, 24
      %v1421 = vpop.permute.xlu0 %1420
      %1422 = vrot.lane.b32.xlu0 %v369, 24
      %v1423 = vpop.permute.xlu0 %1422
      %1424 = vrot.lane.b32.xlu0 %v370, 24
      %v1425 = vpop.permute.xlu0 %1424
      %1426 = vrot.lane.b32.xlu0 %v371, 24
      %v1427 = vpop.permute.xlu0 %1426
      %1428 = vrot.lane.b32.xlu0 %v372, 24
      %v1429 = vpop.permute.xlu0 %1428
      %1430 = vrot.lane.b32.xlu0 %v373, 24
      %v1431 = vpop.permute.xlu0 %1430
      %1432 = vrot.lane.b32.xlu0 %v374, 24
      %v1433 = vpop.permute.xlu0 %1432
      %1434 = vrot.lane.b32.xlu0 %v375, 24
      %v1435 = vpop.permute.xlu0 %1434
      %1436 = vrot.lane.b32.xlu0 %v376, 24
      %v1437 = vpop.permute.xlu0 %1436
      %1438 = vrot.lane.b32.xlu0 %v377, 24
      %v1439 = vpop.permute.xlu0 %1438
      %1440 = vrot.lane.b32.xlu0 %v378, 24
      %v1441 = vpop.permute.xlu0 %1440
      %1442 = vrot.lane.b32.xlu0 %v379, 24
      %v1443 = vpop.permute.xlu0 %1442
      %1444 = vrot.lane.b32.xlu0 %v380, 24
      %v1445 = vpop.permute.xlu0 %1444
      %1446 = vrot.lane.b32.xlu0 %v381, 24
      %v1447 = vpop.permute.xlu0 %1446
      %1448 = vrot.lane.b32.xlu0 %v382, 24
      %v1449 = vpop.permute.xlu0 %1448
      %1450 = vrot.lane.b32.xlu0 %v383, 24
      %v1451 = vpop.permute.xlu0 %1450
      %1452 = vrot.lane.b32.xlu0 %v384, 24
      %v1453 = vpop.permute.xlu0 %1452
      %1454 = vrot.lane.b32.xlu0 %v385, 24
      %v1455 = vpop.permute.xlu0 %1454
      %1456 = vrot.lane.b32.xlu0 %v386, 24
      %v1457 = vpop.permute.xlu0 %1456
      %1458 = vrot.lane.b32.xlu0 %v387, 24
      %v1459 = vpop.permute.xlu0 %1458
      %1460 = vrot.lane.b32.xlu0 %v388, 24
      %v1461 = vpop.permute.xlu0 %1460
      %1462 = vrot.lane.b32.xlu0 %v389, 24
      %v1463 = vpop.permute.xlu0 %1462
      %1464 = vrot.lane.b32.xlu0 %v390, 24
      %v1465 = vpop.permute.xlu0 %1464
      %1466 = vrot.lane.b32.xlu0 %v391, 24
      %v1467 = vpop.permute.xlu0 %1466
      %1468 = vrot.lane.b32.xlu0 %v392, 24
      %v1469 = vpop.permute.xlu0 %1468
      %1470 = vrot.lane.b32.xlu0 %v393, 24
      %v1471 = vpop.permute.xlu0 %1470
      %1472 = vrot.lane.b32.xlu0 %v394, 24
      %v1473 = vpop.permute.xlu0 %1472
      %1474 = vrot.lane.b32.xlu0 %v395, 24
      %v1475 = vpop.permute.xlu0 %1474
      %1476 = vrot.lane.b32.xlu0 %v396, 24
      %v1477 = vpop.permute.xlu0 %1476
      %1478 = vrot.lane.b32.xlu0 %v397, 24
      %v1479 = vpop.permute.xlu0 %1478
      %1480 = vrot.lane.b32.xlu0 %v398, 24
      %v1481 = vpop.permute.xlu0 %1480
      %1482 = vrot.lane.b32.xlu0 %v399, 24
      %v1483 = vpop.permute.xlu0 %1482
      %1484 = vrot.lane.b32.xlu0 %v400, 24
      %v1485 = vpop.permute.xlu0 %1484
      %1486 = vrot.lane.b32.xlu0 %v401, 24
      %v1487 = vpop.permute.xlu0 %1486
      %1488 = vrot.lane.b32.xlu0 %v402, 24
      %v1489 = vpop.permute.xlu0 %1488
      %1490 = vrot.lane.b32.xlu0 %v403, 24
      %v1491 = vpop.permute.xlu0 %1490
      %1492 = vrot.lane.b32.xlu0 %v404, 24
      %v1493 = vpop.permute.xlu0 %1492
      %1494 = vrot.lane.b32.xlu0 %v405, 24
      %v1495 = vpop.permute.xlu0 %1494
      %1496 = vrot.lane.b32.xlu0 %v406, 24
      %v1497 = vpop.permute.xlu0 %1496
      %1498 = vrot.lane.b32.xlu0 %v407, 24
      %v1499 = vpop.permute.xlu0 %1498
      %1500 = vrot.lane.b32.xlu0 %v408, 24
      %v1501 = vpop.permute.xlu0 %1500
      %1502 = vrot.lane.b32.xlu0 %v409, 24
      %v1503 = vpop.permute.xlu0 %1502
      %1504 = vrot.lane.b32.xlu0 %v410, 24
      %v1505 = vpop.permute.xlu0 %1504
      %1506 = vrot.lane.b32.xlu0 %v411, 24
      %v1507 = vpop.permute.xlu0 %1506
      %1508 = vrot.lane.b32.xlu0 %v412, 24
      %v1509 = vpop.permute.xlu0 %1508
      %1510 = vrot.lane.b32.xlu0 %v413, 24
      %v1511 = vpop.permute.xlu0 %1510
      %vm1560 = vcmask 228545
      %1561 = vst.msk [vmem:[#allocation2 - $0x1] sm:$0xfe] %vm1560, %v1417
      %vm1562 = vcmask 228544
      %1563 = vst.msk [vmem:[#allocation2 + $0x7] sm:$0xff] %vm1562, %v1419
      %vm1564 = vcmask 221376
      %1565 = vst.msk [vmem:[#allocation2 + $0xf] sm:$0x1] %vm1564, %v1421
      %1566 = vst.msk [vmem:[#allocation2 + $0xf] sm:$0xfe] %vm1560, %v1423
      %1567 = vst.msk [vmem:[#allocation2 + $0x17] sm:$0xff] %vm1562, %v1425
      %1568 = vst.msk [vmem:[#allocation2 + $0x1f] sm:$0x1] %vm1564, %v1427
      %1569 = vst.msk [vmem:[#allocation2 + $0x1f] sm:$0xfe] %vm1560, %v1429
      %1570 = vst.msk [vmem:[#allocation2 + $0x27] sm:$0xff] %vm1562, %v1431
      %1571 = vst.msk [vmem:[#allocation2 + $0x2f] sm:$0x1] %vm1564, %v1433
      %1572 = vst.msk [vmem:[#allocation2 + $0x2f] sm:$0xfe] %vm1560, %v1435
      %1573 = vst.msk [vmem:[#allocation2 + $0x37] sm:$0xff] %vm1562, %v1437
      %1574 = vst.msk [vmem:[#allocation2 + $0x3f] sm:$0x1] %vm1564, %v1439
      %1575 = vst.msk [vmem:[#allocation2 + $0x3f] sm:$0xfe] %vm1560, %v1441
      %1576 = vst.msk [vmem:[#allocation2 + $0x47] sm:$0xff] %vm1562, %v1443
      %1577 = vst.msk [vmem:[#allocation2 + $0x4f] sm:$0x1] %vm1564, %v1445
      %1578 = vst.msk [vmem:[#allocation2 + $0x4f] sm:$0xfe] %vm1560, %v1447
      %1579 = vst.msk [vmem:[#allocation2 + $0x57] sm:$0xff] %vm1562, %v1449
      %1580 = vst.msk [vmem:[#allocation2 + $0x5f] sm:$0x1] %vm1564, %v1451
      %1581 = vst.msk [vmem:[#allocation2 + $0x5f] sm:$0xfe] %vm1560, %v1453
      %1582 = vst.msk [vmem:[#allocation2 + $0x67] sm:$0xff] %vm1562, %v1455
      %1583 = vst.msk [vmem:[#allocation2 + $0x6f] sm:$0x1] %vm1564, %v1457
      %1584 = vst.msk [vmem:[#allocation2 + $0x6f] sm:$0xfe] %vm1560, %v1459
      %1585 = vst.msk [vmem:[#allocation2 + $0x77] sm:$0xff] %vm1562, %v1461
      %1586 = vst.msk [vmem:[#allocation2 + $0x7f] sm:$0x1] %vm1564, %v1463
      %1587 = vst.msk [vmem:[#allocation2 + $0x7f] sm:$0xfe] %vm1560, %v1465
      %1588 = vst.msk [vmem:[#allocation2 + $0x87] sm:$0xff] %vm1562, %v1467
      %1589 = vst.msk [vmem:[#allocation2 + $0x8f] sm:$0x1] %vm1564, %v1469
      %1590 = vst.msk [vmem:[#allocation2 + $0x8f] sm:$0xfe] %vm1560, %v1471
      %1591 = vst.msk [vmem:[#allocation2 + $0x97] sm:$0xff] %vm1562, %v1473
      %1592 = vst.msk [vmem:[#allocation2 + $0x9f] sm:$0x1] %vm1564, %v1475
      %1593 = vst.msk [vmem:[#allocation2 + $0x9f] sm:$0xfe] %vm1560, %v1477
      %1594 = vst.msk [vmem:[#allocation2 + $0xa7] sm:$0xff] %vm1562, %v1479
      %1595 = vst.msk [vmem:[#allocation2 + $0xaf] sm:$0x1] %vm1564, %v1481
      %1596 = vst.msk [vmem:[#allocation2 + $0xaf] sm:$0xfe] %vm1560, %v1483
      %1597 = vst.msk [vmem:[#allocation2 + $0xb7] sm:$0xff] %vm1562, %v1485
      %1598 = vst.msk [vmem:[#allocation2 + $0xbf] sm:$0x1] %vm1564, %v1487
      %1599 = vst.msk [vmem:[#allocation2 + $0xbf] sm:$0xfe] %vm1560, %v1489
      %1600 = vst.msk [vmem:[#allocation2 + $0xc7] sm:$0xff] %vm1562, %v1491
      %1601 = vst.msk [vmem:[#allocation2 + $0xcf] sm:$0x1] %vm1564, %v1493
      %1602 = vst.msk [vmem:[#allocation2 + $0xcf] sm:$0xfe] %vm1560, %v1495
      %1603 = vst.msk [vmem:[#allocation2 + $0xd7] sm:$0xff] %vm1562, %v1497
      %1604 = vst.msk [vmem:[#allocation2 + $0xdf] sm:$0x1] %vm1564, %v1499
      %1605 = vst.msk [vmem:[#allocation2 + $0xdf] sm:$0xfe] %vm1560, %v1501
      %1606 = vst.msk [vmem:[#allocation2 + $0xe7] sm:$0xff] %vm1562, %v1503
      %1607 = vst.msk [vmem:[#allocation2 + $0xef] sm:$0x1] %vm1564, %v1505
      %1608 = vst.msk [vmem:[#allocation2 + $0xef] sm:$0xfe] %vm1560, %v1507
      %1609 = vst.msk [vmem:[#allocation2 + $0xf7] sm:$0xff] %vm1562, %v1509
      %1610 = vst.msk [vmem:[#allocation2 + $0xff] sm:$0x1] %vm1564, %v1511
      %1611 = vrot.lane.b32.xlu0 %v366, 28
      %v1612 = vpop.permute.xlu0 %1611
      %1613 = vrot.lane.b32.xlu0 %v367, 28
      %v1614 = vpop.permute.xlu0 %1613
      %1615 = vrot.lane.b32.xlu0 %v368, 28
      %v1616 = vpop.permute.xlu0 %1615
      %1617 = vrot.lane.b32.xlu0 %v369, 28
      %v1618 = vpop.permute.xlu0 %1617
      %1619 = vrot.lane.b32.xlu0 %v370, 28
      %v1620 = vpop.permute.xlu0 %1619
      %1621 = vrot.lane.b32.xlu0 %v371, 28
      %v1622 = vpop.permute.xlu0 %1621
      %1623 = vrot.lane.b32.xlu0 %v372, 28
      %v1624 = vpop.permute.xlu0 %1623
      %1625 = vrot.lane.b32.xlu0 %v373, 28
      %v1626 = vpop.permute.xlu0 %1625
      %1627 = vrot.lane.b32.xlu0 %v374, 28
      %v1628 = vpop.permute.xlu0 %1627
      %1629 = vrot.lane.b32.xlu0 %v375, 28
      %v1630 = vpop.permute.xlu0 %1629
      %1631 = vrot.lane.b32.xlu0 %v376, 28
      %v1632 = vpop.permute.xlu0 %1631
      %1633 = vrot.lane.b32.xlu0 %v377, 28
      %v1634 = vpop.permute.xlu0 %1633
      %1635 = vrot.lane.b32.xlu0 %v378, 28
      %v1636 = vpop.permute.xlu0 %1635
      %1637 = vrot.lane.b32.xlu0 %v379, 28
      %v1638 = vpop.permute.xlu0 %1637
      %1639 = vrot.lane.b32.xlu0 %v380, 28
      %v1640 = vpop.permute.xlu0 %1639
      %1641 = vrot.lane.b32.xlu0 %v381, 28
      %v1642 = vpop.permute.xlu0 %1641
      %1643 = vrot.lane.b32.xlu0 %v382, 28
      %v1644 = vpop.permute.xlu0 %1643
      %1645 = vrot.lane.b32.xlu0 %v383, 28
      %v1646 = vpop.permute.xlu0 %1645
      %1647 = vrot.lane.b32.xlu0 %v384, 28
      %v1648 = vpop.permute.xlu0 %1647
      %1649 = vrot.lane.b32.xlu0 %v385, 28
      %v1650 = vpop.permute.xlu0 %1649
      %1651 = vrot.lane.b32.xlu0 %v386, 28
      %v1652 = vpop.permute.xlu0 %1651
      %1653 = vrot.lane.b32.xlu0 %v387, 28
      %v1654 = vpop.permute.xlu0 %1653
      %1655 = vrot.lane.b32.xlu0 %v388, 28
      %v1656 = vpop.permute.xlu0 %1655
      %1657 = vrot.lane.b32.xlu0 %v389, 28
      %v1658 = vpop.permute.xlu0 %1657
      %1659 = vrot.lane.b32.xlu0 %v390, 28
      %v1660 = vpop.permute.xlu0 %1659
      %1661 = vrot.lane.b32.xlu0 %v391, 28
      %v1662 = vpop.permute.xlu0 %1661
      %1663 = vrot.lane.b32.xlu0 %v392, 28
      %v1664 = vpop.permute.xlu0 %1663
      %1665 = vrot.lane.b32.xlu0 %v393, 28
      %v1666 = vpop.permute.xlu0 %1665
      %1667 = vrot.lane.b32.xlu0 %v394, 28
      %v1668 = vpop.permute.xlu0 %1667
      %1669 = vrot.lane.b32.xlu0 %v395, 28
      %v1670 = vpop.permute.xlu0 %1669
      %1671 = vrot.lane.b32.xlu0 %v396, 28
      %v1672 = vpop.permute.xlu0 %1671
      %1673 = vrot.lane.b32.xlu0 %v397, 28
      %v1674 = vpop.permute.xlu0 %1673
      %1675 = vrot.lane.b32.xlu0 %v398, 28
      %v1676 = vpop.permute.xlu0 %1675
      %1677 = vrot.lane.b32.xlu0 %v399, 28
      %v1678 = vpop.permute.xlu0 %1677
      %1679 = vrot.lane.b32.xlu0 %v400, 28
      %v1680 = vpop.permute.xlu0 %1679
      %1681 = vrot.lane.b32.xlu0 %v401, 28
      %v1682 = vpop.permute.xlu0 %1681
      %1683 = vrot.lane.b32.xlu0 %v402, 28
      %v1684 = vpop.permute.xlu0 %1683
      %1685 = vrot.lane.b32.xlu0 %v403, 28
      %v1686 = vpop.permute.xlu0 %1685
      %1687 = vrot.lane.b32.xlu0 %v404, 28
      %v1688 = vpop.permute.xlu0 %1687
      %1689 = vrot.lane.b32.xlu0 %v405, 28
      %v1690 = vpop.permute.xlu0 %1689
      %1691 = vrot.lane.b32.xlu0 %v406, 28
      %v1692 = vpop.permute.xlu0 %1691
      %1693 = vrot.lane.b32.xlu0 %v407, 28
      %v1694 = vpop.permute.xlu0 %1693
      %1695 = vrot.lane.b32.xlu0 %v408, 28
      %v1696 = vpop.permute.xlu0 %1695
      %1697 = vrot.lane.b32.xlu0 %v409, 28
      %v1698 = vpop.permute.xlu0 %1697
      %1699 = vrot.lane.b32.xlu0 %v410, 28
      %v1700 = vpop.permute.xlu0 %1699
      %1701 = vrot.lane.b32.xlu0 %v411, 28
      %v1702 = vpop.permute.xlu0 %1701
      %1703 = vrot.lane.b32.xlu0 %v412, 28
      %v1704 = vpop.permute.xlu0 %1703
      %1705 = vrot.lane.b32.xlu0 %v413, 28
      %v1706 = vpop.permute.xlu0 %1705
      %vm1755 = vcmask 261346
      %1756 = vst.msk [vmem:[#allocation2 - $0x2] sm:$0xfc] %vm1755, %v1612
      %vm1757 = vcmask 261344
      %1758 = vst.msk [vmem:[#allocation2 + $0x6] sm:$0xff] %vm1757, %v1614
      %vm1759 = vcmask 255200
      %1760 = vst.msk [vmem:[#allocation2 + $0xe] sm:$0x3] %vm1759, %v1616
      %1761 = vst.msk [vmem:[#allocation2 + $0xe] sm:$0xfc] %vm1755, %v1618
      %1762 = vst.msk [vmem:[#allocation2 + $0x16] sm:$0xff] %vm1757, %v1620
      %1763 = vst.msk [vmem:[#allocation2 + $0x1e] sm:$0x3] %vm1759, %v1622
      %1764 = vst.msk [vmem:[#allocation2 + $0x1e] sm:$0xfc] %vm1755, %v1624
      %1765 = vst.msk [vmem:[#allocation2 + $0x26] sm:$0xff] %vm1757, %v1626
      %1766 = vst.msk [vmem:[#allocation2 + $0x2e] sm:$0x3] %vm1759, %v1628
      %1767 = vst.msk [vmem:[#allocation2 + $0x2e] sm:$0xfc] %vm1755, %v1630
      %1768 = vst.msk [vmem:[#allocation2 + $0x36] sm:$0xff] %vm1757, %v1632
      %1769 = vst.msk [vmem:[#allocation2 + $0x3e] sm:$0x3] %vm1759, %v1634
      %1770 = vst.msk [vmem:[#allocation2 + $0x3e] sm:$0xfc] %vm1755, %v1636
      %1771 = vst.msk [vmem:[#allocation2 + $0x46] sm:$0xff] %vm1757, %v1638
      %1772 = vst.msk [vmem:[#allocation2 + $0x4e] sm:$0x3] %vm1759, %v1640
      %1773 = vst.msk [vmem:[#allocation2 + $0x4e] sm:$0xfc] %vm1755, %v1642
      %1774 = vst.msk [vmem:[#allocation2 + $0x56] sm:$0xff] %vm1757, %v1644
      %1775 = vst.msk [vmem:[#allocation2 + $0x5e] sm:$0x3] %vm1759, %v1646
      %1776 = vst.msk [vmem:[#allocation2 + $0x5e] sm:$0xfc] %vm1755, %v1648
      %1777 = vst.msk [vmem:[#allocation2 + $0x66] sm:$0xff] %vm1757, %v1650
      %1778 = vst.msk [vmem:[#allocation2 + $0x6e] sm:$0x3] %vm1759, %v1652
      %1779 = vst.msk [vmem:[#allocation2 + $0x6e] sm:$0xfc] %vm1755, %v1654
      %1780 = vst.msk [vmem:[#allocation2 + $0x76] sm:$0xff] %vm1757, %v1656
      %1781 = vst.msk [vmem:[#allocation2 + $0x7e] sm:$0x3] %vm1759, %v1658
      %1782 = vst.msk [vmem:[#allocation2 + $0x7e] sm:$0xfc] %vm1755, %v1660
      %1783 = vst.msk [vmem:[#allocation2 + $0x86] sm:$0xff] %vm1757, %v1662
      %1784 = vst.msk [vmem:[#allocation2 + $0x8e] sm:$0x3] %vm1759, %v1664
      %1785 = vst.msk [vmem:[#allocation2 + $0x8e] sm:$0xfc] %vm1755, %v1666
      %1786 = vst.msk [vmem:[#allocation2 + $0x96] sm:$0xff] %vm1757, %v1668
      %1787 = vst.msk [vmem:[#allocation2 + $0x9e] sm:$0x3] %vm1759, %v1670
      %1788 = vst.msk [vmem:[#allocation2 + $0x9e] sm:$0xfc] %vm1755, %v1672
      %1789 = vst.msk [vmem:[#allocation2 + $0xa6] sm:$0xff] %vm1757, %v1674
      %1790 = vst.msk [vmem:[#allocation2 + $0xae] sm:$0x3] %vm1759, %v1676
      %1791 = vst.msk [vmem:[#allocation2 + $0xae] sm:$0xfc] %vm1755, %v1678
      %1792 = vst.msk [vmem:[#allocation2 + $0xb6] sm:$0xff] %vm1757, %v1680
      %1793 = vst.msk [vmem:[#allocation2 + $0xbe] sm:$0x3] %vm1759, %v1682
      %1794 = vst.msk [vmem:[#allocation2 + $0xbe] sm:$0xfc] %vm1755, %v1684
      %1795 = vst.msk [vmem:[#allocation2 + $0xc6] sm:$0xff] %vm1757, %v1686
      %1796 = vst.msk [vmem:[#allocation2 + $0xce] sm:$0x3] %vm1759, %v1688
      %1797 = vst.msk [vmem:[#allocation2 + $0xce] sm:$0xfc] %vm1755, %v1690
      %1798 = vst.msk [vmem:[#allocation2 + $0xd6] sm:$0xff] %vm1757, %v1692
      %1799 = vst.msk [vmem:[#allocation2 + $0xde] sm:$0x3] %vm1759, %v1694
      %1800 = vst.msk [vmem:[#allocation2 + $0xde] sm:$0xfc] %vm1755, %v1696
      %1801 = vst.msk [vmem:[#allocation2 + $0xe6] sm:$0xff] %vm1757, %v1698
      %1802 = vst.msk [vmem:[#allocation2 + $0xee] sm:$0x3] %vm1759, %v1700
      %1803 = vst.msk [vmem:[#allocation2 + $0xee] sm:$0xfc] %vm1755, %v1702
      %1804 = vst.msk [vmem:[#allocation2 + $0xf6] sm:$0xff] %vm1757, %v1704
      %1805 = vst.msk [vmem:[#allocation2 + $0xfe] sm:$0x3] %vm1759, %v1706
      %1806 = vrot.lane.b32.xlu0 %v366, 32
      %v1807 = vpop.permute.xlu0 %1806
      %1808 = vrot.lane.b32.xlu0 %v367, 32
      %v1809 = vpop.permute.xlu0 %1808
      %1810 = vrot.lane.b32.xlu0 %v368, 32
      %v1811 = vpop.permute.xlu0 %1810
      %1812 = vrot.lane.b32.xlu0 %v369, 32
      %v1813 = vpop.permute.xlu0 %1812
      %1814 = vrot.lane.b32.xlu0 %v370, 32
      %v1815 = vpop.permute.xlu0 %1814
      %1816 = vrot.lane.b32.xlu0 %v371, 32
      %v1817 = vpop.permute.xlu0 %1816
      %1818 = vrot.lane.b32.xlu0 %v372, 32
      %v1819 = vpop.permute.xlu0 %1818
      %1820 = vrot.lane.b32.xlu0 %v373, 32
      %v1821 = vpop.permute.xlu0 %1820
      %1822 = vrot.lane.b32.xlu0 %v374, 32
      %v1823 = vpop.permute.xlu0 %1822
      %1824 = vrot.lane.b32.xlu0 %v375, 32
      %v1825 = vpop.permute.xlu0 %1824
      %1826 = vrot.lane.b32.xlu0 %v376, 32
      %v1827 = vpop.permute.xlu0 %1826
      %1828 = vrot.lane.b32.xlu0 %v377, 32
      %v1829 = vpop.permute.xlu0 %1828
      %1830 = vrot.lane.b32.xlu0 %v378, 32
      %v1831 = vpop.permute.xlu0 %1830
      %1832 = vrot.lane.b32.xlu0 %v379, 32
      %v1833 = vpop.permute.xlu0 %1832
      %1834 = vrot.lane.b32.xlu0 %v380, 32
      %v1835 = vpop.permute.xlu0 %1834
      %1836 = vrot.lane.b32.xlu0 %v381, 32
      %v1837 = vpop.permute.xlu0 %1836
      %1838 = vrot.lane.b32.xlu0 %v382, 32
      %v1839 = vpop.permute.xlu0 %1838
      %1840 = vrot.lane.b32.xlu0 %v383, 32
      %v1841 = vpop.permute.xlu0 %1840
      %1842 = vrot.lane.b32.xlu0 %v384, 32
      %v1843 = vpop.permute.xlu0 %1842
      %1844 = vrot.lane.b32.xlu0 %v385, 32
      %v1845 = vpop.permute.xlu0 %1844
      %1846 = vrot.lane.b32.xlu0 %v386, 32
      %v1847 = vpop.permute.xlu0 %1846
      %1848 = vrot.lane.b32.xlu0 %v387, 32
      %v1849 = vpop.permute.xlu0 %1848
      %1850 = vrot.lane.b32.xlu0 %v388, 32
      %v1851 = vpop.permute.xlu0 %1850
      %1852 = vrot.lane.b32.xlu0 %v389, 32
      %v1853 = vpop.permute.xlu0 %1852
      %1854 = vrot.lane.b32.xlu0 %v390, 32
      %v1855 = vpop.permute.xlu0 %1854
      %1856 = vrot.lane.b32.xlu0 %v391, 32
      %v1857 = vpop.permute.xlu0 %1856
      %1858 = vrot.lane.b32.xlu0 %v392, 32
      %v1859 = vpop.permute.xlu0 %1858
      %1860 = vrot.lane.b32.xlu0 %v393, 32
      %v1861 = vpop.permute.xlu0 %1860
      %1862 = vrot.lane.b32.xlu0 %v394, 32
      %v1863 = vpop.permute.xlu0 %1862
      %1864 = vrot.lane.b32.xlu0 %v395, 32
      %v1865 = vpop.permute.xlu0 %1864
      %1866 = vrot.lane.b32.xlu0 %v396, 32
      %v1867 = vpop.permute.xlu0 %1866
      %1868 = vrot.lane.b32.xlu0 %v397, 32
      %v1869 = vpop.permute.xlu0 %1868
      %1870 = vrot.lane.b32.xlu0 %v398, 32
      %v1871 = vpop.permute.xlu0 %1870
      %1872 = vrot.lane.b32.xlu0 %v399, 32
      %v1873 = vpop.permute.xlu0 %1872
      %1874 = vrot.lane.b32.xlu0 %v400, 32
      %v1875 = vpop.permute.xlu0 %1874
      %1876 = vrot.lane.b32.xlu0 %v401, 32
      %v1877 = vpop.permute.xlu0 %1876
      %1878 = vrot.lane.b32.xlu0 %v402, 32
      %v1879 = vpop.permute.xlu0 %1878
      %1880 = vrot.lane.b32.xlu0 %v403, 32
      %v1881 = vpop.permute.xlu0 %1880
      %1882 = vrot.lane.b32.xlu0 %v404, 32
      %v1883 = vpop.permute.xlu0 %1882
      %1884 = vrot.lane.b32.xlu0 %v405, 32
      %v1885 = vpop.permute.xlu0 %1884
      %1886 = vrot.lane.b32.xlu0 %v406, 32
      %v1887 = vpop.permute.xlu0 %1886
      %1888 = vrot.lane.b32.xlu0 %v407, 32
      %v1889 = vpop.permute.xlu0 %1888
      %1890 = vrot.lane.b32.xlu0 %v408, 32
      %v1891 = vpop.permute.xlu0 %1890
      %1892 = vrot.lane.b32.xlu0 %v409, 32
      %v1893 = vpop.permute.xlu0 %1892
      %1894 = vrot.lane.b32.xlu0 %v410, 32
      %v1895 = vpop.permute.xlu0 %1894
      %1896 = vrot.lane.b32.xlu0 %v411, 32
      %v1897 = vpop.permute.xlu0 %1896
      %1898 = vrot.lane.b32.xlu0 %v412, 32
      %v1899 = vpop.permute.xlu0 %1898
      %1900 = vrot.lane.b32.xlu0 %v413, 32
      %v1901 = vpop.permute.xlu0 %1900
      %vm1950 = vcmask 294147
      %1951 = vst.msk [vmem:[#allocation2 - $0x3] sm:$0xf8] %vm1950, %v1807
      %vm1952 = vcmask 294144
      %1953 = vst.msk [vmem:[#allocation2 + $0x5] sm:$0xff] %vm1952, %v1809
      %vm1954 = vcmask 289024
      %1955 = vst.msk [vmem:[#allocation2 + $0xd] sm:$0x7] %vm1954, %v1811
      %1956 = vst.msk [vmem:[#allocation2 + $0xd] sm:$0xf8] %vm1950, %v1813
      %1957 = vst.msk [vmem:[#allocation2 + $0x15] sm:$0xff] %vm1952, %v1815
      %1958 = vst.msk [vmem:[#allocation2 + $0x1d] sm:$0x7] %vm1954, %v1817
      %1959 = vst.msk [vmem:[#allocation2 + $0x1d] sm:$0xf8] %vm1950, %v1819
      %1960 = vst.msk [vmem:[#allocation2 + $0x25] sm:$0xff] %vm1952, %v1821
      %1961 = vst.msk [vmem:[#allocation2 + $0x2d] sm:$0x7] %vm1954, %v1823
      %1962 = vst.msk [vmem:[#allocation2 + $0x2d] sm:$0xf8] %vm1950, %v1825
      %1963 = vst.msk [vmem:[#allocation2 + $0x35] sm:$0xff] %vm1952, %v1827
      %1964 = vst.msk [vmem:[#allocation2 + $0x3d] sm:$0x7] %vm1954, %v1829
      %1965 = vst.msk [vmem:[#allocation2 + $0x3d] sm:$0xf8] %vm1950, %v1831
      %1966 = vst.msk [vmem:[#allocation2 + $0x45] sm:$0xff] %vm1952, %v1833
      %1967 = vst.msk [vmem:[#allocation2 + $0x4d] sm:$0x7] %vm1954, %v1835
      %1968 = vst.msk [vmem:[#allocation2 + $0x4d] sm:$0xf8] %vm1950, %v1837
      %1969 = vst.msk [vmem:[#allocation2 + $0x55] sm:$0xff] %vm1952, %v1839
      %1970 = vst.msk [vmem:[#allocation2 + $0x5d] sm:$0x7] %vm1954, %v1841
      %1971 = vst.msk [vmem:[#allocation2 + $0x5d] sm:$0xf8] %vm1950, %v1843
      %1972 = vst.msk [vmem:[#allocation2 + $0x65] sm:$0xff] %vm1952, %v1845
      %1973 = vst.msk [vmem:[#allocation2 + $0x6d] sm:$0x7] %vm1954, %v1847
      %1974 = vst.msk [vmem:[#allocation2 + $0x6d] sm:$0xf8] %vm1950, %v1849
      %1975 = vst.msk [vmem:[#allocation2 + $0x75] sm:$0xff] %vm1952, %v1851
      %1976 = vst.msk [vmem:[#allocation2 + $0x7d] sm:$0x7] %vm1954, %v1853
      %1977 = vst.msk [vmem:[#allocation2 + $0x7d] sm:$0xf8] %vm1950, %v1855
      %1978 = vst.msk [vmem:[#allocation2 + $0x85] sm:$0xff] %vm1952, %v1857
      %1979 = vst.msk [vmem:[#allocation2 + $0x8d] sm:$0x7] %vm1954, %v1859
      %1980 = vst.msk [vmem:[#allocation2 + $0x8d] sm:$0xf8] %vm1950, %v1861
      %1981 = vst.msk [vmem:[#allocation2 + $0x95] sm:$0xff] %vm1952, %v1863
      %1982 = vst.msk [vmem:[#allocation2 + $0x9d] sm:$0x7] %vm1954, %v1865
      %1983 = vst.msk [vmem:[#allocation2 + $0x9d] sm:$0xf8] %vm1950, %v1867
      %1984 = vst.msk [vmem:[#allocation2 + $0xa5] sm:$0xff] %vm1952, %v1869
      %1985 = vst.msk [vmem:[#allocation2 + $0xad] sm:$0x7] %vm1954, %v1871
      %1986 = vst.msk [vmem:[#allocation2 + $0xad] sm:$0xf8] %vm1950, %v1873
      %1987 = vst.msk [vmem:[#allocation2 + $0xb5] sm:$0xff] %vm1952, %v1875
      %1988 = vst.msk [vmem:[#allocation2 + $0xbd] sm:$0x7] %vm1954, %v1877
      %1989 = vst.msk [vmem:[#allocation2 + $0xbd] sm:$0xf8] %vm1950, %v1879
      %1990 = vst.msk [vmem:[#allocation2 + $0xc5] sm:$0xff] %vm1952, %v1881
      %1991 = vst.msk [vmem:[#allocation2 + $0xcd] sm:$0x7] %vm1954, %v1883
      %1992 = vst.msk [vmem:[#allocation2 + $0xcd] sm:$0xf8] %vm1950, %v1885
      %1993 = vst.msk [vmem:[#allocation2 + $0xd5] sm:$0xff] %vm1952, %v1887
      %1994 = vst.msk [vmem:[#allocation2 + $0xdd] sm:$0x7] %vm1954, %v1889
      %1995 = vst.msk [vmem:[#allocation2 + $0xdd] sm:$0xf8] %vm1950, %v1891
      %1996 = vst.msk [vmem:[#allocation2 + $0xe5] sm:$0xff] %vm1952, %v1893
      %1997 = vst.msk [vmem:[#allocation2 + $0xed] sm:$0x7] %vm1954, %v1895
      %1998 = vst.msk [vmem:[#allocation2 + $0xed] sm:$0xf8] %vm1950, %v1897
      %1999 = vst.msk [vmem:[#allocation2 + $0xf5] sm:$0xff] %vm1952, %v1899
      %2000 = vst.msk [vmem:[#allocation2 + $0xfd] sm:$0x7] %vm1954, %v1901
      %2001 = vrot.lane.b32.xlu0 %v366, 36
      %v2002 = vpop.permute.xlu0 %2001
      %2003 = vrot.lane.b32.xlu0 %v367, 36
      %v2004 = vpop.permute.xlu0 %2003
      %2005 = vrot.lane.b32.xlu0 %v368, 36
      %v2006 = vpop.permute.xlu0 %2005
      %2007 = vrot.lane.b32.xlu0 %v369, 36
      %v2008 = vpop.permute.xlu0 %2007
      %2009 = vrot.lane.b32.xlu0 %v370, 36
      %v2010 = vpop.permute.xlu0 %2009
      %2011 = vrot.lane.b32.xlu0 %v371, 36
      %v2012 = vpop.permute.xlu0 %2011
      %2013 = vrot.lane.b32.xlu0 %v372, 36
      %v2014 = vpop.permute.xlu0 %2013
      %2015 = vrot.lane.b32.xlu0 %v373, 36
      %v2016 = vpop.permute.xlu0 %2015
      %2017 = vrot.lane.b32.xlu0 %v374, 36
      %v2018 = vpop.permute.xlu0 %2017
      %2019 = vrot.lane.b32.xlu0 %v375, 36
      %v2020 = vpop.permute.xlu0 %2019
      %2021 = vrot.lane.b32.xlu0 %v376, 36
      %v2022 = vpop.permute.xlu0 %2021
      %2023 = vrot.lane.b32.xlu0 %v377, 36
      %v2024 = vpop.permute.xlu0 %2023
      %2025 = vrot.lane.b32.xlu0 %v378, 36
      %v2026 = vpop.permute.xlu0 %2025
      %2027 = vrot.lane.b32.xlu0 %v379, 36
      %v2028 = vpop.permute.xlu0 %2027
      %2029 = vrot.lane.b32.xlu0 %v380, 36
      %v2030 = vpop.permute.xlu0 %2029
      %2031 = vrot.lane.b32.xlu0 %v381, 36
      %v2032 = vpop.permute.xlu0 %2031
      %2033 = vrot.lane.b32.xlu0 %v382, 36
      %v2034 = vpop.permute.xlu0 %2033
      %2035 = vrot.lane.b32.xlu0 %v383, 36
      %v2036 = vpop.permute.xlu0 %2035
      %2037 = vrot.lane.b32.xlu0 %v384, 36
      %v2038 = vpop.permute.xlu0 %2037
      %2039 = vrot.lane.b32.xlu0 %v385, 36
      %v2040 = vpop.permute.xlu0 %2039
      %2041 = vrot.lane.b32.xlu0 %v386, 36
      %v2042 = vpop.permute.xlu0 %2041
      %2043 = vrot.lane.b32.xlu0 %v387, 36
      %v2044 = vpop.permute.xlu0 %2043
      %2045 = vrot.lane.b32.xlu0 %v388, 36
      %v2046 = vpop.permute.xlu0 %2045
      %2047 = vrot.lane.b32.xlu0 %v389, 36
      %v2048 = vpop.permute.xlu0 %2047
      %2049 = vrot.lane.b32.xlu0 %v390, 36
      %v2050 = vpop.permute.xlu0 %2049
      %2051 = vrot.lane.b32.xlu0 %v391, 36
      %v2052 = vpop.permute.xlu0 %2051
      %2053 = vrot.lane.b32.xlu0 %v392, 36
      %v2054 = vpop.permute.xlu0 %2053
      %2055 = vrot.lane.b32.xlu0 %v393, 36
      %v2056 = vpop.permute.xlu0 %2055
      %2057 = vrot.lane.b32.xlu0 %v394, 36
      %v2058 = vpop.permute.xlu0 %2057
      %2059 = vrot.lane.b32.xlu0 %v395, 36
      %v2060 = vpop.permute.xlu0 %2059
      %2061 = vrot.lane.b32.xlu0 %v396, 36
      %v2062 = vpop.permute.xlu0 %2061
      %2063 = vrot.lane.b32.xlu0 %v397, 36
      %v2064 = vpop.permute.xlu0 %2063
      %2065 = vrot.lane.b32.xlu0 %v398, 36
      %v2066 = vpop.permute.xlu0 %2065
      %2067 = vrot.lane.b32.xlu0 %v399, 36
      %v2068 = vpop.permute.xlu0 %2067
      %2069 = vrot.lane.b32.xlu0 %v400, 36
      %v2070 = vpop.permute.xlu0 %2069
      %2071 = vrot.lane.b32.xlu0 %v401, 36
      %v2072 = vpop.permute.xlu0 %2071
      %2073 = vrot.lane.b32.xlu0 %v402, 36
      %v2074 = vpop.permute.xlu0 %2073
      %2075 = vrot.lane.b32.xlu0 %v403, 36
      %v2076 = vpop.permute.xlu0 %2075
      %2077 = vrot.lane.b32.xlu0 %v404, 36
      %v2078 = vpop.permute.xlu0 %2077
      %2079 = vrot.lane.b32.xlu0 %v405, 36
      %v2080 = vpop.permute.xlu0 %2079
      %2081 = vrot.lane.b32.xlu0 %v406, 36
      %v2082 = vpop.permute.xlu0 %2081
      %2083 = vrot.lane.b32.xlu0 %v407, 36
      %v2084 = vpop.permute.xlu0 %2083
      %2085 = vrot.lane.b32.xlu0 %v408, 36
      %v2086 = vpop.permute.xlu0 %2085
      %2087 = vrot.lane.b32.xlu0 %v409, 36
      %v2088 = vpop.permute.xlu0 %2087
      %2089 = vrot.lane.b32.xlu0 %v410, 36
      %v2090 = vpop.permute.xlu0 %2089
      %2091 = vrot.lane.b32.xlu0 %v411, 36
      %v2092 = vpop.permute.xlu0 %2091
      %2093 = vrot.lane.b32.xlu0 %v412, 36
      %v2094 = vpop.permute.xlu0 %2093
      %2095 = vrot.lane.b32.xlu0 %v413, 36
      %v2096 = vpop.permute.xlu0 %2095
      %vm2145 = vcmask 326948
      %2146 = vst.msk [vmem:[#allocation2 - $0x4] sm:$0xf0] %vm2145, %v2002
      %vm2147 = vcmask 326944
      %2148 = vst.msk [vmem:[#allocation2 + $0x4] sm:$0xff] %vm2147, %v2004
      %vm2149 = vcmask 322848
      %2150 = vst.msk [vmem:[#allocation2 + $0xc] sm:$0xf] %vm2149, %v2006
      %2151 = vst.msk [vmem:[#allocation2 + $0xc] sm:$0xf0] %vm2145, %v2008
      %2152 = vst.msk [vmem:[#allocation2 + $0x14] sm:$0xff] %vm2147, %v2010
      %2153 = vst.msk [vmem:[#allocation2 + $0x1c] sm:$0xf] %vm2149, %v2012
      %2154 = vst.msk [vmem:[#allocation2 + $0x1c] sm:$0xf0] %vm2145, %v2014
      %2155 = vst.msk [vmem:[#allocation2 + $0x24] sm:$0xff] %vm2147, %v2016
      %2156 = vst.msk [vmem:[#allocation2 + $0x2c] sm:$0xf] %vm2149, %v2018
      %2157 = vst.msk [vmem:[#allocation2 + $0x2c] sm:$0xf0] %vm2145, %v2020
      %2158 = vst.msk [vmem:[#allocation2 + $0x34] sm:$0xff] %vm2147, %v2022
      %2159 = vst.msk [vmem:[#allocation2 + $0x3c] sm:$0xf] %vm2149, %v2024
      %2160 = vst.msk [vmem:[#allocation2 + $0x3c] sm:$0xf0] %vm2145, %v2026
      %2161 = vst.msk [vmem:[#allocation2 + $0x44] sm:$0xff] %vm2147, %v2028
      %2162 = vst.msk [vmem:[#allocation2 + $0x4c] sm:$0xf] %vm2149, %v2030
      %2163 = vst.msk [vmem:[#allocation2 + $0x4c] sm:$0xf0] %vm2145, %v2032
      %2164 = vst.msk [vmem:[#allocation2 + $0x54] sm:$0xff] %vm2147, %v2034
      %2165 = vst.msk [vmem:[#allocation2 + $0x5c] sm:$0xf] %vm2149, %v2036
      %2166 = vst.msk [vmem:[#allocation2 + $0x5c] sm:$0xf0] %vm2145, %v2038
      %2167 = vst.msk [vmem:[#allocation2 + $0x64] sm:$0xff] %vm2147, %v2040
      %2168 = vst.msk [vmem:[#allocation2 + $0x6c] sm:$0xf] %vm2149, %v2042
      %2169 = vst.msk [vmem:[#allocation2 + $0x6c] sm:$0xf0] %vm2145, %v2044
      %2170 = vst.msk [vmem:[#allocation2 + $0x74] sm:$0xff] %vm2147, %v2046
      %2171 = vst.msk [vmem:[#allocation2 + $0x7c] sm:$0xf] %vm2149, %v2048
      %2172 = vst.msk [vmem:[#allocation2 + $0x7c] sm:$0xf0] %vm2145, %v2050
      %2173 = vst.msk [vmem:[#allocation2 + $0x84] sm:$0xff] %vm2147, %v2052
      %2174 = vst.msk [vmem:[#allocation2 + $0x8c] sm:$0xf] %vm2149, %v2054
      %2175 = vst.msk [vmem:[#allocation2 + $0x8c] sm:$0xf0] %vm2145, %v2056
      %2176 = vst.msk [vmem:[#allocation2 + $0x94] sm:$0xff] %vm2147, %v2058
      %2177 = vst.msk [vmem:[#allocation2 + $0x9c] sm:$0xf] %vm2149, %v2060
      %2178 = vst.msk [vmem:[#allocation2 + $0x9c] sm:$0xf0] %vm2145, %v2062
      %2179 = vst.msk [vmem:[#allocation2 + $0xa4] sm:$0xff] %vm2147, %v2064
      %2180 = vst.msk [vmem:[#allocation2 + $0xac] sm:$0xf] %vm2149, %v2066
      %2181 = vst.msk [vmem:[#allocation2 + $0xac] sm:$0xf0] %vm2145, %v2068
      %2182 = vst.msk [vmem:[#allocation2 + $0xb4] sm:$0xff] %vm2147, %v2070
      %2183 = vst.msk [vmem:[#allocation2 + $0xbc] sm:$0xf] %vm2149, %v2072
      %2184 = vst.msk [vmem:[#allocation2 + $0xbc] sm:$0xf0] %vm2145, %v2074
      %2185 = vst.msk [vmem:[#allocation2 + $0xc4] sm:$0xff] %vm2147, %v2076
      %2186 = vst.msk [vmem:[#allocation2 + $0xcc] sm:$0xf] %vm2149, %v2078
      %2187 = vst.msk [vmem:[#allocation2 + $0xcc] sm:$0xf0] %vm2145, %v2080
      %2188 = vst.msk [vmem:[#allocation2 + $0xd4] sm:$0xff] %vm2147, %v2082
      %2189 = vst.msk [vmem:[#allocation2 + $0xdc] sm:$0xf] %vm2149, %v2084
      %2190 = vst.msk [vmem:[#allocation2 + $0xdc] sm:$0xf0] %vm2145, %v2086
      %2191 = vst.msk [vmem:[#allocation2 + $0xe4] sm:$0xff] %vm2147, %v2088
      %2192 = vst.msk [vmem:[#allocation2 + $0xec] sm:$0xf] %vm2149, %v2090
      %2193 = vst.msk [vmem:[#allocation2 + $0xec] sm:$0xf0] %vm2145, %v2092
      %2194 = vst.msk [vmem:[#allocation2 + $0xf4] sm:$0xff] %vm2147, %v2094
      %2195 = vst.msk [vmem:[#allocation2 + $0xfc] sm:$0xf] %vm2149, %v2096
      %2198 = vrot.lane.b32.xlu0 %v369, 40
      %v2199 = vpop.permute.xlu0 %2198
      %2200 = vrot.lane.b32.xlu0 %v370, 40
      %v2201 = vpop.permute.xlu0 %2200
      %2202 = vrot.lane.b32.xlu0 %v372, 40
      %v2203 = vpop.permute.xlu0 %2202
      %2204 = vrot.lane.b32.xlu0 %v373, 40
      %v2205 = vpop.permute.xlu0 %2204
      %2206 = vrot.lane.b32.xlu0 %v375, 40
      %v2207 = vpop.permute.xlu0 %2206
      %2208 = vrot.lane.b32.xlu0 %v376, 40
      %v2209 = vpop.permute.xlu0 %2208
      %2210 = vrot.lane.b32.xlu0 %v378, 40
      %v2211 = vpop.permute.xlu0 %2210
      %2212 = vrot.lane.b32.xlu0 %v379, 40
      %v2213 = vpop.permute.xlu0 %2212
      %2214 = vrot.lane.b32.xlu0 %v381, 40
      %v2215 = vpop.permute.xlu0 %2214
      %2216 = vrot.lane.b32.xlu0 %v382, 40
      %v2217 = vpop.permute.xlu0 %2216
      %2218 = vrot.lane.b32.xlu0 %v384, 40
      %v2219 = vpop.permute.xlu0 %2218
      %2220 = vrot.lane.b32.xlu0 %v385, 40
      %v2221 = vpop.permute.xlu0 %2220
      %2222 = vrot.lane.b32.xlu0 %v387, 40
      %v2223 = vpop.permute.xlu0 %2222
      %2224 = vrot.lane.b32.xlu0 %v388, 40
      %v2225 = vpop.permute.xlu0 %2224
      %2226 = vrot.lane.b32.xlu0 %v390, 40
      %v2227 = vpop.permute.xlu0 %2226
      %2228 = vrot.lane.b32.xlu0 %v391, 40
      %v2229 = vpop.permute.xlu0 %2228
      %2230 = vrot.lane.b32.xlu0 %v393, 40
      %v2231 = vpop.permute.xlu0 %2230
      %2232 = vrot.lane.b32.xlu0 %v394, 40
      %v2233 = vpop.permute.xlu0 %2232
      %2234 = vrot.lane.b32.xlu0 %v396, 40
      %v2235 = vpop.permute.xlu0 %2234
      %2236 = vrot.lane.b32.xlu0 %v397, 40
      %v2237 = vpop.permute.xlu0 %2236
      %2238 = vrot.lane.b32.xlu0 %v399, 40
      %v2239 = vpop.permute.xlu0 %2238
      %2240 = vrot.lane.b32.xlu0 %v400, 40
      %v2241 = vpop.permute.xlu0 %2240
      %2242 = vrot.lane.b32.xlu0 %v402, 40
      %v2243 = vpop.permute.xlu0 %2242
      %2244 = vrot.lane.b32.xlu0 %v403, 40
      %v2245 = vpop.permute.xlu0 %2244
      %2246 = vrot.lane.b32.xlu0 %v405, 40
      %v2247 = vpop.permute.xlu0 %2246
      %2248 = vrot.lane.b32.xlu0 %v406, 40
      %v2249 = vpop.permute.xlu0 %2248
      %2250 = vrot.lane.b32.xlu0 %v408, 40
      %v2251 = vpop.permute.xlu0 %2250
      %2252 = vrot.lane.b32.xlu0 %v409, 40
      %v2253 = vpop.permute.xlu0 %2252
      %2254 = vrot.lane.b32.xlu0 %v411, 40
      %v2255 = vpop.permute.xlu0 %2254
      %2256 = vrot.lane.b32.xlu0 %v412, 40
      %v2257 = vpop.permute.xlu0 %2256
      %2258 = vrot.lane.b32.xlu0 %v414, 40
      %v2259 = vpop.permute.xlu0 %2258
      %2260 = vrot.lane.b32.xlu0 %v415, 40
      %v2261 = vpop.permute.xlu0 %2260
      %vm2294 = vcmask 359744
      %2295 = vst.msk [vmem:[#allocation2] sm:$0xff] %vm2294, %v2199
      %2296 = vst.msk [vmem:[#allocation2 + $0x8] sm:$0xff] %vm2294, %v2201
      %2297 = vst.msk [vmem:[#allocation2 + $0x10] sm:$0xff] %vm2294, %v2203
      %2298 = vst.msk [vmem:[#allocation2 + $0x18] sm:$0xff] %vm2294, %v2205
      %2299 = vst.msk [vmem:[#allocation2 + $0x20] sm:$0xff] %vm2294, %v2207
      %2300 = vst.msk [vmem:[#allocation2 + $0x28] sm:$0xff] %vm2294, %v2209
      %2301 = vst.msk [vmem:[#allocation2 + $0x30] sm:$0xff] %vm2294, %v2211
      %2302 = vst.msk [vmem:[#allocation2 + $0x38] sm:$0xff] %vm2294, %v2213
      %2303 = vst.msk [vmem:[#allocation2 + $0x40] sm:$0xff] %vm2294, %v2215
      %2304 = vst.msk [vmem:[#allocation2 + $0x48] sm:$0xff] %vm2294, %v2217
      %2305 = vst.msk [vmem:[#allocation2 + $0x50] sm:$0xff] %vm2294, %v2219
      %2306 = vst.msk [vmem:[#allocation2 + $0x58] sm:$0xff] %vm2294, %v2221
      %2307 = vst.msk [vmem:[#allocation2 + $0x60] sm:$0xff] %vm2294, %v2223
      %2308 = vst.msk [vmem:[#allocation2 + $0x68] sm:$0xff] %vm2294, %v2225
      %2309 = vst.msk [vmem:[#allocation2 + $0x70] sm:$0xff] %vm2294, %v2227
      %2310 = vst.msk [vmem:[#allocation2 + $0x78] sm:$0xff] %vm2294, %v2229
      %2311 = vst.msk [vmem:[#allocation2 + $0x80] sm:$0xff] %vm2294, %v2231
      %2312 = vst.msk [vmem:[#allocation2 + $0x88] sm:$0xff] %vm2294, %v2233
      %2313 = vst.msk [vmem:[#allocation2 + $0x90] sm:$0xff] %vm2294, %v2235
      %2314 = vst.msk [vmem:[#allocation2 + $0x98] sm:$0xff] %vm2294, %v2237
      %2315 = vst.msk [vmem:[#allocation2 + $0xa0] sm:$0xff] %vm2294, %v2239
      %2316 = vst.msk [vmem:[#allocation2 + $0xa8] sm:$0xff] %vm2294, %v2241
      %2317 = vst.msk [vmem:[#allocation2 + $0xb0] sm:$0xff] %vm2294, %v2243
      %2318 = vst.msk [vmem:[#allocation2 + $0xb8] sm:$0xff] %vm2294, %v2245
      %2319 = vst.msk [vmem:[#allocation2 + $0xc0] sm:$0xff] %vm2294, %v2247
      %2320 = vst.msk [vmem:[#allocation2 + $0xc8] sm:$0xff] %vm2294, %v2249
      %2321 = vst.msk [vmem:[#allocation2 + $0xd0] sm:$0xff] %vm2294, %v2251
      %2322 = vst.msk [vmem:[#allocation2 + $0xd8] sm:$0xff] %vm2294, %v2253
      %2323 = vst.msk [vmem:[#allocation2 + $0xe0] sm:$0xff] %vm2294, %v2255
      %2324 = vst.msk [vmem:[#allocation2 + $0xe8] sm:$0xff] %vm2294, %v2257
      %2325 = vst.msk [vmem:[#allocation2 + $0xf0] sm:$0xff] %vm2294, %v2259
      %2326 = vst.msk [vmem:[#allocation2 + $0xf8] sm:$0xff] %vm2294, %v2261
      %2328 = vrot.lane.b32.xlu0 %v369, 44
      %v2329 = vpop.permute.xlu0 %2328
      %2330 = vrot.lane.b32.xlu0 %v370, 44
      %v2331 = vpop.permute.xlu0 %2330
      %2332 = vrot.lane.b32.xlu0 %v371, 44
      %v2333 = vpop.permute.xlu0 %2332
      %2334 = vrot.lane.b32.xlu0 %v372, 44
      %v2335 = vpop.permute.xlu0 %2334
      %2336 = vrot.lane.b32.xlu0 %v373, 44
      %v2337 = vpop.permute.xlu0 %2336
      %2338 = vrot.lane.b32.xlu0 %v374, 44
      %v2339 = vpop.permute.xlu0 %2338
      %2340 = vrot.lane.b32.xlu0 %v375, 44
      %v2341 = vpop.permute.xlu0 %2340
      %2342 = vrot.lane.b32.xlu0 %v376, 44
      %v2343 = vpop.permute.xlu0 %2342
      %2344 = vrot.lane.b32.xlu0 %v377, 44
      %v2345 = vpop.permute.xlu0 %2344
      %2346 = vrot.lane.b32.xlu0 %v378, 44
      %v2347 = vpop.permute.xlu0 %2346
      %2348 = vrot.lane.b32.xlu0 %v379, 44
      %v2349 = vpop.permute.xlu0 %2348
      %2350 = vrot.lane.b32.xlu0 %v380, 44
      %v2351 = vpop.permute.xlu0 %2350
      %2352 = vrot.lane.b32.xlu0 %v381, 44
      %v2353 = vpop.permute.xlu0 %2352
      %2354 = vrot.lane.b32.xlu0 %v382, 44
      %v2355 = vpop.permute.xlu0 %2354
      %2356 = vrot.lane.b32.xlu0 %v383, 44
      %v2357 = vpop.permute.xlu0 %2356
      %2358 = vrot.lane.b32.xlu0 %v384, 44
      %v2359 = vpop.permute.xlu0 %2358
      %2360 = vrot.lane.b32.xlu0 %v385, 44
      %v2361 = vpop.permute.xlu0 %2360
      %2362 = vrot.lane.b32.xlu0 %v386, 44
      %v2363 = vpop.permute.xlu0 %2362
      %2364 = vrot.lane.b32.xlu0 %v387, 44
      %v2365 = vpop.permute.xlu0 %2364
      %2366 = vrot.lane.b32.xlu0 %v388, 44
      %v2367 = vpop.permute.xlu0 %2366
      %2368 = vrot.lane.b32.xlu0 %v389, 44
      %v2369 = vpop.permute.xlu0 %2368
      %2370 = vrot.lane.b32.xlu0 %v390, 44
      %v2371 = vpop.permute.xlu0 %2370
      %2372 = vrot.lane.b32.xlu0 %v391, 44
      %v2373 = vpop.permute.xlu0 %2372
      %2374 = vrot.lane.b32.xlu0 %v392, 44
      %v2375 = vpop.permute.xlu0 %2374
      %2376 = vrot.lane.b32.xlu0 %v393, 44
      %v2377 = vpop.permute.xlu0 %2376
      %2378 = vrot.lane.b32.xlu0 %v394, 44
      %v2379 = vpop.permute.xlu0 %2378
      %2380 = vrot.lane.b32.xlu0 %v395, 44
      %v2381 = vpop.permute.xlu0 %2380
      %2382 = vrot.lane.b32.xlu0 %v396, 44
      %v2383 = vpop.permute.xlu0 %2382
      %2384 = vrot.lane.b32.xlu0 %v397, 44
      %v2385 = vpop.permute.xlu0 %2384
      %2386 = vrot.lane.b32.xlu0 %v398, 44
      %v2387 = vpop.permute.xlu0 %2386
      %2388 = vrot.lane.b32.xlu0 %v399, 44
      %v2389 = vpop.permute.xlu0 %2388
      %2390 = vrot.lane.b32.xlu0 %v400, 44
      %v2391 = vpop.permute.xlu0 %2390
      %2392 = vrot.lane.b32.xlu0 %v401, 44
      %v2393 = vpop.permute.xlu0 %2392
      %2394 = vrot.lane.b32.xlu0 %v402, 44
      %v2395 = vpop.permute.xlu0 %2394
      %2396 = vrot.lane.b32.xlu0 %v403, 44
      %v2397 = vpop.permute.xlu0 %2396
      %2398 = vrot.lane.b32.xlu0 %v404, 44
      %v2399 = vpop.permute.xlu0 %2398
      %2400 = vrot.lane.b32.xlu0 %v405, 44
      %v2401 = vpop.permute.xlu0 %2400
      %2402 = vrot.lane.b32.xlu0 %v406, 44
      %v2403 = vpop.permute.xlu0 %2402
      %2404 = vrot.lane.b32.xlu0 %v407, 44
      %v2405 = vpop.permute.xlu0 %2404
      %2406 = vrot.lane.b32.xlu0 %v408, 44
      %v2407 = vpop.permute.xlu0 %2406
      %2408 = vrot.lane.b32.xlu0 %v409, 44
      %v2409 = vpop.permute.xlu0 %2408
      %2410 = vrot.lane.b32.xlu0 %v410, 44
      %v2411 = vpop.permute.xlu0 %2410
      %2412 = vrot.lane.b32.xlu0 %v411, 44
      %v2413 = vpop.permute.xlu0 %2412
      %2414 = vrot.lane.b32.xlu0 %v412, 44
      %v2415 = vpop.permute.xlu0 %2414
      %2416 = vrot.lane.b32.xlu0 %v413, 44
      %v2417 = vpop.permute.xlu0 %2416
      %2418 = vrot.lane.b32.xlu0 %v414, 44
      %v2419 = vpop.permute.xlu0 %2418
      %2420 = vrot.lane.b32.xlu0 %v415, 44
      %v2421 = vpop.permute.xlu0 %2420
      %2422 = vrot.lane.b32.xlu0 %v416, 44
      %v2423 = vpop.permute.xlu0 %2422
      %vm2472 = vcmask 392545
      %2473 = vst.msk [vmem:[#allocation2 - $0x1] sm:$0xfe] %vm2472, %v2329
      %vm2474 = vcmask 392544
      %2475 = vst.msk [vmem:[#allocation2 + $0x7] sm:$0xff] %vm2474, %v2331
      %vm2476 = vcmask 385376
      %2477 = vst.msk [vmem:[#allocation2 + $0xf] sm:$0x1] %vm2476, %v2333
      %2478 = vst.msk [vmem:[#allocation2 + $0xf] sm:$0xfe] %vm2472, %v2335
      %2479 = vst.msk [vmem:[#allocation2 + $0x17] sm:$0xff] %vm2474, %v2337
      %2480 = vst.msk [vmem:[#allocation2 + $0x1f] sm:$0x1] %vm2476, %v2339
      %2481 = vst.msk [vmem:[#allocation2 + $0x1f] sm:$0xfe] %vm2472, %v2341
      %2482 = vst.msk [vmem:[#allocation2 + $0x27] sm:$0xff] %vm2474, %v2343
      %2483 = vst.msk [vmem:[#allocation2 + $0x2f] sm:$0x1] %vm2476, %v2345
      %2484 = vst.msk [vmem:[#allocation2 + $0x2f] sm:$0xfe] %vm2472, %v2347
      %2485 = vst.msk [vmem:[#allocation2 + $0x37] sm:$0xff] %vm2474, %v2349
      %2486 = vst.msk [vmem:[#allocation2 + $0x3f] sm:$0x1] %vm2476, %v2351
      %2487 = vst.msk [vmem:[#allocation2 + $0x3f] sm:$0xfe] %vm2472, %v2353
      %2488 = vst.msk [vmem:[#allocation2 + $0x47] sm:$0xff] %vm2474, %v2355
      %2489 = vst.msk [vmem:[#allocation2 + $0x4f] sm:$0x1] %vm2476, %v2357
      %2490 = vst.msk [vmem:[#allocation2 + $0x4f] sm:$0xfe] %vm2472, %v2359
      %2491 = vst.msk [vmem:[#allocation2 + $0x57] sm:$0xff] %vm2474, %v2361
      %2492 = vst.msk [vmem:[#allocation2 + $0x5f] sm:$0x1] %vm2476, %v2363
      %2493 = vst.msk [vmem:[#allocation2 + $0x5f] sm:$0xfe] %vm2472, %v2365
      %2494 = vst.msk [vmem:[#allocation2 + $0x67] sm:$0xff] %vm2474, %v2367
      %2495 = vst.msk [vmem:[#allocation2 + $0x6f] sm:$0x1] %vm2476, %v2369
      %2496 = vst.msk [vmem:[#allocation2 + $0x6f] sm:$0xfe] %vm2472, %v2371
      %2497 = vst.msk [vmem:[#allocation2 + $0x77] sm:$0xff] %vm2474, %v2373
      %2498 = vst.msk [vmem:[#allocation2 + $0x7f] sm:$0x1] %vm2476, %v2375
      %2499 = vst.msk [vmem:[#allocation2 + $0x7f] sm:$0xfe] %vm2472, %v2377
      %2500 = vst.msk [vmem:[#allocation2 + $0x87] sm:$0xff] %vm2474, %v2379
      %2501 = vst.msk [vmem:[#allocation2 + $0x8f] sm:$0x1] %vm2476, %v2381
      %2502 = vst.msk [vmem:[#allocation2 + $0x8f] sm:$0xfe] %vm2472, %v2383
      %2503 = vst.msk [vmem:[#allocation2 + $0x97] sm:$0xff] %vm2474, %v2385
      %2504 = vst.msk [vmem:[#allocation2 + $0x9f] sm:$0x1] %vm2476, %v2387
      %2505 = vst.msk [vmem:[#allocation2 + $0x9f] sm:$0xfe] %vm2472, %v2389
      %2506 = vst.msk [vmem:[#allocation2 + $0xa7] sm:$0xff] %vm2474, %v2391
      %2507 = vst.msk [vmem:[#allocation2 + $0xaf] sm:$0x1] %vm2476, %v2393
      %2508 = vst.msk [vmem:[#allocation2 + $0xaf] sm:$0xfe] %vm2472, %v2395
      %2509 = vst.msk [vmem:[#allocation2 + $0xb7] sm:$0xff] %vm2474, %v2397
      %2510 = vst.msk [vmem:[#allocation2 + $0xbf] sm:$0x1] %vm2476, %v2399
      %2511 = vst.msk [vmem:[#allocation2 + $0xbf] sm:$0xfe] %vm2472, %v2401
      %2512 = vst.msk [vmem:[#allocation2 + $0xc7] sm:$0xff] %vm2474, %v2403
      %2513 = vst.msk [vmem:[#allocation2 + $0xcf] sm:$0x1] %vm2476, %v2405
      %2514 = vst.msk [vmem:[#allocation2 + $0xcf] sm:$0xfe] %vm2472, %v2407
      %2515 = vst.msk [vmem:[#allocation2 + $0xd7] sm:$0xff] %vm2474, %v2409
      %2516 = vst.msk [vmem:[#allocation2 + $0xdf] sm:$0x1] %vm2476, %v2411
      %2517 = vst.msk [vmem:[#allocation2 + $0xdf] sm:$0xfe] %vm2472, %v2413
      %2518 = vst.msk [vmem:[#allocation2 + $0xe7] sm:$0xff] %vm2474, %v2415
      %2519 = vst.msk [vmem:[#allocation2 + $0xef] sm:$0x1] %vm2476, %v2417
      %2520 = vst.msk [vmem:[#allocation2 + $0xef] sm:$0xfe] %vm2472, %v2419
      %2521 = vst.msk [vmem:[#allocation2 + $0xf7] sm:$0xff] %vm2474, %v2421
      %2522 = vst.msk [vmem:[#allocation2 + $0xff] sm:$0x1] %vm2476, %v2423
      %2523 = vrot.lane.b32.xlu0 %v369, 48
      %v2524 = vpop.permute.xlu0 %2523
      %2525 = vrot.lane.b32.xlu0 %v370, 48
      %v2526 = vpop.permute.xlu0 %2525
      %2527 = vrot.lane.b32.xlu0 %v371, 48
      %v2528 = vpop.permute.xlu0 %2527
      %2529 = vrot.lane.b32.xlu0 %v372, 48
      %v2530 = vpop.permute.xlu0 %2529
      %2531 = vrot.lane.b32.xlu0 %v373, 48
      %v2532 = vpop.permute.xlu0 %2531
      %2533 = vrot.lane.b32.xlu0 %v374, 48
      %v2534 = vpop.permute.xlu0 %2533
      %2535 = vrot.lane.b32.xlu0 %v375, 48
      %v2536 = vpop.permute.xlu0 %2535
      %2537 = vrot.lane.b32.xlu0 %v376, 48
      %v2538 = vpop.permute.xlu0 %2537
      %2539 = vrot.lane.b32.xlu0 %v377, 48
      %v2540 = vpop.permute.xlu0 %2539
      %2541 = vrot.lane.b32.xlu0 %v378, 48
      %v2542 = vpop.permute.xlu0 %2541
      %2543 = vrot.lane.b32.xlu0 %v379, 48
      %v2544 = vpop.permute.xlu0 %2543
      %2545 = vrot.lane.b32.xlu0 %v380, 48
      %v2546 = vpop.permute.xlu0 %2545
      %2547 = vrot.lane.b32.xlu0 %v381, 48
      %v2548 = vpop.permute.xlu0 %2547
      %2549 = vrot.lane.b32.xlu0 %v382, 48
      %v2550 = vpop.permute.xlu0 %2549
      %2551 = vrot.lane.b32.xlu0 %v383, 48
      %v2552 = vpop.permute.xlu0 %2551
      %2553 = vrot.lane.b32.xlu0 %v384, 48
      %v2554 = vpop.permute.xlu0 %2553
      %2555 = vrot.lane.b32.xlu0 %v385, 48
      %v2556 = vpop.permute.xlu0 %2555
      %2557 = vrot.lane.b32.xlu0 %v386, 48
      %v2558 = vpop.permute.xlu0 %2557
      %2559 = vrot.lane.b32.xlu0 %v387, 48
      %v2560 = vpop.permute.xlu0 %2559
      %2561 = vrot.lane.b32.xlu0 %v388, 48
      %v2562 = vpop.permute.xlu0 %2561
      %2563 = vrot.lane.b32.xlu0 %v389, 48
      %v2564 = vpop.permute.xlu0 %2563
      %2565 = vrot.lane.b32.xlu0 %v390, 48
      %v2566 = vpop.permute.xlu0 %2565
      %2567 = vrot.lane.b32.xlu0 %v391, 48
      %v2568 = vpop.permute.xlu0 %2567
      %2569 = vrot.lane.b32.xlu0 %v392, 48
      %v2570 = vpop.permute.xlu0 %2569
      %2571 = vrot.lane.b32.xlu0 %v393, 48
      %v2572 = vpop.permute.xlu0 %2571
      %2573 = vrot.lane.b32.xlu0 %v394, 48
      %v2574 = vpop.permute.xlu0 %2573
      %2575 = vrot.lane.b32.xlu0 %v395, 48
      %v2576 = vpop.permute.xlu0 %2575
      %2577 = vrot.lane.b32.xlu0 %v396, 48
      %v2578 = vpop.permute.xlu0 %2577
      %2579 = vrot.lane.b32.xlu0 %v397, 48
      %v2580 = vpop.permute.xlu0 %2579
      %2581 = vrot.lane.b32.xlu0 %v398, 48
      %v2582 = vpop.permute.xlu0 %2581
      %2583 = vrot.lane.b32.xlu0 %v399, 48
      %v2584 = vpop.permute.xlu0 %2583
      %2585 = vrot.lane.b32.xlu0 %v400, 48
      %v2586 = vpop.permute.xlu0 %2585
      %2587 = vrot.lane.b32.xlu0 %v401, 48
      %v2588 = vpop.permute.xlu0 %2587
      %2589 = vrot.lane.b32.xlu0 %v402, 48
      %v2590 = vpop.permute.xlu0 %2589
      %2591 = vrot.lane.b32.xlu0 %v403, 48
      %v2592 = vpop.permute.xlu0 %2591
      %2593 = vrot.lane.b32.xlu0 %v404, 48
      %v2594 = vpop.permute.xlu0 %2593
      %2595 = vrot.lane.b32.xlu0 %v405, 48
      %v2596 = vpop.permute.xlu0 %2595
      %2597 = vrot.lane.b32.xlu0 %v406, 48
      %v2598 = vpop.permute.xlu0 %2597
      %2599 = vrot.lane.b32.xlu0 %v407, 48
      %v2600 = vpop.permute.xlu0 %2599
      %2601 = vrot.lane.b32.xlu0 %v408, 48
      %v2602 = vpop.permute.xlu0 %2601
      %2603 = vrot.lane.b32.xlu0 %v409, 48
      %v2604 = vpop.permute.xlu0 %2603
      %2605 = vrot.lane.b32.xlu0 %v410, 48
      %v2606 = vpop.permute.xlu0 %2605
      %2607 = vrot.lane.b32.xlu0 %v411, 48
      %v2608 = vpop.permute.xlu0 %2607
      %2609 = vrot.lane.b32.xlu0 %v412, 48
      %v2610 = vpop.permute.xlu0 %2609
      %2611 = vrot.lane.b32.xlu0 %v413, 48
      %v2612 = vpop.permute.xlu0 %2611
      %2613 = vrot.lane.b32.xlu0 %v414, 48
      %v2614 = vpop.permute.xlu0 %2613
      %2615 = vrot.lane.b32.xlu0 %v415, 48
      %v2616 = vpop.permute.xlu0 %2615
      %2617 = vrot.lane.b32.xlu0 %v416, 48
      %v2618 = vpop.permute.xlu0 %2617
      %vm2667 = vcmask 425346
      %2668 = vst.msk [vmem:[#allocation2 - $0x2] sm:$0xfc] %vm2667, %v2524
      %vm2669 = vcmask 425344
      %2670 = vst.msk [vmem:[#allocation2 + $0x6] sm:$0xff] %vm2669, %v2526
      %vm2671 = vcmask 419200
      %2672 = vst.msk [vmem:[#allocation2 + $0xe] sm:$0x3] %vm2671, %v2528
      %2673 = vst.msk [vmem:[#allocation2 + $0xe] sm:$0xfc] %vm2667, %v2530
      %2674 = vst.msk [vmem:[#allocation2 + $0x16] sm:$0xff] %vm2669, %v2532
      %2675 = vst.msk [vmem:[#allocation2 + $0x1e] sm:$0x3] %vm2671, %v2534
      %2676 = vst.msk [vmem:[#allocation2 + $0x1e] sm:$0xfc] %vm2667, %v2536
      %2677 = vst.msk [vmem:[#allocation2 + $0x26] sm:$0xff] %vm2669, %v2538
      %2678 = vst.msk [vmem:[#allocation2 + $0x2e] sm:$0x3] %vm2671, %v2540
      %2679 = vst.msk [vmem:[#allocation2 + $0x2e] sm:$0xfc] %vm2667, %v2542
      %2680 = vst.msk [vmem:[#allocation2 + $0x36] sm:$0xff] %vm2669, %v2544
      %2681 = vst.msk [vmem:[#allocation2 + $0x3e] sm:$0x3] %vm2671, %v2546
      %2682 = vst.msk [vmem:[#allocation2 + $0x3e] sm:$0xfc] %vm2667, %v2548
      %2683 = vst.msk [vmem:[#allocation2 + $0x46] sm:$0xff] %vm2669, %v2550
      %2684 = vst.msk [vmem:[#allocation2 + $0x4e] sm:$0x3] %vm2671, %v2552
      %2685 = vst.msk [vmem:[#allocation2 + $0x4e] sm:$0xfc] %vm2667, %v2554
      %2686 = vst.msk [vmem:[#allocation2 + $0x56] sm:$0xff] %vm2669, %v2556
      %2687 = vst.msk [vmem:[#allocation2 + $0x5e] sm:$0x3] %vm2671, %v2558
      %2688 = vst.msk [vmem:[#allocation2 + $0x5e] sm:$0xfc] %vm2667, %v2560
      %2689 = vst.msk [vmem:[#allocation2 + $0x66] sm:$0xff] %vm2669, %v2562
      %2690 = vst.msk [vmem:[#allocation2 + $0x6e] sm:$0x3] %vm2671, %v2564
      %2691 = vst.msk [vmem:[#allocation2 + $0x6e] sm:$0xfc] %vm2667, %v2566
      %2692 = vst.msk [vmem:[#allocation2 + $0x76] sm:$0xff] %vm2669, %v2568
      %2693 = vst.msk [vmem:[#allocation2 + $0x7e] sm:$0x3] %vm2671, %v2570
      %2694 = vst.msk [vmem:[#allocation2 + $0x7e] sm:$0xfc] %vm2667, %v2572
      %2695 = vst.msk [vmem:[#allocation2 + $0x86] sm:$0xff] %vm2669, %v2574
      %2696 = vst.msk [vmem:[#allocation2 + $0x8e] sm:$0x3] %vm2671, %v2576
      %2697 = vst.msk [vmem:[#allocation2 + $0x8e] sm:$0xfc] %vm2667, %v2578
      %2698 = vst.msk [vmem:[#allocation2 + $0x96] sm:$0xff] %vm2669, %v2580
      %2699 = vst.msk [vmem:[#allocation2 + $0x9e] sm:$0x3] %vm2671, %v2582
      %2700 = vst.msk [vmem:[#allocation2 + $0x9e] sm:$0xfc] %vm2667, %v2584
      %2701 = vst.msk [vmem:[#allocation2 + $0xa6] sm:$0xff] %vm2669, %v2586
      %2702 = vst.msk [vmem:[#allocation2 + $0xae] sm:$0x3] %vm2671, %v2588
      %2703 = vst.msk [vmem:[#allocation2 + $0xae] sm:$0xfc] %vm2667, %v2590
      %2704 = vst.msk [vmem:[#allocation2 + $0xb6] sm:$0xff] %vm2669, %v2592
      %2705 = vst.msk [vmem:[#allocation2 + $0xbe] sm:$0x3] %vm2671, %v2594
      %2706 = vst.msk [vmem:[#allocation2 + $0xbe] sm:$0xfc] %vm2667, %v2596
      %2707 = vst.msk [vmem:[#allocation2 + $0xc6] sm:$0xff] %vm2669, %v2598
      %2708 = vst.msk [vmem:[#allocation2 + $0xce] sm:$0x3] %vm2671, %v2600
      %2709 = vst.msk [vmem:[#allocation2 + $0xce] sm:$0xfc] %vm2667, %v2602
      %2710 = vst.msk [vmem:[#allocation2 + $0xd6] sm:$0xff] %vm2669, %v2604
      %2711 = vst.msk [vmem:[#allocation2 + $0xde] sm:$0x3] %vm2671, %v2606
      %2712 = vst.msk [vmem:[#allocation2 + $0xde] sm:$0xfc] %vm2667, %v2608
      %2713 = vst.msk [vmem:[#allocation2 + $0xe6] sm:$0xff] %vm2669, %v2610
      %2714 = vst.msk [vmem:[#allocation2 + $0xee] sm:$0x3] %vm2671, %v2612
      %2715 = vst.msk [vmem:[#allocation2 + $0xee] sm:$0xfc] %vm2667, %v2614
      %2716 = vst.msk [vmem:[#allocation2 + $0xf6] sm:$0xff] %vm2669, %v2616
      %2717 = vst.msk [vmem:[#allocation2 + $0xfe] sm:$0x3] %vm2671, %v2618
      %2718 = vrot.lane.b32.xlu0 %v369, 52
      %v2719 = vpop.permute.xlu0 %2718
      %2720 = vrot.lane.b32.xlu0 %v370, 52
      %v2721 = vpop.permute.xlu0 %2720
      %2722 = vrot.lane.b32.xlu0 %v371, 52
      %v2723 = vpop.permute.xlu0 %2722
      %2724 = vrot.lane.b32.xlu0 %v372, 52
      %v2725 = vpop.permute.xlu0 %2724
      %2726 = vrot.lane.b32.xlu0 %v373, 52
      %v2727 = vpop.permute.xlu0 %2726
      %2728 = vrot.lane.b32.xlu0 %v374, 52
      %v2729 = vpop.permute.xlu0 %2728
      %2730 = vrot.lane.b32.xlu0 %v375, 52
      %v2731 = vpop.permute.xlu0 %2730
      %2732 = vrot.lane.b32.xlu0 %v376, 52
      %v2733 = vpop.permute.xlu0 %2732
      %2734 = vrot.lane.b32.xlu0 %v377, 52
      %v2735 = vpop.permute.xlu0 %2734
      %2736 = vrot.lane.b32.xlu0 %v378, 52
      %v2737 = vpop.permute.xlu0 %2736
      %2738 = vrot.lane.b32.xlu0 %v379, 52
      %v2739 = vpop.permute.xlu0 %2738
      %2740 = vrot.lane.b32.xlu0 %v380, 52
      %v2741 = vpop.permute.xlu0 %2740
      %2742 = vrot.lane.b32.xlu0 %v381, 52
      %v2743 = vpop.permute.xlu0 %2742
      %2744 = vrot.lane.b32.xlu0 %v382, 52
      %v2745 = vpop.permute.xlu0 %2744
      %2746 = vrot.lane.b32.xlu0 %v383, 52
      %v2747 = vpop.permute.xlu0 %2746
      %2748 = vrot.lane.b32.xlu0 %v384, 52
      %v2749 = vpop.permute.xlu0 %2748
      %2750 = vrot.lane.b32.xlu0 %v385, 52
      %v2751 = vpop.permute.xlu0 %2750
      %2752 = vrot.lane.b32.xlu0 %v386, 52
      %v2753 = vpop.permute.xlu0 %2752
      %2754 = vrot.lane.b32.xlu0 %v387, 52
      %v2755 = vpop.permute.xlu0 %2754
      %2756 = vrot.lane.b32.xlu0 %v388, 52
      %v2757 = vpop.permute.xlu0 %2756
      %2758 = vrot.lane.b32.xlu0 %v389, 52
      %v2759 = vpop.permute.xlu0 %2758
      %2760 = vrot.lane.b32.xlu0 %v390, 52
      %v2761 = vpop.permute.xlu0 %2760
      %2762 = vrot.lane.b32.xlu0 %v391, 52
      %v2763 = vpop.permute.xlu0 %2762
      %2764 = vrot.lane.b32.xlu0 %v392, 52
      %v2765 = vpop.permute.xlu0 %2764
      %2766 = vrot.lane.b32.xlu0 %v393, 52
      %v2767 = vpop.permute.xlu0 %2766
      %2768 = vrot.lane.b32.xlu0 %v394, 52
      %v2769 = vpop.permute.xlu0 %2768
      %2770 = vrot.lane.b32.xlu0 %v395, 52
      %v2771 = vpop.permute.xlu0 %2770
      %2772 = vrot.lane.b32.xlu0 %v396, 52
      %v2773 = vpop.permute.xlu0 %2772
      %2774 = vrot.lane.b32.xlu0 %v397, 52
      %v2775 = vpop.permute.xlu0 %2774
      %2776 = vrot.lane.b32.xlu0 %v398, 52
      %v2777 = vpop.permute.xlu0 %2776
      %2778 = vrot.lane.b32.xlu0 %v399, 52
      %v2779 = vpop.permute.xlu0 %2778
      %2780 = vrot.lane.b32.xlu0 %v400, 52
      %v2781 = vpop.permute.xlu0 %2780
      %2782 = vrot.lane.b32.xlu0 %v401, 52
      %v2783 = vpop.permute.xlu0 %2782
      %2784 = vrot.lane.b32.xlu0 %v402, 52
      %v2785 = vpop.permute.xlu0 %2784
      %2786 = vrot.lane.b32.xlu0 %v403, 52
      %v2787 = vpop.permute.xlu0 %2786
      %2788 = vrot.lane.b32.xlu0 %v404, 52
      %v2789 = vpop.permute.xlu0 %2788
      %2790 = vrot.lane.b32.xlu0 %v405, 52
      %v2791 = vpop.permute.xlu0 %2790
      %2792 = vrot.lane.b32.xlu0 %v406, 52
      %v2793 = vpop.permute.xlu0 %2792
      %2794 = vrot.lane.b32.xlu0 %v407, 52
      %v2795 = vpop.permute.xlu0 %2794
      %2796 = vrot.lane.b32.xlu0 %v408, 52
      %v2797 = vpop.permute.xlu0 %2796
      %2798 = vrot.lane.b32.xlu0 %v409, 52
      %v2799 = vpop.permute.xlu0 %2798
      %2800 = vrot.lane.b32.xlu0 %v410, 52
      %v2801 = vpop.permute.xlu0 %2800
      %2802 = vrot.lane.b32.xlu0 %v411, 52
      %v2803 = vpop.permute.xlu0 %2802
      %2804 = vrot.lane.b32.xlu0 %v412, 52
      %v2805 = vpop.permute.xlu0 %2804
      %2806 = vrot.lane.b32.xlu0 %v413, 52
      %v2807 = vpop.permute.xlu0 %2806
      %2808 = vrot.lane.b32.xlu0 %v414, 52
      %v2809 = vpop.permute.xlu0 %2808
      %2810 = vrot.lane.b32.xlu0 %v415, 52
      %v2811 = vpop.permute.xlu0 %2810
      %2812 = vrot.lane.b32.xlu0 %v416, 52
      %v2813 = vpop.permute.xlu0 %2812
      %vm2862 = vcmask 458147
      %2863 = vst.msk [vmem:[#allocation2 - $0x3] sm:$0xf8] %vm2862, %v2719
      %vm2864 = vcmask 458144
      %2865 = vst.msk [vmem:[#allocation2 + $0x5] sm:$0xff] %vm2864, %v2721
      %vm2866 = vcmask 453024
      %2867 = vst.msk [vmem:[#allocation2 + $0xd] sm:$0x7] %vm2866, %v2723
      %2868 = vst.msk [vmem:[#allocation2 + $0xd] sm:$0xf8] %vm2862, %v2725
      %2869 = vst.msk [vmem:[#allocation2 + $0x15] sm:$0xff] %vm2864, %v2727
      %2870 = vst.msk [vmem:[#allocation2 + $0x1d] sm:$0x7] %vm2866, %v2729
      %2871 = vst.msk [vmem:[#allocation2 + $0x1d] sm:$0xf8] %vm2862, %v2731
      %2872 = vst.msk [vmem:[#allocation2 + $0x25] sm:$0xff] %vm2864, %v2733
      %2873 = vst.msk [vmem:[#allocation2 + $0x2d] sm:$0x7] %vm2866, %v2735
      %2874 = vst.msk [vmem:[#allocation2 + $0x2d] sm:$0xf8] %vm2862, %v2737
      %2875 = vst.msk [vmem:[#allocation2 + $0x35] sm:$0xff] %vm2864, %v2739
      %2876 = vst.msk [vmem:[#allocation2 + $0x3d] sm:$0x7] %vm2866, %v2741
      %2877 = vst.msk [vmem:[#allocation2 + $0x3d] sm:$0xf8] %vm2862, %v2743
      %2878 = vst.msk [vmem:[#allocation2 + $0x45] sm:$0xff] %vm2864, %v2745
      %2879 = vst.msk [vmem:[#allocation2 + $0x4d] sm:$0x7] %vm2866, %v2747
      %2880 = vst.msk [vmem:[#allocation2 + $0x4d] sm:$0xf8] %vm2862, %v2749
      %2881 = vst.msk [vmem:[#allocation2 + $0x55] sm:$0xff] %vm2864, %v2751
      %2882 = vst.msk [vmem:[#allocation2 + $0x5d] sm:$0x7] %vm2866, %v2753
      %2883 = vst.msk [vmem:[#allocation2 + $0x5d] sm:$0xf8] %vm2862, %v2755
      %2884 = vst.msk [vmem:[#allocation2 + $0x65] sm:$0xff] %vm2864, %v2757
      %2885 = vst.msk [vmem:[#allocation2 + $0x6d] sm:$0x7] %vm2866, %v2759
      %2886 = vst.msk [vmem:[#allocation2 + $0x6d] sm:$0xf8] %vm2862, %v2761
      %2887 = vst.msk [vmem:[#allocation2 + $0x75] sm:$0xff] %vm2864, %v2763
      %2888 = vst.msk [vmem:[#allocation2 + $0x7d] sm:$0x7] %vm2866, %v2765
      %2889 = vst.msk [vmem:[#allocation2 + $0x7d] sm:$0xf8] %vm2862, %v2767
      %2890 = vst.msk [vmem:[#allocation2 + $0x85] sm:$0xff] %vm2864, %v2769
      %2891 = vst.msk [vmem:[#allocation2 + $0x8d] sm:$0x7] %vm2866, %v2771
      %2892 = vst.msk [vmem:[#allocation2 + $0x8d] sm:$0xf8] %vm2862, %v2773
      %2893 = vst.msk [vmem:[#allocation2 + $0x95] sm:$0xff] %vm2864, %v2775
      %2894 = vst.msk [vmem:[#allocation2 + $0x9d] sm:$0x7] %vm2866, %v2777
      %2895 = vst.msk [vmem:[#allocation2 + $0x9d] sm:$0xf8] %vm2862, %v2779
      %2896 = vst.msk [vmem:[#allocation2 + $0xa5] sm:$0xff] %vm2864, %v2781
      %2897 = vst.msk [vmem:[#allocation2 + $0xad] sm:$0x7] %vm2866, %v2783
      %2898 = vst.msk [vmem:[#allocation2 + $0xad] sm:$0xf8] %vm2862, %v2785
      %2899 = vst.msk [vmem:[#allocation2 + $0xb5] sm:$0xff] %vm2864, %v2787
      %2900 = vst.msk [vmem:[#allocation2 + $0xbd] sm:$0x7] %vm2866, %v2789
      %2901 = vst.msk [vmem:[#allocation2 + $0xbd] sm:$0xf8] %vm2862, %v2791
      %2902 = vst.msk [vmem:[#allocation2 + $0xc5] sm:$0xff] %vm2864, %v2793
      %2903 = vst.msk [vmem:[#allocation2 + $0xcd] sm:$0x7] %vm2866, %v2795
      %2904 = vst.msk [vmem:[#allocation2 + $0xcd] sm:$0xf8] %vm2862, %v2797
      %2905 = vst.msk [vmem:[#allocation2 + $0xd5] sm:$0xff] %vm2864, %v2799
      %2906 = vst.msk [vmem:[#allocation2 + $0xdd] sm:$0x7] %vm2866, %v2801
      %2907 = vst.msk [vmem:[#allocation2 + $0xdd] sm:$0xf8] %vm2862, %v2803
      %2908 = vst.msk [vmem:[#allocation2 + $0xe5] sm:$0xff] %vm2864, %v2805
      %2909 = vst.msk [vmem:[#allocation2 + $0xed] sm:$0x7] %vm2866, %v2807
      %2910 = vst.msk [vmem:[#allocation2 + $0xed] sm:$0xf8] %vm2862, %v2809
      %2911 = vst.msk [vmem:[#allocation2 + $0xf5] sm:$0xff] %vm2864, %v2811
      %2912 = vst.msk [vmem:[#allocation2 + $0xfd] sm:$0x7] %vm2866, %v2813
      %2913 = vrot.lane.b32.xlu0 %v369, 56
      %v2914 = vpop.permute.xlu0 %2913
      %2915 = vrot.lane.b32.xlu0 %v370, 56
      %v2916 = vpop.permute.xlu0 %2915
      %2917 = vrot.lane.b32.xlu0 %v371, 56
      %v2918 = vpop.permute.xlu0 %2917
      %2919 = vrot.lane.b32.xlu0 %v372, 56
      %v2920 = vpop.permute.xlu0 %2919
      %2921 = vrot.lane.b32.xlu0 %v373, 56
      %v2922 = vpop.permute.xlu0 %2921
      %2923 = vrot.lane.b32.xlu0 %v374, 56
      %v2924 = vpop.permute.xlu0 %2923
      %2925 = vrot.lane.b32.xlu0 %v375, 56
      %v2926 = vpop.permute.xlu0 %2925
      %2927 = vrot.lane.b32.xlu0 %v376, 56
      %v2928 = vpop.permute.xlu0 %2927
      %2929 = vrot.lane.b32.xlu0 %v377, 56
      %v2930 = vpop.permute.xlu0 %2929
      %2931 = vrot.lane.b32.xlu0 %v378, 56
      %v2932 = vpop.permute.xlu0 %2931
      %2933 = vrot.lane.b32.xlu0 %v379, 56
      %v2934 = vpop.permute.xlu0 %2933
      %2935 = vrot.lane.b32.xlu0 %v380, 56
      %v2936 = vpop.permute.xlu0 %2935
      %2937 = vrot.lane.b32.xlu0 %v381, 56
      %v2938 = vpop.permute.xlu0 %2937
      %2939 = vrot.lane.b32.xlu0 %v382, 56
      %v2940 = vpop.permute.xlu0 %2939
      %2941 = vrot.lane.b32.xlu0 %v383, 56
      %v2942 = vpop.permute.xlu0 %2941
      %2943 = vrot.lane.b32.xlu0 %v384, 56
      %v2944 = vpop.permute.xlu0 %2943
      %2945 = vrot.lane.b32.xlu0 %v385, 56
      %v2946 = vpop.permute.xlu0 %2945
      %2947 = vrot.lane.b32.xlu0 %v386, 56
      %v2948 = vpop.permute.xlu0 %2947
      %2949 = vrot.lane.b32.xlu0 %v387, 56
      %v2950 = vpop.permute.xlu0 %2949
      %2951 = vrot.lane.b32.xlu0 %v388, 56
      %v2952 = vpop.permute.xlu0 %2951
      %2953 = vrot.lane.b32.xlu0 %v389, 56
      %v2954 = vpop.permute.xlu0 %2953
      %2955 = vrot.lane.b32.xlu0 %v390, 56
      %v2956 = vpop.permute.xlu0 %2955
      %2957 = vrot.lane.b32.xlu0 %v391, 56
      %v2958 = vpop.permute.xlu0 %2957
      %2959 = vrot.lane.b32.xlu0 %v392, 56
      %v2960 = vpop.permute.xlu0 %2959
      %2961 = vrot.lane.b32.xlu0 %v393, 56
      %v2962 = vpop.permute.xlu0 %2961
      %2963 = vrot.lane.b32.xlu0 %v394, 56
      %v2964 = vpop.permute.xlu0 %2963
      %2965 = vrot.lane.b32.xlu0 %v395, 56
      %v2966 = vpop.permute.xlu0 %2965
      %2967 = vrot.lane.b32.xlu0 %v396, 56
      %v2968 = vpop.permute.xlu0 %2967
      %2969 = vrot.lane.b32.xlu0 %v397, 56
      %v2970 = vpop.permute.xlu0 %2969
      %2971 = vrot.lane.b32.xlu0 %v398, 56
      %v2972 = vpop.permute.xlu0 %2971
      %2973 = vrot.lane.b32.xlu0 %v399, 56
      %v2974 = vpop.permute.xlu0 %2973
      %2975 = vrot.lane.b32.xlu0 %v400, 56
      %v2976 = vpop.permute.xlu0 %2975
      %2977 = vrot.lane.b32.xlu0 %v401, 56
      %v2978 = vpop.permute.xlu0 %2977
      %2979 = vrot.lane.b32.xlu0 %v402, 56
      %v2980 = vpop.permute.xlu0 %2979
      %2981 = vrot.lane.b32.xlu0 %v403, 56
      %v2982 = vpop.permute.xlu0 %2981
      %2983 = vrot.lane.b32.xlu0 %v404, 56
      %v2984 = vpop.permute.xlu0 %2983
      %2985 = vrot.lane.b32.xlu0 %v405, 56
      %v2986 = vpop.permute.xlu0 %2985
      %2987 = vrot.lane.b32.xlu0 %v406, 56
      %v2988 = vpop.permute.xlu0 %2987
      %2989 = vrot.lane.b32.xlu0 %v407, 56
      %v2990 = vpop.permute.xlu0 %2989
      %2991 = vrot.lane.b32.xlu0 %v408, 56
      %v2992 = vpop.permute.xlu0 %2991
      %2993 = vrot.lane.b32.xlu0 %v409, 56
      %v2994 = vpop.permute.xlu0 %2993
      %2995 = vrot.lane.b32.xlu0 %v410, 56
      %v2996 = vpop.permute.xlu0 %2995
      %2997 = vrot.lane.b32.xlu0 %v411, 56
      %v2998 = vpop.permute.xlu0 %2997
      %2999 = vrot.lane.b32.xlu0 %v412, 56
      %v3000 = vpop.permute.xlu0 %2999
      %3001 = vrot.lane.b32.xlu0 %v413, 56
      %v3002 = vpop.permute.xlu0 %3001
      %3003 = vrot.lane.b32.xlu0 %v414, 56
      %v3004 = vpop.permute.xlu0 %3003
      %3005 = vrot.lane.b32.xlu0 %v415, 56
      %v3006 = vpop.permute.xlu0 %3005
      %3007 = vrot.lane.b32.xlu0 %v416, 56
      %v3008 = vpop.permute.xlu0 %3007
      %vm3057 = vcmask 490948
      %3058 = vst.msk [vmem:[#allocation2 - $0x4] sm:$0xf0] %vm3057, %v2914
      %vm3059 = vcmask 490944
      %3060 = vst.msk [vmem:[#allocation2 + $0x4] sm:$0xff] %vm3059, %v2916
      %vm3061 = vcmask 486848
      %3062 = vst.msk [vmem:[#allocation2 + $0xc] sm:$0xf] %vm3061, %v2918
      %3063 = vst.msk [vmem:[#allocation2 + $0xc] sm:$0xf0] %vm3057, %v2920
      %3064 = vst.msk [vmem:[#allocation2 + $0x14] sm:$0xff] %vm3059, %v2922
      %3065 = vst.msk [vmem:[#allocation2 + $0x1c] sm:$0xf] %vm3061, %v2924
      %3066 = vst.msk [vmem:[#allocation2 + $0x1c] sm:$0xf0] %vm3057, %v2926
      %3067 = vst.msk [vmem:[#allocation2 + $0x24] sm:$0xff] %vm3059, %v2928
      %3068 = vst.msk [vmem:[#allocation2 + $0x2c] sm:$0xf] %vm3061, %v2930
      %3069 = vst.msk [vmem:[#allocation2 + $0x2c] sm:$0xf0] %vm3057, %v2932
      %3070 = vst.msk [vmem:[#allocation2 + $0x34] sm:$0xff] %vm3059, %v2934
      %3071 = vst.msk [vmem:[#allocation2 + $0x3c] sm:$0xf] %vm3061, %v2936
      %3072 = vst.msk [vmem:[#allocation2 + $0x3c] sm:$0xf0] %vm3057, %v2938
      %3073 = vst.msk [vmem:[#allocation2 + $0x44] sm:$0xff] %vm3059, %v2940
      %3074 = vst.msk [vmem:[#allocation2 + $0x4c] sm:$0xf] %vm3061, %v2942
      %3075 = vst.msk [vmem:[#allocation2 + $0x4c] sm:$0xf0] %vm3057, %v2944
      %3076 = vst.msk [vmem:[#allocation2 + $0x54] sm:$0xff] %vm3059, %v2946
      %3077 = vst.msk [vmem:[#allocation2 + $0x5c] sm:$0xf] %vm3061, %v2948
      %3078 = vst.msk [vmem:[#allocation2 + $0x5c] sm:$0xf0] %vm3057, %v2950
      %3079 = vst.msk [vmem:[#allocation2 + $0x64] sm:$0xff] %vm3059, %v2952
      %3080 = vst.msk [vmem:[#allocation2 + $0x6c] sm:$0xf] %vm3061, %v2954
      %3081 = vst.msk [vmem:[#allocation2 + $0x6c] sm:$0xf0] %vm3057, %v2956
      %3082 = vst.msk [vmem:[#allocation2 + $0x74] sm:$0xff] %vm3059, %v2958
      %3083 = vst.msk [vmem:[#allocation2 + $0x7c] sm:$0xf] %vm3061, %v2960
      %3084 = vst.msk [vmem:[#allocation2 + $0x7c] sm:$0xf0] %vm3057, %v2962
      %3085 = vst.msk [vmem:[#allocation2 + $0x84] sm:$0xff] %vm3059, %v2964
      %3086 = vst.msk [vmem:[#allocation2 + $0x8c] sm:$0xf] %vm3061, %v2966
      %3087 = vst.msk [vmem:[#allocation2 + $0x8c] sm:$0xf0] %vm3057, %v2968
      %3088 = vst.msk [vmem:[#allocation2 + $0x94] sm:$0xff] %vm3059, %v2970
      %3089 = vst.msk [vmem:[#allocation2 + $0x9c] sm:$0xf] %vm3061, %v2972
      %3090 = vst.msk [vmem:[#allocation2 + $0x9c] sm:$0xf0] %vm3057, %v2974
      %3091 = vst.msk [vmem:[#allocation2 + $0xa4] sm:$0xff] %vm3059, %v2976
      %3092 = vst.msk [vmem:[#allocation2 + $0xac] sm:$0xf] %vm3061, %v2978
      %3093 = vst.msk [vmem:[#allocation2 + $0xac] sm:$0xf0] %vm3057, %v2980
      %3094 = vst.msk [vmem:[#allocation2 + $0xb4] sm:$0xff] %vm3059, %v2982
      %3095 = vst.msk [vmem:[#allocation2 + $0xbc] sm:$0xf] %vm3061, %v2984
      %3096 = vst.msk [vmem:[#allocation2 + $0xbc] sm:$0xf0] %vm3057, %v2986
      %3097 = vst.msk [vmem:[#allocation2 + $0xc4] sm:$0xff] %vm3059, %v2988
      %3098 = vst.msk [vmem:[#allocation2 + $0xcc] sm:$0xf] %vm3061, %v2990
      %3099 = vst.msk [vmem:[#allocation2 + $0xcc] sm:$0xf0] %vm3057, %v2992
      %3100 = vst.msk [vmem:[#allocation2 + $0xd4] sm:$0xff] %vm3059, %v2994
      %3101 = vst.msk [vmem:[#allocation2 + $0xdc] sm:$0xf] %vm3061, %v2996
      %3102 = vst.msk [vmem:[#allocation2 + $0xdc] sm:$0xf0] %vm3057, %v2998
      %3103 = vst.msk [vmem:[#allocation2 + $0xe4] sm:$0xff] %vm3059, %v3000
      %3104 = vst.msk [vmem:[#allocation2 + $0xec] sm:$0xf] %vm3061, %v3002
      %3105 = vst.msk [vmem:[#allocation2 + $0xec] sm:$0xf0] %vm3057, %v3004
      %3106 = vst.msk [vmem:[#allocation2 + $0xf4] sm:$0xff] %vm3059, %v3006
      %3107 = vst.msk [vmem:[#allocation2 + $0xfc] sm:$0xf] %vm3061, %v3008
      %3110 = vrot.lane.b32.xlu0 %v372, 60
      %v3111 = vpop.permute.xlu0 %3110
      %3112 = vrot.lane.b32.xlu0 %v373, 60
      %v3113 = vpop.permute.xlu0 %3112
      %3114 = vrot.lane.b32.xlu0 %v375, 60
      %v3115 = vpop.permute.xlu0 %3114
      %3116 = vrot.lane.b32.xlu0 %v376, 60
      %v3117 = vpop.permute.xlu0 %3116
      %3118 = vrot.lane.b32.xlu0 %v378, 60
      %v3119 = vpop.permute.xlu0 %3118
      %3120 = vrot.lane.b32.xlu0 %v379, 60
      %v3121 = vpop.permute.xlu0 %3120
      %3122 = vrot.lane.b32.xlu0 %v381, 60
      %v3123 = vpop.permute.xlu0 %3122
      %3124 = vrot.lane.b32.xlu0 %v382, 60
      %v3125 = vpop.permute.xlu0 %3124
      %3126 = vrot.lane.b32.xlu0 %v384, 60
      %v3127 = vpop.permute.xlu0 %3126
      %3128 = vrot.lane.b32.xlu0 %v385, 60
      %v3129 = vpop.permute.xlu0 %3128
      %3130 = vrot.lane.b32.xlu0 %v387, 60
      %v3131 = vpop.permute.xlu0 %3130
      %3132 = vrot.lane.b32.xlu0 %v388, 60
      %v3133 = vpop.permute.xlu0 %3132
      %3134 = vrot.lane.b32.xlu0 %v390, 60
      %v3135 = vpop.permute.xlu0 %3134
      %3136 = vrot.lane.b32.xlu0 %v391, 60
      %v3137 = vpop.permute.xlu0 %3136
      %3138 = vrot.lane.b32.xlu0 %v393, 60
      %v3139 = vpop.permute.xlu0 %3138
      %3140 = vrot.lane.b32.xlu0 %v394, 60
      %v3141 = vpop.permute.xlu0 %3140
      %3142 = vrot.lane.b32.xlu0 %v396, 60
      %v3143 = vpop.permute.xlu0 %3142
      %3144 = vrot.lane.b32.xlu0 %v397, 60
      %v3145 = vpop.permute.xlu0 %3144
      %3146 = vrot.lane.b32.xlu0 %v399, 60
      %v3147 = vpop.permute.xlu0 %3146
      %3148 = vrot.lane.b32.xlu0 %v400, 60
      %v3149 = vpop.permute.xlu0 %3148
      %3150 = vrot.lane.b32.xlu0 %v402, 60
      %v3151 = vpop.permute.xlu0 %3150
      %3152 = vrot.lane.b32.xlu0 %v403, 60
      %v3153 = vpop.permute.xlu0 %3152
      %3154 = vrot.lane.b32.xlu0 %v405, 60
      %v3155 = vpop.permute.xlu0 %3154
      %3156 = vrot.lane.b32.xlu0 %v406, 60
      %v3157 = vpop.permute.xlu0 %3156
      %3158 = vrot.lane.b32.xlu0 %v408, 60
      %v3159 = vpop.permute.xlu0 %3158
      %3160 = vrot.lane.b32.xlu0 %v409, 60
      %v3161 = vpop.permute.xlu0 %3160
      %3162 = vrot.lane.b32.xlu0 %v411, 60
      %v3163 = vpop.permute.xlu0 %3162
      %3164 = vrot.lane.b32.xlu0 %v412, 60
      %v3165 = vpop.permute.xlu0 %3164
      %3166 = vrot.lane.b32.xlu0 %v414, 60
      %v3167 = vpop.permute.xlu0 %3166
      %3168 = vrot.lane.b32.xlu0 %v415, 60
      %v3169 = vpop.permute.xlu0 %3168
      %3170 = vrot.lane.b32.xlu0 %v417, 60
      %v3171 = vpop.permute.xlu0 %3170
      %3172 = vrot.lane.b32.xlu0 %v418, 60
      %v3173 = vpop.permute.xlu0 %3172
      %vm3206 = vcmask 523744
      %3207 = vst.msk [vmem:[#allocation2] sm:$0xff] %vm3206, %v3111
      %3208 = vst.msk [vmem:[#allocation2 + $0x8] sm:$0xff] %vm3206, %v3113
      %3209 = vst.msk [vmem:[#allocation2 + $0x10] sm:$0xff] %vm3206, %v3115
      %3210 = vst.msk [vmem:[#allocation2 + $0x18] sm:$0xff] %vm3206, %v3117
      %3211 = vst.msk [vmem:[#allocation2 + $0x20] sm:$0xff] %vm3206, %v3119
      %3212 = vst.msk [vmem:[#allocation2 + $0x28] sm:$0xff] %vm3206, %v3121
      %3213 = vst.msk [vmem:[#allocation2 + $0x30] sm:$0xff] %vm3206, %v3123
      %3214 = vst.msk [vmem:[#allocation2 + $0x38] sm:$0xff] %vm3206, %v3125
      %3215 = vst.msk [vmem:[#allocation2 + $0x40] sm:$0xff] %vm3206, %v3127
      %3216 = vst.msk [vmem:[#allocation2 + $0x48] sm:$0xff] %vm3206, %v3129
      %3217 = vst.msk [vmem:[#allocation2 + $0x50] sm:$0xff] %vm3206, %v3131
      %3218 = vst.msk [vmem:[#allocation2 + $0x58] sm:$0xff] %vm3206, %v3133
      %3219 = vst.msk [vmem:[#allocation2 + $0x60] sm:$0xff] %vm3206, %v3135
      %3220 = vst.msk [vmem:[#allocation2 + $0x68] sm:$0xff] %vm3206, %v3137
      %3221 = vst.msk [vmem:[#allocation2 + $0x70] sm:$0xff] %vm3206, %v3139
      %3222 = vst.msk [vmem:[#allocation2 + $0x78] sm:$0xff] %vm3206, %v3141
      %3223 = vst.msk [vmem:[#allocation2 + $0x80] sm:$0xff] %vm3206, %v3143
      %3224 = vst.msk [vmem:[#allocation2 + $0x88] sm:$0xff] %vm3206, %v3145
      %3225 = vst.msk [vmem:[#allocation2 + $0x90] sm:$0xff] %vm3206, %v3147
      %3226 = vst.msk [vmem:[#allocation2 + $0x98] sm:$0xff] %vm3206, %v3149
      %3227 = vst.msk [vmem:[#allocation2 + $0xa0] sm:$0xff] %vm3206, %v3151
      %3228 = vst.msk [vmem:[#allocation2 + $0xa8] sm:$0xff] %vm3206, %v3153
      %3229 = vst.msk [vmem:[#allocation2 + $0xb0] sm:$0xff] %vm3206, %v3155
      %3230 = vst.msk [vmem:[#allocation2 + $0xb8] sm:$0xff] %vm3206, %v3157
      %3231 = vst.msk [vmem:[#allocation2 + $0xc0] sm:$0xff] %vm3206, %v3159
      %3232 = vst.msk [vmem:[#allocation2 + $0xc8] sm:$0xff] %vm3206, %v3161
      %3233 = vst.msk [vmem:[#allocation2 + $0xd0] sm:$0xff] %vm3206, %v3163
      %3234 = vst.msk [vmem:[#allocation2 + $0xd8] sm:$0xff] %vm3206, %v3165
      %3235 = vst.msk [vmem:[#allocation2 + $0xe0] sm:$0xff] %vm3206, %v3167
      %3236 = vst.msk [vmem:[#allocation2 + $0xe8] sm:$0xff] %vm3206, %v3169
      %3237 = vst.msk [vmem:[#allocation2 + $0xf0] sm:$0xff] %vm3206, %v3171
      %3238 = vst.msk [vmem:[#allocation2 + $0xf8] sm:$0xff] %vm3206, %v3173
      %3240 = vrot.lane.b32.xlu0 %v372, 64
      %v3241 = vpop.permute.xlu0 %3240
      %3242 = vrot.lane.b32.xlu0 %v373, 64
      %v3243 = vpop.permute.xlu0 %3242
      %3244 = vrot.lane.b32.xlu0 %v374, 64
      %v3245 = vpop.permute.xlu0 %3244
      %3246 = vrot.lane.b32.xlu0 %v375, 64
      %v3247 = vpop.permute.xlu0 %3246
      %3248 = vrot.lane.b32.xlu0 %v376, 64
      %v3249 = vpop.permute.xlu0 %3248
      %3250 = vrot.lane.b32.xlu0 %v377, 64
      %v3251 = vpop.permute.xlu0 %3250
      %3252 = vrot.lane.b32.xlu0 %v378, 64
      %v3253 = vpop.permute.xlu0 %3252
      %3254 = vrot.lane.b32.xlu0 %v379, 64
      %v3255 = vpop.permute.xlu0 %3254
      %3256 = vrot.lane.b32.xlu0 %v380, 64
      %v3257 = vpop.permute.xlu0 %3256
      %3258 = vrot.lane.b32.xlu0 %v381, 64
      %v3259 = vpop.permute.xlu0 %3258
      %3260 = vrot.lane.b32.xlu0 %v382, 64
      %v3261 = vpop.permute.xlu0 %3260
      %3262 = vrot.lane.b32.xlu0 %v383, 64
      %v3263 = vpop.permute.xlu0 %3262
      %3264 = vrot.lane.b32.xlu0 %v384, 64
      %v3265 = vpop.permute.xlu0 %3264
      %3266 = vrot.lane.b32.xlu0 %v385, 64
      %v3267 = vpop.permute.xlu0 %3266
      %3268 = vrot.lane.b32.xlu0 %v386, 64
      %v3269 = vpop.permute.xlu0 %3268
      %3270 = vrot.lane.b32.xlu0 %v387, 64
      %v3271 = vpop.permute.xlu0 %3270
      %3272 = vrot.lane.b32.xlu0 %v388, 64
      %v3273 = vpop.permute.xlu0 %3272
      %3274 = vrot.lane.b32.xlu0 %v389, 64
      %v3275 = vpop.permute.xlu0 %3274
      %3276 = vrot.lane.b32.xlu0 %v390, 64
      %v3277 = vpop.permute.xlu0 %3276
      %3278 = vrot.lane.b32.xlu0 %v391, 64
      %v3279 = vpop.permute.xlu0 %3278
      %3280 = vrot.lane.b32.xlu0 %v392, 64
      %v3281 = vpop.permute.xlu0 %3280
      %3282 = vrot.lane.b32.xlu0 %v393, 64
      %v3283 = vpop.permute.xlu0 %3282
      %3284 = vrot.lane.b32.xlu0 %v394, 64
      %v3285 = vpop.permute.xlu0 %3284
      %3286 = vrot.lane.b32.xlu0 %v395, 64
      %v3287 = vpop.permute.xlu0 %3286
      %3288 = vrot.lane.b32.xlu0 %v396, 64
      %v3289 = vpop.permute.xlu0 %3288
      %3290 = vrot.lane.b32.xlu0 %v397, 64
      %v3291 = vpop.permute.xlu0 %3290
      %3292 = vrot.lane.b32.xlu0 %v398, 64
      %v3293 = vpop.permute.xlu0 %3292
      %3294 = vrot.lane.b32.xlu0 %v399, 64
      %v3295 = vpop.permute.xlu0 %3294
      %3296 = vrot.lane.b32.xlu0 %v400, 64
      %v3297 = vpop.permute.xlu0 %3296
      %3298 = vrot.lane.b32.xlu0 %v401, 64
      %v3299 = vpop.permute.xlu0 %3298
      %3300 = vrot.lane.b32.xlu0 %v402, 64
      %v3301 = vpop.permute.xlu0 %3300
      %3302 = vrot.lane.b32.xlu0 %v403, 64
      %v3303 = vpop.permute.xlu0 %3302
      %3304 = vrot.lane.b32.xlu0 %v404, 64
      %v3305 = vpop.permute.xlu0 %3304
      %3306 = vrot.lane.b32.xlu0 %v405, 64
      %v3307 = vpop.permute.xlu0 %3306
      %3308 = vrot.lane.b32.xlu0 %v406, 64
      %v3309 = vpop.permute.xlu0 %3308
      %3310 = vrot.lane.b32.xlu0 %v407, 64
      %v3311 = vpop.permute.xlu0 %3310
      %3312 = vrot.lane.b32.xlu0 %v408, 64
      %v3313 = vpop.permute.xlu0 %3312
      %3314 = vrot.lane.b32.xlu0 %v409, 64
      %v3315 = vpop.permute.xlu0 %3314
      %3316 = vrot.lane.b32.xlu0 %v410, 64
      %v3317 = vpop.permute.xlu0 %3316
      %3318 = vrot.lane.b32.xlu0 %v411, 64
      %v3319 = vpop.permute.xlu0 %3318
      %3320 = vrot.lane.b32.xlu0 %v412, 64
      %v3321 = vpop.permute.xlu0 %3320
      %3322 = vrot.lane.b32.xlu0 %v413, 64
      %v3323 = vpop.permute.xlu0 %3322
      %3324 = vrot.lane.b32.xlu0 %v414, 64
      %v3325 = vpop.permute.xlu0 %3324
      %3326 = vrot.lane.b32.xlu0 %v415, 64
      %v3327 = vpop.permute.xlu0 %3326
      %3328 = vrot.lane.b32.xlu0 %v416, 64
      %v3329 = vpop.permute.xlu0 %3328
      %3330 = vrot.lane.b32.xlu0 %v417, 64
      %v3331 = vpop.permute.xlu0 %3330
      %3332 = vrot.lane.b32.xlu0 %v418, 64
      %v3333 = vpop.permute.xlu0 %3332
      %3334 = vrot.lane.b32.xlu0 %v419, 64
      %v3335 = vpop.permute.xlu0 %3334
      %vm3384 = vcmask 556545
      %3385 = vst.msk [vmem:[#allocation2 - $0x1] sm:$0xfe] %vm3384, %v3241
      %vm3386 = vcmask 556544
      %3387 = vst.msk [vmem:[#allocation2 + $0x7] sm:$0xff] %vm3386, %v3243
      %vm3388 = vcmask 549376
      %3389 = vst.msk [vmem:[#allocation2 + $0xf] sm:$0x1] %vm3388, %v3245
      %3390 = vst.msk [vmem:[#allocation2 + $0xf] sm:$0xfe] %vm3384, %v3247
      %3391 = vst.msk [vmem:[#allocation2 + $0x17] sm:$0xff] %vm3386, %v3249
      %3392 = vst.msk [vmem:[#allocation2 + $0x1f] sm:$0x1] %vm3388, %v3251
      %3393 = vst.msk [vmem:[#allocation2 + $0x1f] sm:$0xfe] %vm3384, %v3253
      %3394 = vst.msk [vmem:[#allocation2 + $0x27] sm:$0xff] %vm3386, %v3255
      %3395 = vst.msk [vmem:[#allocation2 + $0x2f] sm:$0x1] %vm3388, %v3257
      %3396 = vst.msk [vmem:[#allocation2 + $0x2f] sm:$0xfe] %vm3384, %v3259
      %3397 = vst.msk [vmem:[#allocation2 + $0x37] sm:$0xff] %vm3386, %v3261
      %3398 = vst.msk [vmem:[#allocation2 + $0x3f] sm:$0x1] %vm3388, %v3263
      %3399 = vst.msk [vmem:[#allocation2 + $0x3f] sm:$0xfe] %vm3384, %v3265
      %3400 = vst.msk [vmem:[#allocation2 + $0x47] sm:$0xff] %vm3386, %v3267
      %3401 = vst.msk [vmem:[#allocation2 + $0x4f] sm:$0x1] %vm3388, %v3269
      %3402 = vst.msk [vmem:[#allocation2 + $0x4f] sm:$0xfe] %vm3384, %v3271
      %3403 = vst.msk [vmem:[#allocation2 + $0x57] sm:$0xff] %vm3386, %v3273
      %3404 = vst.msk [vmem:[#allocation2 + $0x5f] sm:$0x1] %vm3388, %v3275
      %3405 = vst.msk [vmem:[#allocation2 + $0x5f] sm:$0xfe] %vm3384, %v3277
      %3406 = vst.msk [vmem:[#allocation2 + $0x67] sm:$0xff] %vm3386, %v3279
      %3407 = vst.msk [vmem:[#allocation2 + $0x6f] sm:$0x1] %vm3388, %v3281
      %3408 = vst.msk [vmem:[#allocation2 + $0x6f] sm:$0xfe] %vm3384, %v3283
      %3409 = vst.msk [vmem:[#allocation2 + $0x77] sm:$0xff] %vm3386, %v3285
      %3410 = vst.msk [vmem:[#allocation2 + $0x7f] sm:$0x1] %vm3388, %v3287
      %3411 = vst.msk [vmem:[#allocation2 + $0x7f] sm:$0xfe] %vm3384, %v3289
      %3412 = vst.msk [vmem:[#allocation2 + $0x87] sm:$0xff] %vm3386, %v3291
      %3413 = vst.msk [vmem:[#allocation2 + $0x8f] sm:$0x1] %vm3388, %v3293
      %3414 = vst.msk [vmem:[#allocation2 + $0x8f] sm:$0xfe] %vm3384, %v3295
      %3415 = vst.msk [vmem:[#allocation2 + $0x97] sm:$0xff] %vm3386, %v3297
      %3416 = vst.msk [vmem:[#allocation2 + $0x9f] sm:$0x1] %vm3388, %v3299
      %3417 = vst.msk [vmem:[#allocation2 + $0x9f] sm:$0xfe] %vm3384, %v3301
      %3418 = vst.msk [vmem:[#allocation2 + $0xa7] sm:$0xff] %vm3386, %v3303
      %3419 = vst.msk [vmem:[#allocation2 + $0xaf] sm:$0x1] %vm3388, %v3305
      %3420 = vst.msk [vmem:[#allocation2 + $0xaf] sm:$0xfe] %vm3384, %v3307
      %3421 = vst.msk [vmem:[#allocation2 + $0xb7] sm:$0xff] %vm3386, %v3309
      %3422 = vst.msk [vmem:[#allocation2 + $0xbf] sm:$0x1] %vm3388, %v3311
      %3423 = vst.msk [vmem:[#allocation2 + $0xbf] sm:$0xfe] %vm3384, %v3313
      %3424 = vst.msk [vmem:[#allocation2 + $0xc7] sm:$0xff] %vm3386, %v3315
      %3425 = vst.msk [vmem:[#allocation2 + $0xcf] sm:$0x1] %vm3388, %v3317
      %3426 = vst.msk [vmem:[#allocation2 + $0xcf] sm:$0xfe] %vm3384, %v3319
      %3427 = vst.msk [vmem:[#allocation2 + $0xd7] sm:$0xff] %vm3386, %v3321
      %3428 = vst.msk [vmem:[#allocation2 + $0xdf] sm:$0x1] %vm3388, %v3323
      %3429 = vst.msk [vmem:[#allocation2 + $0xdf] sm:$0xfe] %vm3384, %v3325
      %3430 = vst.msk [vmem:[#allocation2 + $0xe7] sm:$0xff] %vm3386, %v3327
      %3431 = vst.msk [vmem:[#allocation2 + $0xef] sm:$0x1] %vm3388, %v3329
      %3432 = vst.msk [vmem:[#allocation2 + $0xef] sm:$0xfe] %vm3384, %v3331
      %3433 = vst.msk [vmem:[#allocation2 + $0xf7] sm:$0xff] %vm3386, %v3333
      %3434 = vst.msk [vmem:[#allocation2 + $0xff] sm:$0x1] %vm3388, %v3335
      %3435 = vrot.lane.b32.xlu0 %v372, 68
      %v3436 = vpop.permute.xlu0 %3435
      %3437 = vrot.lane.b32.xlu0 %v373, 68
      %v3438 = vpop.permute.xlu0 %3437
      %3439 = vrot.lane.b32.xlu0 %v374, 68
      %v3440 = vpop.permute.xlu0 %3439
      %3441 = vrot.lane.b32.xlu0 %v375, 68
      %v3442 = vpop.permute.xlu0 %3441
      %3443 = vrot.lane.b32.xlu0 %v376, 68
      %v3444 = vpop.permute.xlu0 %3443
      %3445 = vrot.lane.b32.xlu0 %v377, 68
      %v3446 = vpop.permute.xlu0 %3445
      %3447 = vrot.lane.b32.xlu0 %v378, 68
      %v3448 = vpop.permute.xlu0 %3447
      %3449 = vrot.lane.b32.xlu0 %v379, 68
      %v3450 = vpop.permute.xlu0 %3449
      %3451 = vrot.lane.b32.xlu0 %v380, 68
      %v3452 = vpop.permute.xlu0 %3451
      %3453 = vrot.lane.b32.xlu0 %v381, 68
      %v3454 = vpop.permute.xlu0 %3453
      %3455 = vrot.lane.b32.xlu0 %v382, 68
      %v3456 = vpop.permute.xlu0 %3455
      %3457 = vrot.lane.b32.xlu0 %v383, 68
      %v3458 = vpop.permute.xlu0 %3457
      %3459 = vrot.lane.b32.xlu0 %v384, 68
      %v3460 = vpop.permute.xlu0 %3459
      %3461 = vrot.lane.b32.xlu0 %v385, 68
      %v3462 = vpop.permute.xlu0 %3461
      %3463 = vrot.lane.b32.xlu0 %v386, 68
      %v3464 = vpop.permute.xlu0 %3463
      %3465 = vrot.lane.b32.xlu0 %v387, 68
      %v3466 = vpop.permute.xlu0 %3465
      %3467 = vrot.lane.b32.xlu0 %v388, 68
      %v3468 = vpop.permute.xlu0 %3467
      %3469 = vrot.lane.b32.xlu0 %v389, 68
      %v3470 = vpop.permute.xlu0 %3469
      %3471 = vrot.lane.b32.xlu0 %v390, 68
      %v3472 = vpop.permute.xlu0 %3471
      %3473 = vrot.lane.b32.xlu0 %v391, 68
      %v3474 = vpop.permute.xlu0 %3473
      %3475 = vrot.lane.b32.xlu0 %v392, 68
      %v3476 = vpop.permute.xlu0 %3475
      %3477 = vrot.lane.b32.xlu0 %v393, 68
      %v3478 = vpop.permute.xlu0 %3477
      %3479 = vrot.lane.b32.xlu0 %v394, 68
      %v3480 = vpop.permute.xlu0 %3479
      %3481 = vrot.lane.b32.xlu0 %v395, 68
      %v3482 = vpop.permute.xlu0 %3481
      %3483 = vrot.lane.b32.xlu0 %v396, 68
      %v3484 = vpop.permute.xlu0 %3483
      %3485 = vrot.lane.b32.xlu0 %v397, 68
      %v3486 = vpop.permute.xlu0 %3485
      %3487 = vrot.lane.b32.xlu0 %v398, 68
      %v3488 = vpop.permute.xlu0 %3487
      %3489 = vrot.lane.b32.xlu0 %v399, 68
      %v3490 = vpop.permute.xlu0 %3489
      %3491 = vrot.lane.b32.xlu0 %v400, 68
      %v3492 = vpop.permute.xlu0 %3491
      %3493 = vrot.lane.b32.xlu0 %v401, 68
      %v3494 = vpop.permute.xlu0 %3493
      %3495 = vrot.lane.b32.xlu0 %v402, 68
      %v3496 = vpop.permute.xlu0 %3495
      %3497 = vrot.lane.b32.xlu0 %v403, 68
      %v3498 = vpop.permute.xlu0 %3497
      %3499 = vrot.lane.b32.xlu0 %v404, 68
      %v3500 = vpop.permute.xlu0 %3499
      %3501 = vrot.lane.b32.xlu0 %v405, 68
      %v3502 = vpop.permute.xlu0 %3501
      %3503 = vrot.lane.b32.xlu0 %v406, 68
      %v3504 = vpop.permute.xlu0 %3503
      %3505 = vrot.lane.b32.xlu0 %v407, 68
      %v3506 = vpop.permute.xlu0 %3505
      %3507 = vrot.lane.b32.xlu0 %v408, 68
      %v3508 = vpop.permute.xlu0 %3507
      %3509 = vrot.lane.b32.xlu0 %v409, 68
      %v3510 = vpop.permute.xlu0 %3509
      %3511 = vrot.lane.b32.xlu0 %v410, 68
      %v3512 = vpop.permute.xlu0 %3511
      %3513 = vrot.lane.b32.xlu0 %v411, 68
      %v3514 = vpop.permute.xlu0 %3513
      %3515 = vrot.lane.b32.xlu0 %v412, 68
      %v3516 = vpop.permute.xlu0 %3515
      %3517 = vrot.lane.b32.xlu0 %v413, 68
      %v3518 = vpop.permute.xlu0 %3517
      %3519 = vrot.lane.b32.xlu0 %v414, 68
      %v3520 = vpop.permute.xlu0 %3519
      %3521 = vrot.lane.b32.xlu0 %v415, 68
      %v3522 = vpop.permute.xlu0 %3521
      %3523 = vrot.lane.b32.xlu0 %v416, 68
      %v3524 = vpop.permute.xlu0 %3523
      %3525 = vrot.lane.b32.xlu0 %v417, 68
      %v3526 = vpop.permute.xlu0 %3525
      %3527 = vrot.lane.b32.xlu0 %v418, 68
      %v3528 = vpop.permute.xlu0 %3527
      %3529 = vrot.lane.b32.xlu0 %v419, 68
      %v3530 = vpop.permute.xlu0 %3529
      %vm3579 = vcmask 589346
      %3580 = vst.msk [vmem:[#allocation2 - $0x2] sm:$0xfc] %vm3579, %v3436
      %vm3581 = vcmask 589344
      %3582 = vst.msk [vmem:[#allocation2 + $0x6] sm:$0xff] %vm3581, %v3438
      %vm3583 = vcmask 583200
      %3584 = vst.msk [vmem:[#allocation2 + $0xe] sm:$0x3] %vm3583, %v3440
      %3585 = vst.msk [vmem:[#allocation2 + $0xe] sm:$0xfc] %vm3579, %v3442
      %3586 = vst.msk [vmem:[#allocation2 + $0x16] sm:$0xff] %vm3581, %v3444
      %3587 = vst.msk [vmem:[#allocation2 + $0x1e] sm:$0x3] %vm3583, %v3446
      %3588 = vst.msk [vmem:[#allocation2 + $0x1e] sm:$0xfc] %vm3579, %v3448
      %3589 = vst.msk [vmem:[#allocation2 + $0x26] sm:$0xff] %vm3581, %v3450
      %3590 = vst.msk [vmem:[#allocation2 + $0x2e] sm:$0x3] %vm3583, %v3452
      %3591 = vst.msk [vmem:[#allocation2 + $0x2e] sm:$0xfc] %vm3579, %v3454
      %3592 = vst.msk [vmem:[#allocation2 + $0x36] sm:$0xff] %vm3581, %v3456
      %3593 = vst.msk [vmem:[#allocation2 + $0x3e] sm:$0x3] %vm3583, %v3458
      %3594 = vst.msk [vmem:[#allocation2 + $0x3e] sm:$0xfc] %vm3579, %v3460
      %3595 = vst.msk [vmem:[#allocation2 + $0x46] sm:$0xff] %vm3581, %v3462
      %3596 = vst.msk [vmem:[#allocation2 + $0x4e] sm:$0x3] %vm3583, %v3464
      %3597 = vst.msk [vmem:[#allocation2 + $0x4e] sm:$0xfc] %vm3579, %v3466
      %3598 = vst.msk [vmem:[#allocation2 + $0x56] sm:$0xff] %vm3581, %v3468
      %3599 = vst.msk [vmem:[#allocation2 + $0x5e] sm:$0x3] %vm3583, %v3470
      %3600 = vst.msk [vmem:[#allocation2 + $0x5e] sm:$0xfc] %vm3579, %v3472
      %3601 = vst.msk [vmem:[#allocation2 + $0x66] sm:$0xff] %vm3581, %v3474
      %3602 = vst.msk [vmem:[#allocation2 + $0x6e] sm:$0x3] %vm3583, %v3476
      %3603 = vst.msk [vmem:[#allocation2 + $0x6e] sm:$0xfc] %vm3579, %v3478
      %3604 = vst.msk [vmem:[#allocation2 + $0x76] sm:$0xff] %vm3581, %v3480
      %3605 = vst.msk [vmem:[#allocation2 + $0x7e] sm:$0x3] %vm3583, %v3482
      %3606 = vst.msk [vmem:[#allocation2 + $0x7e] sm:$0xfc] %vm3579, %v3484
      %3607 = vst.msk [vmem:[#allocation2 + $0x86] sm:$0xff] %vm3581, %v3486
      %3608 = vst.msk [vmem:[#allocation2 + $0x8e] sm:$0x3] %vm3583, %v3488
      %3609 = vst.msk [vmem:[#allocation2 + $0x8e] sm:$0xfc] %vm3579, %v3490
      %3610 = vst.msk [vmem:[#allocation2 + $0x96] sm:$0xff] %vm3581, %v3492
      %3611 = vst.msk [vmem:[#allocation2 + $0x9e] sm:$0x3] %vm3583, %v3494
      %3612 = vst.msk [vmem:[#allocation2 + $0x9e] sm:$0xfc] %vm3579, %v3496
      %3613 = vst.msk [vmem:[#allocation2 + $0xa6] sm:$0xff] %vm3581, %v3498
      %3614 = vst.msk [vmem:[#allocation2 + $0xae] sm:$0x3] %vm3583, %v3500
      %3615 = vst.msk [vmem:[#allocation2 + $0xae] sm:$0xfc] %vm3579, %v3502
      %3616 = vst.msk [vmem:[#allocation2 + $0xb6] sm:$0xff] %vm3581, %v3504
      %3617 = vst.msk [vmem:[#allocation2 + $0xbe] sm:$0x3] %vm3583, %v3506
      %3618 = vst.msk [vmem:[#allocation2 + $0xbe] sm:$0xfc] %vm3579, %v3508
      %3619 = vst.msk [vmem:[#allocation2 + $0xc6] sm:$0xff] %vm3581, %v3510
      %3620 = vst.msk [vmem:[#allocation2 + $0xce] sm:$0x3] %vm3583, %v3512
      %3621 = vst.msk [vmem:[#allocation2 + $0xce] sm:$0xfc] %vm3579, %v3514
      %3622 = vst.msk [vmem:[#allocation2 + $0xd6] sm:$0xff] %vm3581, %v3516
      %3623 = vst.msk [vmem:[#allocation2 + $0xde] sm:$0x3] %vm3583, %v3518
      %3624 = vst.msk [vmem:[#allocation2 + $0xde] sm:$0xfc] %vm3579, %v3520
      %3625 = vst.msk [vmem:[#allocation2 + $0xe6] sm:$0xff] %vm3581, %v3522
      %3626 = vst.msk [vmem:[#allocation2 + $0xee] sm:$0x3] %vm3583, %v3524
      %3627 = vst.msk [vmem:[#allocation2 + $0xee] sm:$0xfc] %vm3579, %v3526
      %3628 = vst.msk [vmem:[#allocation2 + $0xf6] sm:$0xff] %vm3581, %v3528
      %3629 = vst.msk [vmem:[#allocation2 + $0xfe] sm:$0x3] %vm3583, %v3530
      %3630 = vrot.lane.b32.xlu0 %v372, 72
      %v3631 = vpop.permute.xlu0 %3630
      %3632 = vrot.lane.b32.xlu0 %v373, 72
      %v3633 = vpop.permute.xlu0 %3632
      %3634 = vrot.lane.b32.xlu0 %v374, 72
      %v3635 = vpop.permute.xlu0 %3634
      %3636 = vrot.lane.b32.xlu0 %v375, 72
      %v3637 = vpop.permute.xlu0 %3636
      %3638 = vrot.lane.b32.xlu0 %v376, 72
      %v3639 = vpop.permute.xlu0 %3638
      %3640 = vrot.lane.b32.xlu0 %v377, 72
      %v3641 = vpop.permute.xlu0 %3640
      %3642 = vrot.lane.b32.xlu0 %v378, 72
      %v3643 = vpop.permute.xlu0 %3642
      %3644 = vrot.lane.b32.xlu0 %v379, 72
      %v3645 = vpop.permute.xlu0 %3644
      %3646 = vrot.lane.b32.xlu0 %v380, 72
      %v3647 = vpop.permute.xlu0 %3646
      %3648 = vrot.lane.b32.xlu0 %v381, 72
      %v3649 = vpop.permute.xlu0 %3648
      %3650 = vrot.lane.b32.xlu0 %v382, 72
      %v3651 = vpop.permute.xlu0 %3650
      %3652 = vrot.lane.b32.xlu0 %v383, 72
      %v3653 = vpop.permute.xlu0 %3652
      %3654 = vrot.lane.b32.xlu0 %v384, 72
      %v3655 = vpop.permute.xlu0 %3654
      %3656 = vrot.lane.b32.xlu0 %v385, 72
      %v3657 = vpop.permute.xlu0 %3656
      %3658 = vrot.lane.b32.xlu0 %v386, 72
      %v3659 = vpop.permute.xlu0 %3658
      %3660 = vrot.lane.b32.xlu0 %v387, 72
      %v3661 = vpop.permute.xlu0 %3660
      %3662 = vrot.lane.b32.xlu0 %v388, 72
      %v3663 = vpop.permute.xlu0 %3662
      %3664 = vrot.lane.b32.xlu0 %v389, 72
      %v3665 = vpop.permute.xlu0 %3664
      %3666 = vrot.lane.b32.xlu0 %v390, 72
      %v3667 = vpop.permute.xlu0 %3666
      %3668 = vrot.lane.b32.xlu0 %v391, 72
      %v3669 = vpop.permute.xlu0 %3668
      %3670 = vrot.lane.b32.xlu0 %v392, 72
      %v3671 = vpop.permute.xlu0 %3670
      %3672 = vrot.lane.b32.xlu0 %v393, 72
      %v3673 = vpop.permute.xlu0 %3672
      %3674 = vrot.lane.b32.xlu0 %v394, 72
      %v3675 = vpop.permute.xlu0 %3674
      %3676 = vrot.lane.b32.xlu0 %v395, 72
      %v3677 = vpop.permute.xlu0 %3676
      %3678 = vrot.lane.b32.xlu0 %v396, 72
      %v3679 = vpop.permute.xlu0 %3678
      %3680 = vrot.lane.b32.xlu0 %v397, 72
      %v3681 = vpop.permute.xlu0 %3680
      %3682 = vrot.lane.b32.xlu0 %v398, 72
      %v3683 = vpop.permute.xlu0 %3682
      %3684 = vrot.lane.b32.xlu0 %v399, 72
      %v3685 = vpop.permute.xlu0 %3684
      %3686 = vrot.lane.b32.xlu0 %v400, 72
      %v3687 = vpop.permute.xlu0 %3686
      %3688 = vrot.lane.b32.xlu0 %v401, 72
      %v3689 = vpop.permute.xlu0 %3688
      %3690 = vrot.lane.b32.xlu0 %v402, 72
      %v3691 = vpop.permute.xlu0 %3690
      %3692 = vrot.lane.b32.xlu0 %v403, 72
      %v3693 = vpop.permute.xlu0 %3692
      %3694 = vrot.lane.b32.xlu0 %v404, 72
      %v3695 = vpop.permute.xlu0 %3694
      %3696 = vrot.lane.b32.xlu0 %v405, 72
      %v3697 = vpop.permute.xlu0 %3696
      %3698 = vrot.lane.b32.xlu0 %v406, 72
      %v3699 = vpop.permute.xlu0 %3698
      %3700 = vrot.lane.b32.xlu0 %v407, 72
      %v3701 = vpop.permute.xlu0 %3700
      %3702 = vrot.lane.b32.xlu0 %v408, 72
      %v3703 = vpop.permute.xlu0 %3702
      %3704 = vrot.lane.b32.xlu0 %v409, 72
      %v3705 = vpop.permute.xlu0 %3704
      %3706 = vrot.lane.b32.xlu0 %v410, 72
      %v3707 = vpop.permute.xlu0 %3706
      %3708 = vrot.lane.b32.xlu0 %v411, 72
      %v3709 = vpop.permute.xlu0 %3708
      %3710 = vrot.lane.b32.xlu0 %v412, 72
      %v3711 = vpop.permute.xlu0 %3710
      %3712 = vrot.lane.b32.xlu0 %v413, 72
      %v3713 = vpop.permute.xlu0 %3712
      %3714 = vrot.lane.b32.xlu0 %v414, 72
      %v3715 = vpop.permute.xlu0 %3714
      %3716 = vrot.lane.b32.xlu0 %v415, 72
      %v3717 = vpop.permute.xlu0 %3716
      %3718 = vrot.lane.b32.xlu0 %v416, 72
      %v3719 = vpop.permute.xlu0 %3718
      %3720 = vrot.lane.b32.xlu0 %v417, 72
      %v3721 = vpop.permute.xlu0 %3720
      %3722 = vrot.lane.b32.xlu0 %v418, 72
      %v3723 = vpop.permute.xlu0 %3722
      %3724 = vrot.lane.b32.xlu0 %v419, 72
      %v3725 = vpop.permute.xlu0 %3724
      %vm3774 = vcmask 622147
      %3775 = vst.msk [vmem:[#allocation2 - $0x3] sm:$0xf8] %vm3774, %v3631
      %vm3776 = vcmask 622144
      %3777 = vst.msk [vmem:[#allocation2 + $0x5] sm:$0xff] %vm3776, %v3633
      %vm3778 = vcmask 617024
      %3779 = vst.msk [vmem:[#allocation2 + $0xd] sm:$0x7] %vm3778, %v3635
      %3780 = vst.msk [vmem:[#allocation2 + $0xd] sm:$0xf8] %vm3774, %v3637
      %3781 = vst.msk [vmem:[#allocation2 + $0x15] sm:$0xff] %vm3776, %v3639
      %3782 = vst.msk [vmem:[#allocation2 + $0x1d] sm:$0x7] %vm3778, %v3641
      %3783 = vst.msk [vmem:[#allocation2 + $0x1d] sm:$0xf8] %vm3774, %v3643
      %3784 = vst.msk [vmem:[#allocation2 + $0x25] sm:$0xff] %vm3776, %v3645
      %3785 = vst.msk [vmem:[#allocation2 + $0x2d] sm:$0x7] %vm3778, %v3647
      %3786 = vst.msk [vmem:[#allocation2 + $0x2d] sm:$0xf8] %vm3774, %v3649
      %3787 = vst.msk [vmem:[#allocation2 + $0x35] sm:$0xff] %vm3776, %v3651
      %3788 = vst.msk [vmem:[#allocation2 + $0x3d] sm:$0x7] %vm3778, %v3653
      %3789 = vst.msk [vmem:[#allocation2 + $0x3d] sm:$0xf8] %vm3774, %v3655
      %3790 = vst.msk [vmem:[#allocation2 + $0x45] sm:$0xff] %vm3776, %v3657
      %3791 = vst.msk [vmem:[#allocation2 + $0x4d] sm:$0x7] %vm3778, %v3659
      %3792 = vst.msk [vmem:[#allocation2 + $0x4d] sm:$0xf8] %vm3774, %v3661
      %3793 = vst.msk [vmem:[#allocation2 + $0x55] sm:$0xff] %vm3776, %v3663
      %3794 = vst.msk [vmem:[#allocation2 + $0x5d] sm:$0x7] %vm3778, %v3665
      %3795 = vst.msk [vmem:[#allocation2 + $0x5d] sm:$0xf8] %vm3774, %v3667
      %3796 = vst.msk [vmem:[#allocation2 + $0x65] sm:$0xff] %vm3776, %v3669
      %3797 = vst.msk [vmem:[#allocation2 + $0x6d] sm:$0x7] %vm3778, %v3671
      %3798 = vst.msk [vmem:[#allocation2 + $0x6d] sm:$0xf8] %vm3774, %v3673
      %3799 = vst.msk [vmem:[#allocation2 + $0x75] sm:$0xff] %vm3776, %v3675
      %3800 = vst.msk [vmem:[#allocation2 + $0x7d] sm:$0x7] %vm3778, %v3677
      %3801 = vst.msk [vmem:[#allocation2 + $0x7d] sm:$0xf8] %vm3774, %v3679
      %3802 = vst.msk [vmem:[#allocation2 + $0x85] sm:$0xff] %vm3776, %v3681
      %3803 = vst.msk [vmem:[#allocation2 + $0x8d] sm:$0x7] %vm3778, %v3683
      %3804 = vst.msk [vmem:[#allocation2 + $0x8d] sm:$0xf8] %vm3774, %v3685
      %3805 = vst.msk [vmem:[#allocation2 + $0x95] sm:$0xff] %vm3776, %v3687
      %3806 = vst.msk [vmem:[#allocation2 + $0x9d] sm:$0x7] %vm3778, %v3689
      %3807 = vst.msk [vmem:[#allocation2 + $0x9d] sm:$0xf8] %vm3774, %v3691
      %3808 = vst.msk [vmem:[#allocation2 + $0xa5] sm:$0xff] %vm3776, %v3693
      %3809 = vst.msk [vmem:[#allocation2 + $0xad] sm:$0x7] %vm3778, %v3695
      %3810 = vst.msk [vmem:[#allocation2 + $0xad] sm:$0xf8] %vm3774, %v3697
      %3811 = vst.msk [vmem:[#allocation2 + $0xb5] sm:$0xff] %vm3776, %v3699
      %3812 = vst.msk [vmem:[#allocation2 + $0xbd] sm:$0x7] %vm3778, %v3701
      %3813 = vst.msk [vmem:[#allocation2 + $0xbd] sm:$0xf8] %vm3774, %v3703
      %3814 = vst.msk [vmem:[#allocation2 + $0xc5] sm:$0xff] %vm3776, %v3705
      %3815 = vst.msk [vmem:[#allocation2 + $0xcd] sm:$0x7] %vm3778, %v3707
      %3816 = vst.msk [vmem:[#allocation2 + $0xcd] sm:$0xf8] %vm3774, %v3709
      %3817 = vst.msk [vmem:[#allocation2 + $0xd5] sm:$0xff] %vm3776, %v3711
      %3818 = vst.msk [vmem:[#allocation2 + $0xdd] sm:$0x7] %vm3778, %v3713
      %3819 = vst.msk [vmem:[#allocation2 + $0xdd] sm:$0xf8] %vm3774, %v3715
      %3820 = vst.msk [vmem:[#allocation2 + $0xe5] sm:$0xff] %vm3776, %v3717
      %3821 = vst.msk [vmem:[#allocation2 + $0xed] sm:$0x7] %vm3778, %v3719
      %3822 = vst.msk [vmem:[#allocation2 + $0xed] sm:$0xf8] %vm3774, %v3721
      %3823 = vst.msk [vmem:[#allocation2 + $0xf5] sm:$0xff] %vm3776, %v3723
      %3824 = vst.msk [vmem:[#allocation2 + $0xfd] sm:$0x7] %vm3778, %v3725
      %3825 = vrot.lane.b32.xlu0 %v372, 76
      %v3826 = vpop.permute.xlu0 %3825
      %3827 = vrot.lane.b32.xlu0 %v373, 76
      %v3828 = vpop.permute.xlu0 %3827
      %3829 = vrot.lane.b32.xlu0 %v374, 76
      %v3830 = vpop.permute.xlu0 %3829
      %3831 = vrot.lane.b32.xlu0 %v375, 76
      %v3832 = vpop.permute.xlu0 %3831
      %3833 = vrot.lane.b32.xlu0 %v376, 76
      %v3834 = vpop.permute.xlu0 %3833
      %3835 = vrot.lane.b32.xlu0 %v377, 76
      %v3836 = vpop.permute.xlu0 %3835
      %3837 = vrot.lane.b32.xlu0 %v378, 76
      %v3838 = vpop.permute.xlu0 %3837
      %3839 = vrot.lane.b32.xlu0 %v379, 76
      %v3840 = vpop.permute.xlu0 %3839
      %3841 = vrot.lane.b32.xlu0 %v380, 76
      %v3842 = vpop.permute.xlu0 %3841
      %3843 = vrot.lane.b32.xlu0 %v381, 76
      %v3844 = vpop.permute.xlu0 %3843
      %3845 = vrot.lane.b32.xlu0 %v382, 76
      %v3846 = vpop.permute.xlu0 %3845
      %3847 = vrot.lane.b32.xlu0 %v383, 76
      %v3848 = vpop.permute.xlu0 %3847
      %3849 = vrot.lane.b32.xlu0 %v384, 76
      %v3850 = vpop.permute.xlu0 %3849
      %3851 = vrot.lane.b32.xlu0 %v385, 76
      %v3852 = vpop.permute.xlu0 %3851
      %3853 = vrot.lane.b32.xlu0 %v386, 76
      %v3854 = vpop.permute.xlu0 %3853
      %3855 = vrot.lane.b32.xlu0 %v387, 76
      %v3856 = vpop.permute.xlu0 %3855
      %3857 = vrot.lane.b32.xlu0 %v388, 76
      %v3858 = vpop.permute.xlu0 %3857
      %3859 = vrot.lane.b32.xlu0 %v389, 76
      %v3860 = vpop.permute.xlu0 %3859
      %3861 = vrot.lane.b32.xlu0 %v390, 76
      %v3862 = vpop.permute.xlu0 %3861
      %3863 = vrot.lane.b32.xlu0 %v391, 76
      %v3864 = vpop.permute.xlu0 %3863
      %3865 = vrot.lane.b32.xlu0 %v392, 76
      %v3866 = vpop.permute.xlu0 %3865
      %3867 = vrot.lane.b32.xlu0 %v393, 76
      %v3868 = vpop.permute.xlu0 %3867
      %3869 = vrot.lane.b32.xlu0 %v394, 76
      %v3870 = vpop.permute.xlu0 %3869
      %3871 = vrot.lane.b32.xlu0 %v395, 76
      %v3872 = vpop.permute.xlu0 %3871
      %3873 = vrot.lane.b32.xlu0 %v396, 76
      %v3874 = vpop.permute.xlu0 %3873
      %3875 = vrot.lane.b32.xlu0 %v397, 76
      %v3876 = vpop.permute.xlu0 %3875
      %3877 = vrot.lane.b32.xlu0 %v398, 76
      %v3878 = vpop.permute.xlu0 %3877
      %3879 = vrot.lane.b32.xlu0 %v399, 76
      %v3880 = vpop.permute.xlu0 %3879
      %3881 = vrot.lane.b32.xlu0 %v400, 76
      %v3882 = vpop.permute.xlu0 %3881
      %3883 = vrot.lane.b32.xlu0 %v401, 76
      %v3884 = vpop.permute.xlu0 %3883
      %3885 = vrot.lane.b32.xlu0 %v402, 76
      %v3886 = vpop.permute.xlu0 %3885
      %3887 = vrot.lane.b32.xlu0 %v403, 76
      %v3888 = vpop.permute.xlu0 %3887
      %3889 = vrot.lane.b32.xlu0 %v404, 76
      %v3890 = vpop.permute.xlu0 %3889
      %3891 = vrot.lane.b32.xlu0 %v405, 76
      %v3892 = vpop.permute.xlu0 %3891
      %3893 = vrot.lane.b32.xlu0 %v406, 76
      %v3894 = vpop.permute.xlu0 %3893
      %3895 = vrot.lane.b32.xlu0 %v407, 76
      %v3896 = vpop.permute.xlu0 %3895
      %3897 = vrot.lane.b32.xlu0 %v408, 76
      %v3898 = vpop.permute.xlu0 %3897
      %3899 = vrot.lane.b32.xlu0 %v409, 76
      %v3900 = vpop.permute.xlu0 %3899
      %3901 = vrot.lane.b32.xlu0 %v410, 76
      %v3902 = vpop.permute.xlu0 %3901
      %3903 = vrot.lane.b32.xlu0 %v411, 76
      %v3904 = vpop.permute.xlu0 %3903
      %3905 = vrot.lane.b32.xlu0 %v412, 76
      %v3906 = vpop.permute.xlu0 %3905
      %3907 = vrot.lane.b32.xlu0 %v413, 76
      %v3908 = vpop.permute.xlu0 %3907
      %3909 = vrot.lane.b32.xlu0 %v414, 76
      %v3910 = vpop.permute.xlu0 %3909
      %3911 = vrot.lane.b32.xlu0 %v415, 76
      %v3912 = vpop.permute.xlu0 %3911
      %3913 = vrot.lane.b32.xlu0 %v416, 76
      %v3914 = vpop.permute.xlu0 %3913
      %3915 = vrot.lane.b32.xlu0 %v417, 76
      %v3916 = vpop.permute.xlu0 %3915
      %3917 = vrot.lane.b32.xlu0 %v418, 76
      %v3918 = vpop.permute.xlu0 %3917
      %3919 = vrot.lane.b32.xlu0 %v419, 76
      %v3920 = vpop.permute.xlu0 %3919
      %vm3969 = vcmask 654948
      %3970 = vst.msk [vmem:[#allocation2 - $0x4] sm:$0xf0] %vm3969, %v3826
      %vm3971 = vcmask 654944
      %3972 = vst.msk [vmem:[#allocation2 + $0x4] sm:$0xff] %vm3971, %v3828
      %vm3973 = vcmask 650848
      %3974 = vst.msk [vmem:[#allocation2 + $0xc] sm:$0xf] %vm3973, %v3830
      %3975 = vst.msk [vmem:[#allocation2 + $0xc] sm:$0xf0] %vm3969, %v3832
      %3976 = vst.msk [vmem:[#allocation2 + $0x14] sm:$0xff] %vm3971, %v3834
      %3977 = vst.msk [vmem:[#allocation2 + $0x1c] sm:$0xf] %vm3973, %v3836
      %3978 = vst.msk [vmem:[#allocation2 + $0x1c] sm:$0xf0] %vm3969, %v3838
      %3979 = vst.msk [vmem:[#allocation2 + $0x24] sm:$0xff] %vm3971, %v3840
      %3980 = vst.msk [vmem:[#allocation2 + $0x2c] sm:$0xf] %vm3973, %v3842
      %3981 = vst.msk [vmem:[#allocation2 + $0x2c] sm:$0xf0] %vm3969, %v3844
      %3982 = vst.msk [vmem:[#allocation2 + $0x34] sm:$0xff] %vm3971, %v3846
      %3983 = vst.msk [vmem:[#allocation2 + $0x3c] sm:$0xf] %vm3973, %v3848
      %3984 = vst.msk [vmem:[#allocation2 + $0x3c] sm:$0xf0] %vm3969, %v3850
      %3985 = vst.msk [vmem:[#allocation2 + $0x44] sm:$0xff] %vm3971, %v3852
      %3986 = vst.msk [vmem:[#allocation2 + $0x4c] sm:$0xf] %vm3973, %v3854
      %3987 = vst.msk [vmem:[#allocation2 + $0x4c] sm:$0xf0] %vm3969, %v3856
      %3988 = vst.msk [vmem:[#allocation2 + $0x54] sm:$0xff] %vm3971, %v3858
      %3989 = vst.msk [vmem:[#allocation2 + $0x5c] sm:$0xf] %vm3973, %v3860
      %3990 = vst.msk [vmem:[#allocation2 + $0x5c] sm:$0xf0] %vm3969, %v3862
      %3991 = vst.msk [vmem:[#allocation2 + $0x64] sm:$0xff] %vm3971, %v3864
      %3992 = vst.msk [vmem:[#allocation2 + $0x6c] sm:$0xf] %vm3973, %v3866
      %3993 = vst.msk [vmem:[#allocation2 + $0x6c] sm:$0xf0] %vm3969, %v3868
      %3994 = vst.msk [vmem:[#allocation2 + $0x74] sm:$0xff] %vm3971, %v3870
      %3995 = vst.msk [vmem:[#allocation2 + $0x7c] sm:$0xf] %vm3973, %v3872
      %3996 = vst.msk [vmem:[#allocation2 + $0x7c] sm:$0xf0] %vm3969, %v3874
      %3997 = vst.msk [vmem:[#allocation2 + $0x84] sm:$0xff] %vm3971, %v3876
      %3998 = vst.msk [vmem:[#allocation2 + $0x8c] sm:$0xf] %vm3973, %v3878
      %3999 = vst.msk [vmem:[#allocation2 + $0x8c] sm:$0xf0] %vm3969, %v3880
      %4000 = vst.msk [vmem:[#allocation2 + $0x94] sm:$0xff] %vm3971, %v3882
      %4001 = vst.msk [vmem:[#allocation2 + $0x9c] sm:$0xf] %vm3973, %v3884
      %4002 = vst.msk [vmem:[#allocation2 + $0x9c] sm:$0xf0] %vm3969, %v3886
      %4003 = vst.msk [vmem:[#allocation2 + $0xa4] sm:$0xff] %vm3971, %v3888
      %4004 = vst.msk [vmem:[#allocation2 + $0xac] sm:$0xf] %vm3973, %v3890
      %4005 = vst.msk [vmem:[#allocation2 + $0xac] sm:$0xf0] %vm3969, %v3892
      %4006 = vst.msk [vmem:[#allocation2 + $0xb4] sm:$0xff] %vm3971, %v3894
      %4007 = vst.msk [vmem:[#allocation2 + $0xbc] sm:$0xf] %vm3973, %v3896
      %4008 = vst.msk [vmem:[#allocation2 + $0xbc] sm:$0xf0] %vm3969, %v3898
      %4009 = vst.msk [vmem:[#allocation2 + $0xc4] sm:$0xff] %vm3971, %v3900
      %4010 = vst.msk [vmem:[#allocation2 + $0xcc] sm:$0xf] %vm3973, %v3902
      %4011 = vst.msk [vmem:[#allocation2 + $0xcc] sm:$0xf0] %vm3969, %v3904
      %4012 = vst.msk [vmem:[#allocation2 + $0xd4] sm:$0xff] %vm3971, %v3906
      %4013 = vst.msk [vmem:[#allocation2 + $0xdc] sm:$0xf] %vm3973, %v3908
      %4014 = vst.msk [vmem:[#allocation2 + $0xdc] sm:$0xf0] %vm3969, %v3910
      %4015 = vst.msk [vmem:[#allocation2 + $0xe4] sm:$0xff] %vm3971, %v3912
      %4016 = vst.msk [vmem:[#allocation2 + $0xec] sm:$0xf] %vm3973, %v3914
      %4017 = vst.msk [vmem:[#allocation2 + $0xec] sm:$0xf0] %vm3969, %v3916
      %4018 = vst.msk [vmem:[#allocation2 + $0xf4] sm:$0xff] %vm3971, %v3918
      %4019 = vst.msk [vmem:[#allocation2 + $0xfc] sm:$0xf] %vm3973, %v3920
      %4022 = vrot.lane.b32.xlu0 %v375, 80
      %v4023 = vpop.permute.xlu0 %4022
      %4024 = vrot.lane.b32.xlu0 %v376, 80
      %v4025 = vpop.permute.xlu0 %4024
      %4026 = vrot.lane.b32.xlu0 %v378, 80
      %v4027 = vpop.permute.xlu0 %4026
      %4028 = vrot.lane.b32.xlu0 %v379, 80
      %v4029 = vpop.permute.xlu0 %4028
      %4030 = vrot.lane.b32.xlu0 %v381, 80
      %v4031 = vpop.permute.xlu0 %4030
      %4032 = vrot.lane.b32.xlu0 %v382, 80
      %v4033 = vpop.permute.xlu0 %4032
      %4034 = vrot.lane.b32.xlu0 %v384, 80
      %v4035 = vpop.permute.xlu0 %4034
      %4036 = vrot.lane.b32.xlu0 %v385, 80
      %v4037 = vpop.permute.xlu0 %4036
      %4038 = vrot.lane.b32.xlu0 %v387, 80
      %v4039 = vpop.permute.xlu0 %4038
      %4040 = vrot.lane.b32.xlu0 %v388, 80
      %v4041 = vpop.permute.xlu0 %4040
      %4042 = vrot.lane.b32.xlu0 %v390, 80
      %v4043 = vpop.permute.xlu0 %4042
      %4044 = vrot.lane.b32.xlu0 %v391, 80
      %v4045 = vpop.permute.xlu0 %4044
      %4046 = vrot.lane.b32.xlu0 %v393, 80
      %v4047 = vpop.permute.xlu0 %4046
      %4048 = vrot.lane.b32.xlu0 %v394, 80
      %v4049 = vpop.permute.xlu0 %4048
      %4050 = vrot.lane.b32.xlu0 %v396, 80
      %v4051 = vpop.permute.xlu0 %4050
      %4052 = vrot.lane.b32.xlu0 %v397, 80
      %v4053 = vpop.permute.xlu0 %4052
      %4054 = vrot.lane.b32.xlu0 %v399, 80
      %v4055 = vpop.permute.xlu0 %4054
      %4056 = vrot.lane.b32.xlu0 %v400, 80
      %v4057 = vpop.permute.xlu0 %4056
      %4058 = vrot.lane.b32.xlu0 %v402, 80
      %v4059 = vpop.permute.xlu0 %4058
      %4060 = vrot.lane.b32.xlu0 %v403, 80
      %v4061 = vpop.permute.xlu0 %4060
      %4062 = vrot.lane.b32.xlu0 %v405, 80
      %v4063 = vpop.permute.xlu0 %4062
      %4064 = vrot.lane.b32.xlu0 %v406, 80
      %v4065 = vpop.permute.xlu0 %4064
      %4066 = vrot.lane.b32.xlu0 %v408, 80
      %v4067 = vpop.permute.xlu0 %4066
      %4068 = vrot.lane.b32.xlu0 %v409, 80
      %v4069 = vpop.permute.xlu0 %4068
      %4070 = vrot.lane.b32.xlu0 %v411, 80
      %v4071 = vpop.permute.xlu0 %4070
      %4072 = vrot.lane.b32.xlu0 %v412, 80
      %v4073 = vpop.permute.xlu0 %4072
      %4074 = vrot.lane.b32.xlu0 %v414, 80
      %v4075 = vpop.permute.xlu0 %4074
      %4076 = vrot.lane.b32.xlu0 %v415, 80
      %v4077 = vpop.permute.xlu0 %4076
      %4078 = vrot.lane.b32.xlu0 %v417, 80
      %v4079 = vpop.permute.xlu0 %4078
      %4080 = vrot.lane.b32.xlu0 %v418, 80
      %v4081 = vpop.permute.xlu0 %4080
      %4082 = vrot.lane.b32.xlu0 %v420, 80
      %v4083 = vpop.permute.xlu0 %4082
      %4084 = vrot.lane.b32.xlu0 %v421, 80
      %v4085 = vpop.permute.xlu0 %4084
      %vm4118 = vcmask 687744
      %4119 = vst.msk [vmem:[#allocation2] sm:$0xff] %vm4118, %v4023
      %4120 = vst.msk [vmem:[#allocation2 + $0x8] sm:$0xff] %vm4118, %v4025
      %4121 = vst.msk [vmem:[#allocation2 + $0x10] sm:$0xff] %vm4118, %v4027
      %4122 = vst.msk [vmem:[#allocation2 + $0x18] sm:$0xff] %vm4118, %v4029
      %4123 = vst.msk [vmem:[#allocation2 + $0x20] sm:$0xff] %vm4118, %v4031
      %4124 = vst.msk [vmem:[#allocation2 + $0x28] sm:$0xff] %vm4118, %v4033
      %4125 = vst.msk [vmem:[#allocation2 + $0x30] sm:$0xff] %vm4118, %v4035
      %4126 = vst.msk [vmem:[#allocation2 + $0x38] sm:$0xff] %vm4118, %v4037
      %4127 = vst.msk [vmem:[#allocation2 + $0x40] sm:$0xff] %vm4118, %v4039
      %4128 = vst.msk [vmem:[#allocation2 + $0x48] sm:$0xff] %vm4118, %v4041
      %4129 = vst.msk [vmem:[#allocation2 + $0x50] sm:$0xff] %vm4118, %v4043
      %4130 = vst.msk [vmem:[#allocation2 + $0x58] sm:$0xff] %vm4118, %v4045
      %4131 = vst.msk [vmem:[#allocation2 + $0x60] sm:$0xff] %vm4118, %v4047
      %4132 = vst.msk [vmem:[#allocation2 + $0x68] sm:$0xff] %vm4118, %v4049
      %4133 = vst.msk [vmem:[#allocation2 + $0x70] sm:$0xff] %vm4118, %v4051
      %4134 = vst.msk [vmem:[#allocation2 + $0x78] sm:$0xff] %vm4118, %v4053
      %4135 = vst.msk [vmem:[#allocation2 + $0x80] sm:$0xff] %vm4118, %v4055
      %4136 = vst.msk [vmem:[#allocation2 + $0x88] sm:$0xff] %vm4118, %v4057
      %4137 = vst.msk [vmem:[#allocation2 + $0x90] sm:$0xff] %vm4118, %v4059
      %4138 = vst.msk [vmem:[#allocation2 + $0x98] sm:$0xff] %vm4118, %v4061
      %4139 = vst.msk [vmem:[#allocation2 + $0xa0] sm:$0xff] %vm4118, %v4063
      %4140 = vst.msk [vmem:[#allocation2 + $0xa8] sm:$0xff] %vm4118, %v4065
      %4141 = vst.msk [vmem:[#allocation2 + $0xb0] sm:$0xff] %vm4118, %v4067
      %4142 = vst.msk [vmem:[#allocation2 + $0xb8] sm:$0xff] %vm4118, %v4069
      %4143 = vst.msk [vmem:[#allocation2 + $0xc0] sm:$0xff] %vm4118, %v4071
      %4144 = vst.msk [vmem:[#allocation2 + $0xc8] sm:$0xff] %vm4118, %v4073
      %4145 = vst.msk [vmem:[#allocation2 + $0xd0] sm:$0xff] %vm4118, %v4075
      %4146 = vst.msk [vmem:[#allocation2 + $0xd8] sm:$0xff] %vm4118, %v4077
      %4147 = vst.msk [vmem:[#allocation2 + $0xe0] sm:$0xff] %vm4118, %v4079
      %4148 = vst.msk [vmem:[#allocation2 + $0xe8] sm:$0xff] %vm4118, %v4081
      %4149 = vst.msk [vmem:[#allocation2 + $0xf0] sm:$0xff] %vm4118, %v4083
      %4150 = vst.msk [vmem:[#allocation2 + $0xf8] sm:$0xff] %vm4118, %v4085
      %4152 = vrot.lane.b32.xlu0 %v375, 84
      %v4153 = vpop.permute.xlu0 %4152
      %4154 = vrot.lane.b32.xlu0 %v376, 84
      %v4155 = vpop.permute.xlu0 %4154
      %4156 = vrot.lane.b32.xlu0 %v377, 84
      %v4157 = vpop.permute.xlu0 %4156
      %4158 = vrot.lane.b32.xlu0 %v378, 84
      %v4159 = vpop.permute.xlu0 %4158
      %4160 = vrot.lane.b32.xlu0 %v379, 84
      %v4161 = vpop.permute.xlu0 %4160
      %4162 = vrot.lane.b32.xlu0 %v380, 84
      %v4163 = vpop.permute.xlu0 %4162
      %4164 = vrot.lane.b32.xlu0 %v381, 84
      %v4165 = vpop.permute.xlu0 %4164
      %4166 = vrot.lane.b32.xlu0 %v382, 84
      %v4167 = vpop.permute.xlu0 %4166
      %4168 = vrot.lane.b32.xlu0 %v383, 84
      %v4169 = vpop.permute.xlu0 %4168
      %4170 = vrot.lane.b32.xlu0 %v384, 84
      %v4171 = vpop.permute.xlu0 %4170
      %4172 = vrot.lane.b32.xlu0 %v385, 84
      %v4173 = vpop.permute.xlu0 %4172
      %4174 = vrot.lane.b32.xlu0 %v386, 84
      %v4175 = vpop.permute.xlu0 %4174
      %4176 = vrot.lane.b32.xlu0 %v387, 84
      %v4177 = vpop.permute.xlu0 %4176
      %4178 = vrot.lane.b32.xlu0 %v388, 84
      %v4179 = vpop.permute.xlu0 %4178
      %4180 = vrot.lane.b32.xlu0 %v389, 84
      %v4181 = vpop.permute.xlu0 %4180
      %4182 = vrot.lane.b32.xlu0 %v390, 84
      %v4183 = vpop.permute.xlu0 %4182
      %4184 = vrot.lane.b32.xlu0 %v391, 84
      %v4185 = vpop.permute.xlu0 %4184
      %4186 = vrot.lane.b32.xlu0 %v392, 84
      %v4187 = vpop.permute.xlu0 %4186
      %4188 = vrot.lane.b32.xlu0 %v393, 84
      %v4189 = vpop.permute.xlu0 %4188
      %4190 = vrot.lane.b32.xlu0 %v394, 84
      %v4191 = vpop.permute.xlu0 %4190
      %4192 = vrot.lane.b32.xlu0 %v395, 84
      %v4193 = vpop.permute.xlu0 %4192
      %4194 = vrot.lane.b32.xlu0 %v396, 84
      %v4195 = vpop.permute.xlu0 %4194
      %4196 = vrot.lane.b32.xlu0 %v397, 84
      %v4197 = vpop.permute.xlu0 %4196
      %4198 = vrot.lane.b32.xlu0 %v398, 84
      %v4199 = vpop.permute.xlu0 %4198
      %4200 = vrot.lane.b32.xlu0 %v399, 84
      %v4201 = vpop.permute.xlu0 %4200
      %4202 = vrot.lane.b32.xlu0 %v400, 84
      %v4203 = vpop.permute.xlu0 %4202
      %4204 = vrot.lane.b32.xlu0 %v401, 84
      %v4205 = vpop.permute.xlu0 %4204
      %4206 = vrot.lane.b32.xlu0 %v402, 84
      %v4207 = vpop.permute.xlu0 %4206
      %4208 = vrot.lane.b32.xlu0 %v403, 84
      %v4209 = vpop.permute.xlu0 %4208
      %4210 = vrot.lane.b32.xlu0 %v404, 84
      %v4211 = vpop.permute.xlu0 %4210
      %4212 = vrot.lane.b32.xlu0 %v405, 84
      %v4213 = vpop.permute.xlu0 %4212
      %4214 = vrot.lane.b32.xlu0 %v406, 84
      %v4215 = vpop.permute.xlu0 %4214
      %4216 = vrot.lane.b32.xlu0 %v407, 84
      %v4217 = vpop.permute.xlu0 %4216
      %4218 = vrot.lane.b32.xlu0 %v408, 84
      %v4219 = vpop.permute.xlu0 %4218
      %4220 = vrot.lane.b32.xlu0 %v409, 84
      %v4221 = vpop.permute.xlu0 %4220
      %4222 = vrot.lane.b32.xlu0 %v410, 84
      %v4223 = vpop.permute.xlu0 %4222
      %4224 = vrot.lane.b32.xlu0 %v411, 84
      %v4225 = vpop.permute.xlu0 %4224
      %4226 = vrot.lane.b32.xlu0 %v412, 84
      %v4227 = vpop.permute.xlu0 %4226
      %4228 = vrot.lane.b32.xlu0 %v413, 84
      %v4229 = vpop.permute.xlu0 %4228
      %4230 = vrot.lane.b32.xlu0 %v414, 84
      %v4231 = vpop.permute.xlu0 %4230
      %4232 = vrot.lane.b32.xlu0 %v415, 84
      %v4233 = vpop.permute.xlu0 %4232
      %4234 = vrot.lane.b32.xlu0 %v416, 84
      %v4235 = vpop.permute.xlu0 %4234
      %4236 = vrot.lane.b32.xlu0 %v417, 84
      %v4237 = vpop.permute.xlu0 %4236
      %4238 = vrot.lane.b32.xlu0 %v418, 84
      %v4239 = vpop.permute.xlu0 %4238
      %4240 = vrot.lane.b32.xlu0 %v419, 84
      %v4241 = vpop.permute.xlu0 %4240
      %4242 = vrot.lane.b32.xlu0 %v420, 84
      %v4243 = vpop.permute.xlu0 %4242
      %4244 = vrot.lane.b32.xlu0 %v421, 84
      %v4245 = vpop.permute.xlu0 %4244
      %4246 = vrot.lane.b32.xlu0 %v422, 84
      %v4247 = vpop.permute.xlu0 %4246
      %vm4296 = vcmask 720545
      %4297 = vst.msk [vmem:[#allocation2 - $0x1] sm:$0xfe] %vm4296, %v4153
      %vm4298 = vcmask 720544
      %4299 = vst.msk [vmem:[#allocation2 + $0x7] sm:$0xff] %vm4298, %v4155
      %vm4300 = vcmask 713376
      %4301 = vst.msk [vmem:[#allocation2 + $0xf] sm:$0x1] %vm4300, %v4157
      %4302 = vst.msk [vmem:[#allocation2 + $0xf] sm:$0xfe] %vm4296, %v4159
      %4303 = vst.msk [vmem:[#allocation2 + $0x17] sm:$0xff] %vm4298, %v4161
      %4304 = vst.msk [vmem:[#allocation2 + $0x1f] sm:$0x1] %vm4300, %v4163
      %4305 = vst.msk [vmem:[#allocation2 + $0x1f] sm:$0xfe] %vm4296, %v4165
      %4306 = vst.msk [vmem:[#allocation2 + $0x27] sm:$0xff] %vm4298, %v4167
      %4307 = vst.msk [vmem:[#allocation2 + $0x2f] sm:$0x1] %vm4300, %v4169
      %4308 = vst.msk [vmem:[#allocation2 + $0x2f] sm:$0xfe] %vm4296, %v4171
      %4309 = vst.msk [vmem:[#allocation2 + $0x37] sm:$0xff] %vm4298, %v4173
      %4310 = vst.msk [vmem:[#allocation2 + $0x3f] sm:$0x1] %vm4300, %v4175
      %4311 = vst.msk [vmem:[#allocation2 + $0x3f] sm:$0xfe] %vm4296, %v4177
      %4312 = vst.msk [vmem:[#allocation2 + $0x47] sm:$0xff] %vm4298, %v4179
      %4313 = vst.msk [vmem:[#allocation2 + $0x4f] sm:$0x1] %vm4300, %v4181
      %4314 = vst.msk [vmem:[#allocation2 + $0x4f] sm:$0xfe] %vm4296, %v4183
      %4315 = vst.msk [vmem:[#allocation2 + $0x57] sm:$0xff] %vm4298, %v4185
      %4316 = vst.msk [vmem:[#allocation2 + $0x5f] sm:$0x1] %vm4300, %v4187
      %4317 = vst.msk [vmem:[#allocation2 + $0x5f] sm:$0xfe] %vm4296, %v4189
      %4318 = vst.msk [vmem:[#allocation2 + $0x67] sm:$0xff] %vm4298, %v4191
      %4319 = vst.msk [vmem:[#allocation2 + $0x6f] sm:$0x1] %vm4300, %v4193
      %4320 = vst.msk [vmem:[#allocation2 + $0x6f] sm:$0xfe] %vm4296, %v4195
      %4321 = vst.msk [vmem:[#allocation2 + $0x77] sm:$0xff] %vm4298, %v4197
      %4322 = vst.msk [vmem:[#allocation2 + $0x7f] sm:$0x1] %vm4300, %v4199
      %4323 = vst.msk [vmem:[#allocation2 + $0x7f] sm:$0xfe] %vm4296, %v4201
      %4324 = vst.msk [vmem:[#allocation2 + $0x87] sm:$0xff] %vm4298, %v4203
      %4325 = vst.msk [vmem:[#allocation2 + $0x8f] sm:$0x1] %vm4300, %v4205
      %4326 = vst.msk [vmem:[#allocation2 + $0x8f] sm:$0xfe] %vm4296, %v4207
      %4327 = vst.msk [vmem:[#allocation2 + $0x97] sm:$0xff] %vm4298, %v4209
      %4328 = vst.msk [vmem:[#allocation2 + $0x9f] sm:$0x1] %vm4300, %v4211
      %4329 = vst.msk [vmem:[#allocation2 + $0x9f] sm:$0xfe] %vm4296, %v4213
      %4330 = vst.msk [vmem:[#allocation2 + $0xa7] sm:$0xff] %vm4298, %v4215
      %4331 = vst.msk [vmem:[#allocation2 + $0xaf] sm:$0x1] %vm4300, %v4217
      %4332 = vst.msk [vmem:[#allocation2 + $0xaf] sm:$0xfe] %vm4296, %v4219
      %4333 = vst.msk [vmem:[#allocation2 + $0xb7] sm:$0xff] %vm4298, %v4221
      %4334 = vst.msk [vmem:[#allocation2 + $0xbf] sm:$0x1] %vm4300, %v4223
      %4335 = vst.msk [vmem:[#allocation2 + $0xbf] sm:$0xfe] %vm4296, %v4225
      %4336 = vst.msk [vmem:[#allocation2 + $0xc7] sm:$0xff] %vm4298, %v4227
      %4337 = vst.msk [vmem:[#allocation2 + $0xcf] sm:$0x1] %vm4300, %v4229
      %4338 = vst.msk [vmem:[#allocation2 + $0xcf] sm:$0xfe] %vm4296, %v4231
      %4339 = vst.msk [vmem:[#allocation2 + $0xd7] sm:$0xff] %vm4298, %v4233
      %4340 = vst.msk [vmem:[#allocation2 + $0xdf] sm:$0x1] %vm4300, %v4235
      %4341 = vst.msk [vmem:[#allocation2 + $0xdf] sm:$0xfe] %vm4296, %v4237
      %4342 = vst.msk [vmem:[#allocation2 + $0xe7] sm:$0xff] %vm4298, %v4239
      %4343 = vst.msk [vmem:[#allocation2 + $0xef] sm:$0x1] %vm4300, %v4241
      %4344 = vst.msk [vmem:[#allocation2 + $0xef] sm:$0xfe] %vm4296, %v4243
      %4345 = vst.msk [vmem:[#allocation2 + $0xf7] sm:$0xff] %vm4298, %v4245
      %4346 = vst.msk [vmem:[#allocation2 + $0xff] sm:$0x1] %vm4300, %v4247
      %4347 = vrot.lane.b32.xlu0 %v375, 88
      %v4348 = vpop.permute.xlu0 %4347
      %4349 = vrot.lane.b32.xlu0 %v376, 88
      %v4350 = vpop.permute.xlu0 %4349
      %4351 = vrot.lane.b32.xlu0 %v377, 88
      %v4352 = vpop.permute.xlu0 %4351
      %4353 = vrot.lane.b32.xlu0 %v378, 88
      %v4354 = vpop.permute.xlu0 %4353
      %4355 = vrot.lane.b32.xlu0 %v379, 88
      %v4356 = vpop.permute.xlu0 %4355
      %4357 = vrot.lane.b32.xlu0 %v380, 88
      %v4358 = vpop.permute.xlu0 %4357
      %4359 = vrot.lane.b32.xlu0 %v381, 88
      %v4360 = vpop.permute.xlu0 %4359
      %4361 = vrot.lane.b32.xlu0 %v382, 88
      %v4362 = vpop.permute.xlu0 %4361
      %4363 = vrot.lane.b32.xlu0 %v383, 88
      %v4364 = vpop.permute.xlu0 %4363
      %4365 = vrot.lane.b32.xlu0 %v384, 88
      %v4366 = vpop.permute.xlu0 %4365
      %4367 = vrot.lane.b32.xlu0 %v385, 88
      %v4368 = vpop.permute.xlu0 %4367
      %4369 = vrot.lane.b32.xlu0 %v386, 88
      %v4370 = vpop.permute.xlu0 %4369
      %4371 = vrot.lane.b32.xlu0 %v387, 88
      %v4372 = vpop.permute.xlu0 %4371
      %4373 = vrot.lane.b32.xlu0 %v388, 88
      %v4374 = vpop.permute.xlu0 %4373
      %4375 = vrot.lane.b32.xlu0 %v389, 88
      %v4376 = vpop.permute.xlu0 %4375
      %4377 = vrot.lane.b32.xlu0 %v390, 88
      %v4378 = vpop.permute.xlu0 %4377
      %4379 = vrot.lane.b32.xlu0 %v391, 88
      %v4380 = vpop.permute.xlu0 %4379
      %4381 = vrot.lane.b32.xlu0 %v392, 88
      %v4382 = vpop.permute.xlu0 %4381
      %4383 = vrot.lane.b32.xlu0 %v393, 88
      %v4384 = vpop.permute.xlu0 %4383
      %4385 = vrot.lane.b32.xlu0 %v394, 88
      %v4386 = vpop.permute.xlu0 %4385
      %4387 = vrot.lane.b32.xlu0 %v395, 88
      %v4388 = vpop.permute.xlu0 %4387
      %4389 = vrot.lane.b32.xlu0 %v396, 88
      %v4390 = vpop.permute.xlu0 %4389
      %4391 = vrot.lane.b32.xlu0 %v397, 88
      %v4392 = vpop.permute.xlu0 %4391
      %4393 = vrot.lane.b32.xlu0 %v398, 88
      %v4394 = vpop.permute.xlu0 %4393
      %4395 = vrot.lane.b32.xlu0 %v399, 88
      %v4396 = vpop.permute.xlu0 %4395
      %4397 = vrot.lane.b32.xlu0 %v400, 88
      %v4398 = vpop.permute.xlu0 %4397
      %4399 = vrot.lane.b32.xlu0 %v401, 88
      %v4400 = vpop.permute.xlu0 %4399
      %4401 = vrot.lane.b32.xlu0 %v402, 88
      %v4402 = vpop.permute.xlu0 %4401
      %4403 = vrot.lane.b32.xlu0 %v403, 88
      %v4404 = vpop.permute.xlu0 %4403
      %4405 = vrot.lane.b32.xlu0 %v404, 88
      %v4406 = vpop.permute.xlu0 %4405
      %4407 = vrot.lane.b32.xlu0 %v405, 88
      %v4408 = vpop.permute.xlu0 %4407
      %4409 = vrot.lane.b32.xlu0 %v406, 88
      %v4410 = vpop.permute.xlu0 %4409
      %4411 = vrot.lane.b32.xlu0 %v407, 88
      %v4412 = vpop.permute.xlu0 %4411
      %4413 = vrot.lane.b32.xlu0 %v408, 88
      %v4414 = vpop.permute.xlu0 %4413
      %4415 = vrot.lane.b32.xlu0 %v409, 88
      %v4416 = vpop.permute.xlu0 %4415
      %4417 = vrot.lane.b32.xlu0 %v410, 88
      %v4418 = vpop.permute.xlu0 %4417
      %4419 = vrot.lane.b32.xlu0 %v411, 88
      %v4420 = vpop.permute.xlu0 %4419
      %4421 = vrot.lane.b32.xlu0 %v412, 88
      %v4422 = vpop.permute.xlu0 %4421
      %4423 = vrot.lane.b32.xlu0 %v413, 88
      %v4424 = vpop.permute.xlu0 %4423
      %4425 = vrot.lane.b32.xlu0 %v414, 88
      %v4426 = vpop.permute.xlu0 %4425
      %4427 = vrot.lane.b32.xlu0 %v415, 88
      %v4428 = vpop.permute.xlu0 %4427
      %4429 = vrot.lane.b32.xlu0 %v416, 88
      %v4430 = vpop.permute.xlu0 %4429
      %4431 = vrot.lane.b32.xlu0 %v417, 88
      %v4432 = vpop.permute.xlu0 %4431
      %4433 = vrot.lane.b32.xlu0 %v418, 88
      %v4434 = vpop.permute.xlu0 %4433
      %4435 = vrot.lane.b32.xlu0 %v419, 88
      %v4436 = vpop.permute.xlu0 %4435
      %4437 = vrot.lane.b32.xlu0 %v420, 88
      %v4438 = vpop.permute.xlu0 %4437
      %4439 = vrot.lane.b32.xlu0 %v421, 88
      %v4440 = vpop.permute.xlu0 %4439
      %4441 = vrot.lane.b32.xlu0 %v422, 88
      %v4442 = vpop.permute.xlu0 %4441
      %vm4491 = vcmask 753346
      %4492 = vst.msk [vmem:[#allocation2 - $0x2] sm:$0xfc] %vm4491, %v4348
      %vm4493 = vcmask 753344
      %4494 = vst.msk [vmem:[#allocation2 + $0x6] sm:$0xff] %vm4493, %v4350
      %vm4495 = vcmask 747200
      %4496 = vst.msk [vmem:[#allocation2 + $0xe] sm:$0x3] %vm4495, %v4352
      %4497 = vst.msk [vmem:[#allocation2 + $0xe] sm:$0xfc] %vm4491, %v4354
      %4498 = vst.msk [vmem:[#allocation2 + $0x16] sm:$0xff] %vm4493, %v4356
      %4499 = vst.msk [vmem:[#allocation2 + $0x1e] sm:$0x3] %vm4495, %v4358
      %4500 = vst.msk [vmem:[#allocation2 + $0x1e] sm:$0xfc] %vm4491, %v4360
      %4501 = vst.msk [vmem:[#allocation2 + $0x26] sm:$0xff] %vm4493, %v4362
      %4502 = vst.msk [vmem:[#allocation2 + $0x2e] sm:$0x3] %vm4495, %v4364
      %4503 = vst.msk [vmem:[#allocation2 + $0x2e] sm:$0xfc] %vm4491, %v4366
      %4504 = vst.msk [vmem:[#allocation2 + $0x36] sm:$0xff] %vm4493, %v4368
      %4505 = vst.msk [vmem:[#allocation2 + $0x3e] sm:$0x3] %vm4495, %v4370
      %4506 = vst.msk [vmem:[#allocation2 + $0x3e] sm:$0xfc] %vm4491, %v4372
      %4507 = vst.msk [vmem:[#allocation2 + $0x46] sm:$0xff] %vm4493, %v4374
      %4508 = vst.msk [vmem:[#allocation2 + $0x4e] sm:$0x3] %vm4495, %v4376
      %4509 = vst.msk [vmem:[#allocation2 + $0x4e] sm:$0xfc] %vm4491, %v4378
      %4510 = vst.msk [vmem:[#allocation2 + $0x56] sm:$0xff] %vm4493, %v4380
      %4511 = vst.msk [vmem:[#allocation2 + $0x5e] sm:$0x3] %vm4495, %v4382
      %4512 = vst.msk [vmem:[#allocation2 + $0x5e] sm:$0xfc] %vm4491, %v4384
      %4513 = vst.msk [vmem:[#allocation2 + $0x66] sm:$0xff] %vm4493, %v4386
      %4514 = vst.msk [vmem:[#allocation2 + $0x6e] sm:$0x3] %vm4495, %v4388
      %4515 = vst.msk [vmem:[#allocation2 + $0x6e] sm:$0xfc] %vm4491, %v4390
      %4516 = vst.msk [vmem:[#allocation2 + $0x76] sm:$0xff] %vm4493, %v4392
      %4517 = vst.msk [vmem:[#allocation2 + $0x7e] sm:$0x3] %vm4495, %v4394
      %4518 = vst.msk [vmem:[#allocation2 + $0x7e] sm:$0xfc] %vm4491, %v4396
      %4519 = vst.msk [vmem:[#allocation2 + $0x86] sm:$0xff] %vm4493, %v4398
      %4520 = vst.msk [vmem:[#allocation2 + $0x8e] sm:$0x3] %vm4495, %v4400
      %4521 = vst.msk [vmem:[#allocation2 + $0x8e] sm:$0xfc] %vm4491, %v4402
      %4522 = vst.msk [vmem:[#allocation2 + $0x96] sm:$0xff] %vm4493, %v4404
      %4523 = vst.msk [vmem:[#allocation2 + $0x9e] sm:$0x3] %vm4495, %v4406
      %4524 = vst.msk [vmem:[#allocation2 + $0x9e] sm:$0xfc] %vm4491, %v4408
      %4525 = vst.msk [vmem:[#allocation2 + $0xa6] sm:$0xff] %vm4493, %v4410
      %4526 = vst.msk [vmem:[#allocation2 + $0xae] sm:$0x3] %vm4495, %v4412
      %4527 = vst.msk [vmem:[#allocation2 + $0xae] sm:$0xfc] %vm4491, %v4414
      %4528 = vst.msk [vmem:[#allocation2 + $0xb6] sm:$0xff] %vm4493, %v4416
      %4529 = vst.msk [vmem:[#allocation2 + $0xbe] sm:$0x3] %vm4495, %v4418
      %4530 = vst.msk [vmem:[#allocation2 + $0xbe] sm:$0xfc] %vm4491, %v4420
      %4531 = vst.msk [vmem:[#allocation2 + $0xc6] sm:$0xff] %vm4493, %v4422
      %4532 = vst.msk [vmem:[#allocation2 + $0xce] sm:$0x3] %vm4495, %v4424
      %4533 = vst.msk [vmem:[#allocation2 + $0xce] sm:$0xfc] %vm4491, %v4426
      %4534 = vst.msk [vmem:[#allocation2 + $0xd6] sm:$0xff] %vm4493, %v4428
      %4535 = vst.msk [vmem:[#allocation2 + $0xde] sm:$0x3] %vm4495, %v4430
      %4536 = vst.msk [vmem:[#allocation2 + $0xde] sm:$0xfc] %vm4491, %v4432
      %4537 = vst.msk [vmem:[#allocation2 + $0xe6] sm:$0xff] %vm4493, %v4434
      %4538 = vst.msk [vmem:[#allocation2 + $0xee] sm:$0x3] %vm4495, %v4436
      %4539 = vst.msk [vmem:[#allocation2 + $0xee] sm:$0xfc] %vm4491, %v4438
      %4540 = vst.msk [vmem:[#allocation2 + $0xf6] sm:$0xff] %vm4493, %v4440
      %4541 = vst.msk [vmem:[#allocation2 + $0xfe] sm:$0x3] %vm4495, %v4442
      %4542 = vrot.lane.b32.xlu0 %v375, 92
      %v4543 = vpop.permute.xlu0 %4542
      %4544 = vrot.lane.b32.xlu0 %v376, 92
      %v4545 = vpop.permute.xlu0 %4544
      %4546 = vrot.lane.b32.xlu0 %v377, 92
      %v4547 = vpop.permute.xlu0 %4546
      %4548 = vrot.lane.b32.xlu0 %v378, 92
      %v4549 = vpop.permute.xlu0 %4548
      %4550 = vrot.lane.b32.xlu0 %v379, 92
      %v4551 = vpop.permute.xlu0 %4550
      %4552 = vrot.lane.b32.xlu0 %v380, 92
      %v4553 = vpop.permute.xlu0 %4552
      %4554 = vrot.lane.b32.xlu0 %v381, 92
      %v4555 = vpop.permute.xlu0 %4554
      %4556 = vrot.lane.b32.xlu0 %v382, 92
      %v4557 = vpop.permute.xlu0 %4556
      %4558 = vrot.lane.b32.xlu0 %v383, 92
      %v4559 = vpop.permute.xlu0 %4558
      %4560 = vrot.lane.b32.xlu0 %v384, 92
      %v4561 = vpop.permute.xlu0 %4560
      %4562 = vrot.lane.b32.xlu0 %v385, 92
      %v4563 = vpop.permute.xlu0 %4562
      %4564 = vrot.lane.b32.xlu0 %v386, 92
      %v4565 = vpop.permute.xlu0 %4564
      %4566 = vrot.lane.b32.xlu0 %v387, 92
      %v4567 = vpop.permute.xlu0 %4566
      %4568 = vrot.lane.b32.xlu0 %v388, 92
      %v4569 = vpop.permute.xlu0 %4568
      %4570 = vrot.lane.b32.xlu0 %v389, 92
      %v4571 = vpop.permute.xlu0 %4570
      %4572 = vrot.lane.b32.xlu0 %v390, 92
      %v4573 = vpop.permute.xlu0 %4572
      %4574 = vrot.lane.b32.xlu0 %v391, 92
      %v4575 = vpop.permute.xlu0 %4574
      %4576 = vrot.lane.b32.xlu0 %v392, 92
      %v4577 = vpop.permute.xlu0 %4576
      %4578 = vrot.lane.b32.xlu0 %v393, 92
      %v4579 = vpop.permute.xlu0 %4578
      %4580 = vrot.lane.b32.xlu0 %v394, 92
      %v4581 = vpop.permute.xlu0 %4580
      %4582 = vrot.lane.b32.xlu0 %v395, 92
      %v4583 = vpop.permute.xlu0 %4582
      %4584 = vrot.lane.b32.xlu0 %v396, 92
      %v4585 = vpop.permute.xlu0 %4584
      %4586 = vrot.lane.b32.xlu0 %v397, 92
      %v4587 = vpop.permute.xlu0 %4586
      %4588 = vrot.lane.b32.xlu0 %v398, 92
      %v4589 = vpop.permute.xlu0 %4588
      %4590 = vrot.lane.b32.xlu0 %v399, 92
      %v4591 = vpop.permute.xlu0 %4590
      %4592 = vrot.lane.b32.xlu0 %v400, 92
      %v4593 = vpop.permute.xlu0 %4592
      %4594 = vrot.lane.b32.xlu0 %v401, 92
      %v4595 = vpop.permute.xlu0 %4594
      %4596 = vrot.lane.b32.xlu0 %v402, 92
      %v4597 = vpop.permute.xlu0 %4596
      %4598 = vrot.lane.b32.xlu0 %v403, 92
      %v4599 = vpop.permute.xlu0 %4598
      %4600 = vrot.lane.b32.xlu0 %v404, 92
      %v4601 = vpop.permute.xlu0 %4600
      %4602 = vrot.lane.b32.xlu0 %v405, 92
      %v4603 = vpop.permute.xlu0 %4602
      %4604 = vrot.lane.b32.xlu0 %v406, 92
      %v4605 = vpop.permute.xlu0 %4604
      %4606 = vrot.lane.b32.xlu0 %v407, 92
      %v4607 = vpop.permute.xlu0 %4606
      %4608 = vrot.lane.b32.xlu0 %v408, 92
      %v4609 = vpop.permute.xlu0 %4608
      %4610 = vrot.lane.b32.xlu0 %v409, 92
      %v4611 = vpop.permute.xlu0 %4610
      %4612 = vrot.lane.b32.xlu0 %v410, 92
      %v4613 = vpop.permute.xlu0 %4612
      %4614 = vrot.lane.b32.xlu0 %v411, 92
      %v4615 = vpop.permute.xlu0 %4614
      %4616 = vrot.lane.b32.xlu0 %v412, 92
      %v4617 = vpop.permute.xlu0 %4616
      %4618 = vrot.lane.b32.xlu0 %v413, 92
      %v4619 = vpop.permute.xlu0 %4618
      %4620 = vrot.lane.b32.xlu0 %v414, 92
      %v4621 = vpop.permute.xlu0 %4620
      %4622 = vrot.lane.b32.xlu0 %v415, 92
      %v4623 = vpop.permute.xlu0 %4622
      %4624 = vrot.lane.b32.xlu0 %v416, 92
      %v4625 = vpop.permute.xlu0 %4624
      %4626 = vrot.lane.b32.xlu0 %v417, 92
      %v4627 = vpop.permute.xlu0 %4626
      %4628 = vrot.lane.b32.xlu0 %v418, 92
      %v4629 = vpop.permute.xlu0 %4628
      %4630 = vrot.lane.b32.xlu0 %v419, 92
      %v4631 = vpop.permute.xlu0 %4630
      %4632 = vrot.lane.b32.xlu0 %v420, 92
      %v4633 = vpop.permute.xlu0 %4632
      %4634 = vrot.lane.b32.xlu0 %v421, 92
      %v4635 = vpop.permute.xlu0 %4634
      %4636 = vrot.lane.b32.xlu0 %v422, 92
      %v4637 = vpop.permute.xlu0 %4636
      %vm4686 = vcmask 786147
      %4687 = vst.msk [vmem:[#allocation2 - $0x3] sm:$0xf8] %vm4686, %v4543
      %vm4688 = vcmask 786144
      %4689 = vst.msk [vmem:[#allocation2 + $0x5] sm:$0xff] %vm4688, %v4545
      %vm4690 = vcmask 781024
      %4691 = vst.msk [vmem:[#allocation2 + $0xd] sm:$0x7] %vm4690, %v4547
      %4692 = vst.msk [vmem:[#allocation2 + $0xd] sm:$0xf8] %vm4686, %v4549
      %4693 = vst.msk [vmem:[#allocation2 + $0x15] sm:$0xff] %vm4688, %v4551
      %4694 = vst.msk [vmem:[#allocation2 + $0x1d] sm:$0x7] %vm4690, %v4553
      %4695 = vst.msk [vmem:[#allocation2 + $0x1d] sm:$0xf8] %vm4686, %v4555
      %4696 = vst.msk [vmem:[#allocation2 + $0x25] sm:$0xff] %vm4688, %v4557
      %4697 = vst.msk [vmem:[#allocation2 + $0x2d] sm:$0x7] %vm4690, %v4559
      %4698 = vst.msk [vmem:[#allocation2 + $0x2d] sm:$0xf8] %vm4686, %v4561
      %4699 = vst.msk [vmem:[#allocation2 + $0x35] sm:$0xff] %vm4688, %v4563
      %4700 = vst.msk [vmem:[#allocation2 + $0x3d] sm:$0x7] %vm4690, %v4565
      %4701 = vst.msk [vmem:[#allocation2 + $0x3d] sm:$0xf8] %vm4686, %v4567
      %4702 = vst.msk [vmem:[#allocation2 + $0x45] sm:$0xff] %vm4688, %v4569
      %4703 = vst.msk [vmem:[#allocation2 + $0x4d] sm:$0x7] %vm4690, %v4571
      %4704 = vst.msk [vmem:[#allocation2 + $0x4d] sm:$0xf8] %vm4686, %v4573
      %4705 = vst.msk [vmem:[#allocation2 + $0x55] sm:$0xff] %vm4688, %v4575
      %4706 = vst.msk [vmem:[#allocation2 + $0x5d] sm:$0x7] %vm4690, %v4577
      %4707 = vst.msk [vmem:[#allocation2 + $0x5d] sm:$0xf8] %vm4686, %v4579
      %4708 = vst.msk [vmem:[#allocation2 + $0x65] sm:$0xff] %vm4688, %v4581
      %4709 = vst.msk [vmem:[#allocation2 + $0x6d] sm:$0x7] %vm4690, %v4583
      %4710 = vst.msk [vmem:[#allocation2 + $0x6d] sm:$0xf8] %vm4686, %v4585
      %4711 = vst.msk [vmem:[#allocation2 + $0x75] sm:$0xff] %vm4688, %v4587
      %4712 = vst.msk [vmem:[#allocation2 + $0x7d] sm:$0x7] %vm4690, %v4589
      %4713 = vst.msk [vmem:[#allocation2 + $0x7d] sm:$0xf8] %vm4686, %v4591
      %4714 = vst.msk [vmem:[#allocation2 + $0x85] sm:$0xff] %vm4688, %v4593
      %4715 = vst.msk [vmem:[#allocation2 + $0x8d] sm:$0x7] %vm4690, %v4595
      %4716 = vst.msk [vmem:[#allocation2 + $0x8d] sm:$0xf8] %vm4686, %v4597
      %4717 = vst.msk [vmem:[#allocation2 + $0x95] sm:$0xff] %vm4688, %v4599
      %4718 = vst.msk [vmem:[#allocation2 + $0x9d] sm:$0x7] %vm4690, %v4601
      %4719 = vst.msk [vmem:[#allocation2 + $0x9d] sm:$0xf8] %vm4686, %v4603
      %4720 = vst.msk [vmem:[#allocation2 + $0xa5] sm:$0xff] %vm4688, %v4605
      %4721 = vst.msk [vmem:[#allocation2 + $0xad] sm:$0x7] %vm4690, %v4607
      %4722 = vst.msk [vmem:[#allocation2 + $0xad] sm:$0xf8] %vm4686, %v4609
      %4723 = vst.msk [vmem:[#allocation2 + $0xb5] sm:$0xff] %vm4688, %v4611
      %4724 = vst.msk [vmem:[#allocation2 + $0xbd] sm:$0x7] %vm4690, %v4613
      %4725 = vst.msk [vmem:[#allocation2 + $0xbd] sm:$0xf8] %vm4686, %v4615
      %4726 = vst.msk [vmem:[#allocation2 + $0xc5] sm:$0xff] %vm4688, %v4617
      %4727 = vst.msk [vmem:[#allocation2 + $0xcd] sm:$0x7] %vm4690, %v4619
      %4728 = vst.msk [vmem:[#allocation2 + $0xcd] sm:$0xf8] %vm4686, %v4621
      %4729 = vst.msk [vmem:[#allocation2 + $0xd5] sm:$0xff] %vm4688, %v4623
      %4730 = vst.msk [vmem:[#allocation2 + $0xdd] sm:$0x7] %vm4690, %v4625
      %4731 = vst.msk [vmem:[#allocation2 + $0xdd] sm:$0xf8] %vm4686, %v4627
      %4732 = vst.msk [vmem:[#allocation2 + $0xe5] sm:$0xff] %vm4688, %v4629
      %4733 = vst.msk [vmem:[#allocation2 + $0xed] sm:$0x7] %vm4690, %v4631
      %4734 = vst.msk [vmem:[#allocation2 + $0xed] sm:$0xf8] %vm4686, %v4633
      %4735 = vst.msk [vmem:[#allocation2 + $0xf5] sm:$0xff] %vm4688, %v4635
      %4736 = vst.msk [vmem:[#allocation2 + $0xfd] sm:$0x7] %vm4690, %v4637
      %4737 = vrot.lane.b32.xlu0 %v375, 96
      %v4738 = vpop.permute.xlu0 %4737
      %4739 = vrot.lane.b32.xlu0 %v376, 96
      %v4740 = vpop.permute.xlu0 %4739
      %4741 = vrot.lane.b32.xlu0 %v377, 96
      %v4742 = vpop.permute.xlu0 %4741
      %4743 = vrot.lane.b32.xlu0 %v378, 96
      %v4744 = vpop.permute.xlu0 %4743
      %4745 = vrot.lane.b32.xlu0 %v379, 96
      %v4746 = vpop.permute.xlu0 %4745
      %4747 = vrot.lane.b32.xlu0 %v380, 96
      %v4748 = vpop.permute.xlu0 %4747
      %4749 = vrot.lane.b32.xlu0 %v381, 96
      %v4750 = vpop.permute.xlu0 %4749
      %4751 = vrot.lane.b32.xlu0 %v382, 96
      %v4752 = vpop.permute.xlu0 %4751
      %4753 = vrot.lane.b32.xlu0 %v383, 96
      %v4754 = vpop.permute.xlu0 %4753
      %4755 = vrot.lane.b32.xlu0 %v384, 96
      %v4756 = vpop.permute.xlu0 %4755
      %4757 = vrot.lane.b32.xlu0 %v385, 96
      %v4758 = vpop.permute.xlu0 %4757
      %4759 = vrot.lane.b32.xlu0 %v386, 96
      %v4760 = vpop.permute.xlu0 %4759
      %4761 = vrot.lane.b32.xlu0 %v387, 96
      %v4762 = vpop.permute.xlu0 %4761
      %4763 = vrot.lane.b32.xlu0 %v388, 96
      %v4764 = vpop.permute.xlu0 %4763
      %4765 = vrot.lane.b32.xlu0 %v389, 96
      %v4766 = vpop.permute.xlu0 %4765
      %4767 = vrot.lane.b32.xlu0 %v390, 96
      %v4768 = vpop.permute.xlu0 %4767
      %4769 = vrot.lane.b32.xlu0 %v391, 96
      %v4770 = vpop.permute.xlu0 %4769
      %4771 = vrot.lane.b32.xlu0 %v392, 96
      %v4772 = vpop.permute.xlu0 %4771
      %4773 = vrot.lane.b32.xlu0 %v393, 96
      %v4774 = vpop.permute.xlu0 %4773
      %4775 = vrot.lane.b32.xlu0 %v394, 96
      %v4776 = vpop.permute.xlu0 %4775
      %4777 = vrot.lane.b32.xlu0 %v395, 96
      %v4778 = vpop.permute.xlu0 %4777
      %4779 = vrot.lane.b32.xlu0 %v396, 96
      %v4780 = vpop.permute.xlu0 %4779
      %4781 = vrot.lane.b32.xlu0 %v397, 96
      %v4782 = vpop.permute.xlu0 %4781
      %4783 = vrot.lane.b32.xlu0 %v398, 96
      %v4784 = vpop.permute.xlu0 %4783
      %4785 = vrot.lane.b32.xlu0 %v399, 96
      %v4786 = vpop.permute.xlu0 %4785
      %4787 = vrot.lane.b32.xlu0 %v400, 96
      %v4788 = vpop.permute.xlu0 %4787
      %4789 = vrot.lane.b32.xlu0 %v401, 96
      %v4790 = vpop.permute.xlu0 %4789
      %4791 = vrot.lane.b32.xlu0 %v402, 96
      %v4792 = vpop.permute.xlu0 %4791
      %4793 = vrot.lane.b32.xlu0 %v403, 96
      %v4794 = vpop.permute.xlu0 %4793
      %4795 = vrot.lane.b32.xlu0 %v404, 96
      %v4796 = vpop.permute.xlu0 %4795
      %4797 = vrot.lane.b32.xlu0 %v405, 96
      %v4798 = vpop.permute.xlu0 %4797
      %4799 = vrot.lane.b32.xlu0 %v406, 96
      %v4800 = vpop.permute.xlu0 %4799
      %4801 = vrot.lane.b32.xlu0 %v407, 96
      %v4802 = vpop.permute.xlu0 %4801
      %4803 = vrot.lane.b32.xlu0 %v408, 96
      %v4804 = vpop.permute.xlu0 %4803
      %4805 = vrot.lane.b32.xlu0 %v409, 96
      %v4806 = vpop.permute.xlu0 %4805
      %4807 = vrot.lane.b32.xlu0 %v410, 96
      %v4808 = vpop.permute.xlu0 %4807
      %4809 = vrot.lane.b32.xlu0 %v411, 96
      %v4810 = vpop.permute.xlu0 %4809
      %4811 = vrot.lane.b32.xlu0 %v412, 96
      %v4812 = vpop.permute.xlu0 %4811
      %4813 = vrot.lane.b32.xlu0 %v413, 96
      %v4814 = vpop.permute.xlu0 %4813
      %4815 = vrot.lane.b32.xlu0 %v414, 96
      %v4816 = vpop.permute.xlu0 %4815
      %4817 = vrot.lane.b32.xlu0 %v415, 96
      %v4818 = vpop.permute.xlu0 %4817
      %4819 = vrot.lane.b32.xlu0 %v416, 96
      %v4820 = vpop.permute.xlu0 %4819
      %4821 = vrot.lane.b32.xlu0 %v417, 96
      %v4822 = vpop.permute.xlu0 %4821
      %4823 = vrot.lane.b32.xlu0 %v418, 96
      %v4824 = vpop.permute.xlu0 %4823
      %4825 = vrot.lane.b32.xlu0 %v419, 96
      %v4826 = vpop.permute.xlu0 %4825
      %4827 = vrot.lane.b32.xlu0 %v420, 96
      %v4828 = vpop.permute.xlu0 %4827
      %4829 = vrot.lane.b32.xlu0 %v421, 96
      %v4830 = vpop.permute.xlu0 %4829
      %4831 = vrot.lane.b32.xlu0 %v422, 96
      %v4832 = vpop.permute.xlu0 %4831
      %vm4881 = vcmask 818948
      %4882 = vst.msk [vmem:[#allocation2 - $0x4] sm:$0xf0] %vm4881, %v4738
      %vm4883 = vcmask 818944
      %4884 = vst.msk [vmem:[#allocation2 + $0x4] sm:$0xff] %vm4883, %v4740
      %vm4885 = vcmask 814848
      %4886 = vst.msk [vmem:[#allocation2 + $0xc] sm:$0xf] %vm4885, %v4742
      %4887 = vst.msk [vmem:[#allocation2 + $0xc] sm:$0xf0] %vm4881, %v4744
      %4888 = vst.msk [vmem:[#allocation2 + $0x14] sm:$0xff] %vm4883, %v4746
      %4889 = vst.msk [vmem:[#allocation2 + $0x1c] sm:$0xf] %vm4885, %v4748
      %4890 = vst.msk [vmem:[#allocation2 + $0x1c] sm:$0xf0] %vm4881, %v4750
      %4891 = vst.msk [vmem:[#allocation2 + $0x24] sm:$0xff] %vm4883, %v4752
      %4892 = vst.msk [vmem:[#allocation2 + $0x2c] sm:$0xf] %vm4885, %v4754
      %4893 = vst.msk [vmem:[#allocation2 + $0x2c] sm:$0xf0] %vm4881, %v4756
      %4894 = vst.msk [vmem:[#allocation2 + $0x34] sm:$0xff] %vm4883, %v4758
      %4895 = vst.msk [vmem:[#allocation2 + $0x3c] sm:$0xf] %vm4885, %v4760
      %4896 = vst.msk [vmem:[#allocation2 + $0x3c] sm:$0xf0] %vm4881, %v4762
      %4897 = vst.msk [vmem:[#allocation2 + $0x44] sm:$0xff] %vm4883, %v4764
      %4898 = vst.msk [vmem:[#allocation2 + $0x4c] sm:$0xf] %vm4885, %v4766
      %4899 = vst.msk [vmem:[#allocation2 + $0x4c] sm:$0xf0] %vm4881, %v4768
      %4900 = vst.msk [vmem:[#allocation2 + $0x54] sm:$0xff] %vm4883, %v4770
      %4901 = vst.msk [vmem:[#allocation2 + $0x5c] sm:$0xf] %vm4885, %v4772
      %4902 = vst.msk [vmem:[#allocation2 + $0x5c] sm:$0xf0] %vm4881, %v4774
      %4903 = vst.msk [vmem:[#allocation2 + $0x64] sm:$0xff] %vm4883, %v4776
      %4904 = vst.msk [vmem:[#allocation2 + $0x6c] sm:$0xf] %vm4885, %v4778
      %4905 = vst.msk [vmem:[#allocation2 + $0x6c] sm:$0xf0] %vm4881, %v4780
      %4906 = vst.msk [vmem:[#allocation2 + $0x74] sm:$0xff] %vm4883, %v4782
      %4907 = vst.msk [vmem:[#allocation2 + $0x7c] sm:$0xf] %vm4885, %v4784
      %4908 = vst.msk [vmem:[#allocation2 + $0x7c] sm:$0xf0] %vm4881, %v4786
      %4909 = vst.msk [vmem:[#allocation2 + $0x84] sm:$0xff] %vm4883, %v4788
      %4910 = vst.msk [vmem:[#allocation2 + $0x8c] sm:$0xf] %vm4885, %v4790
      %4911 = vst.msk [vmem:[#allocation2 + $0x8c] sm:$0xf0] %vm4881, %v4792
      %4912 = vst.msk [vmem:[#allocation2 + $0x94] sm:$0xff] %vm4883, %v4794
      %4913 = vst.msk [vmem:[#allocation2 + $0x9c] sm:$0xf] %vm4885, %v4796
      %4914 = vst.msk [vmem:[#allocation2 + $0x9c] sm:$0xf0] %vm4881, %v4798
      %4915 = vst.msk [vmem:[#allocation2 + $0xa4] sm:$0xff] %vm4883, %v4800
      %4916 = vst.msk [vmem:[#allocation2 + $0xac] sm:$0xf] %vm4885, %v4802
      %4917 = vst.msk [vmem:[#allocation2 + $0xac] sm:$0xf0] %vm4881, %v4804
      %4918 = vst.msk [vmem:[#allocation2 + $0xb4] sm:$0xff] %vm4883, %v4806
      %4919 = vst.msk [vmem:[#allocation2 + $0xbc] sm:$0xf] %vm4885, %v4808
      %4920 = vst.msk [vmem:[#allocation2 + $0xbc] sm:$0xf0] %vm4881, %v4810
      %4921 = vst.msk [vmem:[#allocation2 + $0xc4] sm:$0xff] %vm4883, %v4812
      %4922 = vst.msk [vmem:[#allocation2 + $0xcc] sm:$0xf] %vm4885, %v4814
      %4923 = vst.msk [vmem:[#allocation2 + $0xcc] sm:$0xf0] %vm4881, %v4816
      %4924 = vst.msk [vmem:[#allocation2 + $0xd4] sm:$0xff] %vm4883, %v4818
      %4925 = vst.msk [vmem:[#allocation2 + $0xdc] sm:$0xf] %vm4885, %v4820
      %4926 = vst.msk [vmem:[#allocation2 + $0xdc] sm:$0xf0] %vm4881, %v4822
      %4927 = vst.msk [vmem:[#allocation2 + $0xe4] sm:$0xff] %vm4883, %v4824
      %4928 = vst.msk [vmem:[#allocation2 + $0xec] sm:$0xf] %vm4885, %v4826
      %4929 = vst.msk [vmem:[#allocation2 + $0xec] sm:$0xf0] %vm4881, %v4828
      %4930 = vst.msk [vmem:[#allocation2 + $0xf4] sm:$0xff] %vm4883, %v4830
      %4931 = vst.msk [vmem:[#allocation2 + $0xfc] sm:$0xf] %vm4885, %v4832
      %v4932 = vld [vmem:[#allocation2] sm:$0xff]
      %v4933 = vld [vmem:[#allocation2 + $0x8] sm:$0xff]
      %v4934 = vld [vmem:[#allocation2 + $0x10] sm:$0xff]
      %v4935 = vld [vmem:[#allocation2 + $0x18] sm:$0xff]
      %v4936 = vld [vmem:[#allocation2 + $0x20] sm:$0xff]
      %v4937 = vld [vmem:[#allocation2 + $0x28] sm:$0xff]
      %v4938 = vld [vmem:[#allocation2 + $0x30] sm:$0xff]
      %v4939 = vld [vmem:[#allocation2 + $0x38] sm:$0xff]
      %v4940 = vld [vmem:[#allocation2 + $0x40] sm:$0xff]
      %v4941 = vld [vmem:[#allocation2 + $0x48] sm:$0xff]
      %v4942 = vld [vmem:[#allocation2 + $0x50] sm:$0xff]
      %v4943 = vld [vmem:[#allocation2 + $0x58] sm:$0xff]
      %v4944 = vld [vmem:[#allocation2 + $0x60] sm:$0xff]
      %v4945 = vld [vmem:[#allocation2 + $0x68] sm:$0xff]
      %v4946 = vld [vmem:[#allocation2 + $0x70] sm:$0xff]
      %v4947 = vld [vmem:[#allocation2 + $0x78] sm:$0xff]
      %v4948 = vld [vmem:[#allocation2 + $0x80] sm:$0xff]
      %v4949 = vld [vmem:[#allocation2 + $0x88] sm:$0xff]
      %v4950 = vld [vmem:[#allocation2 + $0x90] sm:$0xff]
      %v4951 = vld [vmem:[#allocation2 + $0x98] sm:$0xff]
      %v4952 = vld [vmem:[#allocation2 + $0xa0] sm:$0xff]
      %v4953 = vld [vmem:[#allocation2 + $0xa8] sm:$0xff]
      %v4954 = vld [vmem:[#allocation2 + $0xb0] sm:$0xff]
      %v4955 = vld [vmem:[#allocation2 + $0xb8] sm:$0xff]
      %v4956 = vld [vmem:[#allocation2 + $0xc0] sm:$0xff]
      %v4957 = vld [vmem:[#allocation2 + $0xc8] sm:$0xff]
      %v4958 = vld [vmem:[#allocation2 + $0xd0] sm:$0xff]
      %v4959 = vld [vmem:[#allocation2 + $0xd8] sm:$0xff]
      %v4960 = vld [vmem:[#allocation2 + $0xe0] sm:$0xff]
      %v4961 = vld [vmem:[#allocation2 + $0xe8] sm:$0xff]
      %v4962 = vld [vmem:[#allocation2 + $0xf0] sm:$0xff]
      %v4963 = vld [vmem:[#allocation2 + $0xf8] sm:$0xff]
      %v4964 = vpack.c.bf16 %v4933, %v4932
      %v4965 = vpack.c.bf16 %v4935, %v4934
      %v4966 = vpack.c.bf16 %v4937, %v4936
      %v4967 = vpack.c.bf16 %v4939, %v4938
      %v4968 = vpack.c.bf16 %v4941, %v4940
      %v4969 = vpack.c.bf16 %v4943, %v4942
      %v4970 = vpack.c.bf16 %v4945, %v4944
      %v4971 = vpack.c.bf16 %v4947, %v4946
      %v4972 = vpack.c.bf16 %v4949, %v4948
      %v4973 = vpack.c.bf16 %v4951, %v4950
      %v4974 = vpack.c.bf16 %v4953, %v4952
      %v4975 = vpack.c.bf16 %v4955, %v4954
      %v4976 = vpack.c.bf16 %v4957, %v4956
      %v4977 = vpack.c.bf16 %v4959, %v4958
      %v4978 = vpack.c.bf16 %v4961, %v4960
      %v4979 = vpack.c.bf16 %v4963, %v4962
      %v4980 = vld [vmem:[%s1] sm:$0xf]
      %v4981 = vld [vmem:[%s1 + $0x4] sm:$0xf]
      %v4982 = vld [vmem:[%s1 + $0x8] sm:$0xf]
      %v4983 = vld [vmem:[%s1 + $0xc] sm:$0xf]
      %v4984 = vld [vmem:[%s1 + $0x10] sm:$0xf]
      %v4985 = vld [vmem:[%s1 + $0x14] sm:$0xf]
      %v4986 = vld [vmem:[%s1 + $0x18] sm:$0xf]
      %v4987 = vld [vmem:[%s1 + $0x1c] sm:$0xf]
      %v4988 = vld [vmem:[%s1 + $0x20] sm:$0xf]
      %v4989 = vld [vmem:[%s1 + $0x24] sm:$0xf]
      %v4990 = vld [vmem:[%s1 + $0x28] sm:$0xf]
      %v4991 = vld [vmem:[%s1 + $0x2c] sm:$0xf]
      %v4992 = vld [vmem:[%s1 + $0x30] sm:$0x3]
      %v5006 = vunpack.c.l.b16 %v4980
      %v5007 = vunpack.c.l.b16 %v4981
      %v5008 = vunpack.c.l.b16 %v4982
      %v5009 = vunpack.c.l.b16 %v4983
      %v5010 = vunpack.c.l.b16 %v4984
      %v5011 = vunpack.c.l.b16 %v4985
      %v5012 = vunpack.c.l.b16 %v4986
      %v5013 = vunpack.c.l.b16 %v4987
      %v5014 = vunpack.c.l.b16 %v4988
      %v5015 = vunpack.c.l.b16 %v4989
      %v5016 = vunpack.c.l.b16 %v4990
      %v5017 = vunpack.c.l.b16 %v4991
      %v5018 = vunpack.c.l.b16 %v4992
      %v5019 = vpack.c.b16 %v5007, %v5006
      %v5020 = vpack.c.b16 %v5009, %v5008
      %v5021 = vpack.c.b16 %v5011, %v5010
      %v5022 = vpack.c.b16 %v5013, %v5012
      %v5023 = vpack.c.b16 %v5015, %v5014
      %v5024 = vpack.c.b16 %v5017, %v5016
      %v5025 = vpack.c.b16 %v5018, %v5018
      %vm5032 = vcmask 818176
      %v5034 = vsel %vm5032, %v4964, 0
      %v5037 = vsel %vm5032, %v4965, 0
      %v5040 = vsel %vm5032, %v4966, 0
      %v5043 = vsel %vm5032, %v4967, 0
      %v5046 = vsel %vm5032, %v4968, 0
      %v5049 = vsel %vm5032, %v4969, 0
      %v5052 = vsel %vm5032, %v4970, 0
      %v5055 = vsel %vm5032, %v4971, 0
      %v5058 = vsel %vm5032, %v4972, 0
      %v5061 = vsel %vm5032, %v4973, 0
      %v5064 = vsel %vm5032, %v4974, 0
      %v5067 = vsel %vm5032, %v4975, 0
      %v5070 = vsel %vm5032, %v4976, 0
      %v5073 = vsel %vm5032, %v4977, 0
      %v5076 = vsel %vm5032, %v4978, 0
      %v5079 = vsel %vm5032, %v4979, 0
      %vm5081 = vcmask 1041408
      %v5083 = vsel %vm5081, %v5025, 0
      %5085 = vmatprep.subr.bf16.mxu0 0
      %5086 = vmatpush1.bf16.msra.mxu0 %v5019
      %5087 = vmatprep.subr.bf16.mxu0 0
      %5088 = vmatpush1.bf16.msra.mxu0 %v5020
      %5089 = vmatprep.subr.bf16.mxu0 0
      %5090 = vmatpush1.bf16.msra.mxu0 %v5021
      %5091 = vmatprep.subr.bf16.mxu0 0
      %5092 = vmatpush1.bf16.msra.mxu0 %v5022
      %5093 = vmatprep.subr.bf16.mxu0 0
      %5094 = vmatpush1.bf16.msra.mxu0 %v5023
      %5095 = vmatprep.subr.bf16.mxu0 0
      %5096 = vmatpush1.bf16.msra.mxu0 %v5024
      %5097 = vmatprep.subr.bf16.mxu0 0
      %5098 = vmatpush1.bf16.msra.mxu0 %v5083
      %5099 = vmatprep.subr.bf16.mxu0 0
      %5100 = vmatpush1.bf16.msra.mxu0 0
      %5101 = vmatprep.subr.bf16.mxu0 0
      %5102 = vmatpush1.bf16.msra.mxu0 0
      %5103 = vmatprep.subr.bf16.mxu0 0
      %5104 = vmatpush1.bf16.msra.mxu0 0
      %5105 = vmatprep.subr.bf16.mxu0 0
      %5106 = vmatpush1.bf16.msra.mxu0 0
      %5107 = vmatprep.subr.bf16.mxu0 0
      %5108 = vmatpush1.bf16.msra.mxu0 0
      %5109 = vmatprep.subr.bf16.mxu0 0
      %5110 = vmatpush1.bf16.msra.mxu0 0
      %5111 = vmatprep.subr.bf16.mxu0 0
      %5112 = vmatpush1.bf16.msra.mxu0 0
      %5113 = vmatprep.subr.bf16.mxu0 0
      %5114 = vmatpush1.bf16.msra.mxu0 0
      %5115 = vmatprep.subr.bf16.mxu0 0
      %5116 = vmatpush1.bf16.msra.mxu0 0
      %5117 = vmatprep.mubr.bf16.mxu0 0
      %5118 = vmatmul.mubr.bf16.gmra.mrb[0].mxu0 %v5034
      %v5119 = vpop.f32.mrb[0].mxu0
      %v5120 = vadd.f32 0.0, %v5119
      %v5121 = vpop.f32.mrb[0].mxu0
      %v5122 = vpop.f32.mrb[0].mxu0
      %v5123 = vadd.f32 0.0, %v5122
      %v5124 = vpop.f32.mrb[0].mxu0
      %5125 = vmatprep.mubr.bf16.mxu0 0
      %5126 = vmatmul.mubr.bf16.gmra.mrb[0].mxu0 %v5037
      %v5127 = vpop.f32.mrb[0].mxu0
      %v5128 = vadd.f32 0.0, %v5127
      %v5129 = vpop.f32.mrb[0].mxu0
      %v5130 = vpop.f32.mrb[0].mxu0
      %v5131 = vadd.f32 0.0, %v5130
      %v5132 = vpop.f32.mrb[0].mxu0
      %5133 = vmatprep.mubr.bf16.mxu0 0
      %5134 = vmatmul.mubr.bf16.gmra.mrb[0].mxu0 %v5040
      %v5135 = vpop.f32.mrb[0].mxu0
      %v5136 = vadd.f32 0.0, %v5135
      %v5137 = vpop.f32.mrb[0].mxu0
      %v5138 = vpop.f32.mrb[0].mxu0
      %v5139 = vadd.f32 0.0, %v5138
      %v5140 = vpop.f32.mrb[0].mxu0
      %5141 = vmatprep.mubr.bf16.mxu0 0
      %5142 = vmatmul.mubr.bf16.gmra.mrb[0].mxu0 %v5043
      %v5143 = vpop.f32.mrb[0].mxu0
      %v5144 = vadd.f32 0.0, %v5143
      %v5145 = vpop.f32.mrb[0].mxu0
      %v5146 = vpop.f32.mrb[0].mxu0
      %v5147 = vadd.f32 0.0, %v5146
      %v5148 = vpop.f32.mrb[0].mxu0
      %5149 = vmatprep.mubr.bf16.mxu0 0
      %5150 = vmatmul.mubr.bf16.gmra.mrb[0].mxu0 %v5046
      %v5151 = vpop.f32.mrb[0].mxu0
      %v5152 = vadd.f32 0.0, %v5151
      %v5153 = vpop.f32.mrb[0].mxu0
      %v5154 = vpop.f32.mrb[0].mxu0
      %v5155 = vadd.f32 0.0, %v5154
      %v5156 = vpop.f32.mrb[0].mxu0
      %5157 = vmatprep.mubr.bf16.mxu0 0
      %5158 = vmatmul.mubr.bf16.gmra.mrb[0].mxu0 %v5049
      %v5159 = vpop.f32.mrb[0].mxu0
      %v5160 = vadd.f32 0.0, %v5159
      %v5161 = vpop.f32.mrb[0].mxu0
      %v5162 = vpop.f32.mrb[0].mxu0
      %v5163 = vadd.f32 0.0, %v5162
      %v5164 = vpop.f32.mrb[0].mxu0
      %5165 = vmatprep.mubr.bf16.mxu0 0
      %5166 = vmatmul.mubr.bf16.gmra.mrb[0].mxu0 %v5052
      %v5167 = vpop.f32.mrb[0].mxu0
      %v5168 = vadd.f32 0.0, %v5167
      %v5169 = vpop.f32.mrb[0].mxu0
      %v5170 = vpop.f32.mrb[0].mxu0
      %v5171 = vadd.f32 0.0, %v5170
      %v5172 = vpop.f32.mrb[0].mxu0
      %5173 = vmatprep.mubr.bf16.mxu0 0
      %5174 = vmatmul.mubr.bf16.gmra.mrb[0].mxu0 %v5055
      %v5175 = vpop.f32.mrb[0].mxu0
      %v5176 = vadd.f32 0.0, %v5175
      %v5177 = vpop.f32.mrb[0].mxu0
      %v5178 = vpop.f32.mrb[0].mxu0
      %v5179 = vadd.f32 0.0, %v5178
      %v5180 = vpop.f32.mrb[0].mxu0
      %5181 = vmatprep.mubr.bf16.mxu0 0
      %5182 = vmatmul.mubr.bf16.gmra.mrb[0].mxu0 %v5058
      %v5183 = vpop.f32.mrb[0].mxu0
      %v5184 = vadd.f32 0.0, %v5183
      %v5185 = vpop.f32.mrb[0].mxu0
      %v5186 = vpop.f32.mrb[0].mxu0
      %v5187 = vadd.f32 0.0, %v5186
      %v5188 = vpop.f32.mrb[0].mxu0
      %5189 = vmatprep.mubr.bf16.mxu0 0
      %5190 = vmatmul.mubr.bf16.gmra.mrb[0].mxu0 %v5061
      %v5191 = vpop.f32.mrb[0].mxu0
      %v5192 = vadd.f32 0.0, %v5191
      %v5193 = vpop.f32.mrb[0].mxu0
      %v5194 = vpop.f32.mrb[0].mxu0
      %v5195 = vadd.f32 0.0, %v5194
      %v5196 = vpop.f32.mrb[0].mxu0
      %5197 = vmatprep.mubr.bf16.mxu0 0
      %5198 = vmatmul.mubr.bf16.gmra.mrb[0].mxu0 %v5064
      %v5199 = vpop.f32.mrb[0].mxu0
      %v5200 = vadd.f32 0.0, %v5199
      %v5201 = vpop.f32.mrb[0].mxu0
      %v5202 = vpop.f32.mrb[0].mxu0
      %v5203 = vadd.f32 0.0, %v5202
      %v5204 = vpop.f32.mrb[0].mxu0
      %5205 = vmatprep.mubr.bf16.mxu0 0
      %5206 = vmatmul.mubr.bf16.gmra.mrb[0].mxu0 %v5067
      %v5207 = vpop.f32.mrb[0].mxu0
      %v5208 = vadd.f32 0.0, %v5207
      %v5209 = vpop.f32.mrb[0].mxu0
      %v5210 = vpop.f32.mrb[0].mxu0
      %v5211 = vadd.f32 0.0, %v5210
      %v5212 = vpop.f32.mrb[0].mxu0
      %5213 = vmatprep.mubr.bf16.mxu0 0
      %5214 = vmatmul.mubr.bf16.gmra.mrb[0].mxu0 %v5070
      %v5215 = vpop.f32.mrb[0].mxu0
      %v5216 = vadd.f32 0.0, %v5215
      %v5217 = vpop.f32.mrb[0].mxu0
      %v5218 = vpop.f32.mrb[0].mxu0
      %v5219 = vadd.f32 0.0, %v5218
      %v5220 = vpop.f32.mrb[0].mxu0
      %5221 = vmatprep.mubr.bf16.mxu0 0
      %5222 = vmatmul.mubr.bf16.gmra.mrb[0].mxu0 %v5073
      %v5223 = vpop.f32.mrb[0].mxu0
      %v5224 = vadd.f32 0.0, %v5223
      %v5225 = vpop.f32.mrb[0].mxu0
      %v5226 = vpop.f32.mrb[0].mxu0
      %v5227 = vadd.f32 0.0, %v5226
      %v5228 = vpop.f32.mrb[0].mxu0
      %5229 = vmatprep.mubr.bf16.mxu0 0
      %5230 = vmatmul.mubr.bf16.gmra.mrb[0].mxu0 %v5076
      %v5231 = vpop.f32.mrb[0].mxu0
      %v5232 = vadd.f32 0.0, %v5231
      %v5233 = vpop.f32.mrb[0].mxu0
      %v5234 = vpop.f32.mrb[0].mxu0
      %v5235 = vadd.f32 0.0, %v5234
      %v5236 = vpop.f32.mrb[0].mxu0
      %5237 = vmatprep.mubr.bf16.mxu0 0
      %5238 = vmatmul.mubr.bf16.gmra.mrb[0].mxu0 %v5079
      %v5239 = vpop.f32.mrb[0].mxu0
      %v5240 = vadd.f32 0.0, %v5239
      %v5241 = vpop.f32.mrb[0].mxu0
      %v5242 = vpop.f32.mrb[0].mxu0
      %v5243 = vadd.f32 0.0, %v5242
      %v5244 = vpop.f32.mrb[0].mxu0
      %5245 = vdwg.mxu0
      %vm5246 = vcmask 1045504
      %v5247 = vrot.slane %v369, 2
      %v5248 = vrot.slane %v370, 2
      %v5249 = vsel %vm5246, %v5247, %v5248
      %v5250 = vrot.slane %v371, 2
      %v5251 = vsel %vm5246, %v5248, %v5250
      %v5252 = vrot.slane %v372, 2
      %v5253 = vrot.slane %v373, 2
      %v5254 = vsel %vm5246, %v5252, %v5253
      %v5255 = vrot.slane %v374, 2
      %v5256 = vsel %vm5246, %v5253, %v5255
      %v5257 = vrot.slane %v375, 2
      %v5258 = vrot.slane %v376, 2
      %v5259 = vsel %vm5246, %v5257, %v5258
      %v5260 = vrot.slane %v377, 2
      %v5261 = vsel %vm5246, %v5258, %v5260
      %v5262 = vrot.slane %v378, 2
      %v5263 = vrot.slane %v379, 2
      %v5264 = vsel %vm5246, %v5262, %v5263
      %v5265 = vrot.slane %v380, 2
      %v5266 = vsel %vm5246, %v5263, %v5265
      %v5267 = vrot.slane %v381, 2
      %v5268 = vrot.slane %v382, 2
      %v5269 = vsel %vm5246, %v5267, %v5268
      %v5270 = vrot.slane %v383, 2
      %v5271 = vsel %vm5246, %v5268, %v5270
      %v5272 = vrot.slane %v384, 2
      %v5273 = vrot.slane %v385, 2
      %v5274 = vsel %vm5246, %v5272, %v5273
      %v5275 = vrot.slane %v386, 2
      %v5276 = vsel %vm5246, %v5273, %v5275
      %v5277 = vrot.slane %v387, 2
      %v5278 = vrot.slane %v388, 2
      %v5279 = vsel %vm5246, %v5277, %v5278
      %v5280 = vrot.slane %v389, 2
      %v5281 = vsel %vm5246, %v5278, %v5280
      %v5282 = vrot.slane %v390, 2
      %v5283 = vrot.slane %v391, 2
      %v5284 = vsel %vm5246, %v5282, %v5283
      %v5285 = vrot.slane %v392, 2
      %v5286 = vsel %vm5246, %v5283, %v5285
      %v5287 = vrot.slane %v393, 2
      %v5288 = vrot.slane %v394, 2
      %v5289 = vsel %vm5246, %v5287, %v5288
      %v5290 = vrot.slane %v395, 2
      %v5291 = vsel %vm5246, %v5288, %v5290
      %v5292 = vrot.slane %v396, 2
      %v5293 = vrot.slane %v397, 2
      %v5294 = vsel %vm5246, %v5292, %v5293
      %v5295 = vrot.slane %v398, 2
      %v5296 = vsel %vm5246, %v5293, %v5295
      %v5297 = vrot.slane %v399, 2
      %v5298 = vrot.slane %v400, 2
      %v5299 = vsel %vm5246, %v5297, %v5298
      %v5300 = vrot.slane %v401, 2
      %v5301 = vsel %vm5246, %v5298, %v5300
      %v5302 = vrot.slane %v402, 2
      %v5303 = vrot.slane %v403, 2
      %v5304 = vsel %vm5246, %v5302, %v5303
      %v5305 = vrot.slane %v404, 2
      %v5306 = vsel %vm5246, %v5303, %v5305
      %v5307 = vrot.slane %v405, 2
      %v5308 = vrot.slane %v406, 2
      %v5309 = vsel %vm5246, %v5307, %v5308
      %v5310 = vrot.slane %v407, 2
      %v5311 = vsel %vm5246, %v5308, %v5310
      %v5312 = vrot.slane %v408, 2
      %v5313 = vrot.slane %v409, 2
      %v5314 = vsel %vm5246, %v5312, %v5313
      %v5315 = vrot.slane %v410, 2
      %v5316 = vsel %vm5246, %v5313, %v5315
      %v5317 = vrot.slane %v411, 2
      %v5318 = vrot.slane %v412, 2
      %v5319 = vsel %vm5246, %v5317, %v5318
      %v5320 = vrot.slane %v413, 2
      %v5321 = vsel %vm5246, %v5318, %v5320
      %v5322 = vrot.slane %v414, 2
      %v5323 = vrot.slane %v415, 2
      %v5324 = vsel %vm5246, %v5322, %v5323
      %v5325 = vrot.slane %v416, 2
      %v5326 = vsel %vm5246, %v5323, %v5325
      %v5359 = vadd.f32 %v5120, %v5249
      %v5360 = vadd.f32 %v5123, %v5251
      %v5361 = vadd.f32 %v5128, %v5254
      %v5362 = vadd.f32 %v5131, %v5256
      %v5363 = vadd.f32 %v5136, %v5259
      %v5364 = vadd.f32 %v5139, %v5261
      %v5365 = vadd.f32 %v5144, %v5264
      %v5366 = vadd.f32 %v5147, %v5266
      %v5367 = vadd.f32 %v5152, %v5269
      %v5368 = vadd.f32 %v5155, %v5271
      %v5369 = vadd.f32 %v5160, %v5274
      %v5370 = vadd.f32 %v5163, %v5276
      %v5371 = vadd.f32 %v5168, %v5279
      %v5372 = vadd.f32 %v5171, %v5281
      %v5373 = vadd.f32 %v5176, %v5284
      %v5374 = vadd.f32 %v5179, %v5286
      %v5375 = vadd.f32 %v5184, %v5289
      %v5376 = vadd.f32 %v5187, %v5291
      %v5377 = vadd.f32 %v5192, %v5294
      %v5378 = vadd.f32 %v5195, %v5296
      %v5379 = vadd.f32 %v5200, %v5299
      %v5380 = vadd.f32 %v5203, %v5301
      %v5381 = vadd.f32 %v5208, %v5304
      %v5382 = vadd.f32 %v5211, %v5306
      %v5383 = vadd.f32 %v5216, %v5309
      %v5384 = vadd.f32 %v5219, %v5311
      %v5385 = vadd.f32 %v5224, %v5314
      %v5386 = vadd.f32 %v5227, %v5316
      %v5387 = vadd.f32 %v5232, %v5319
      %v5388 = vadd.f32 %v5235, %v5321
      %v5389 = vadd.f32 %v5240, %v5324
      %v5390 = vadd.f32 %v5243, %v5326
      %5391 = vst.msk [vmem:[%s177] sm:$0xff] %vm423, %v5359
      %5392 = vst.msk [vmem:[%s177 + $0x8] sm:$0xff] %vm423, %v5360
      %5393 = vst.msk [vmem:[%s177 + $0x10] sm:$0xff] %vm423, %v5361
      %5394 = vst.msk [vmem:[%s177 + $0x18] sm:$0xff] %vm423, %v5362
      %5395 = vst.msk [vmem:[%s177 + $0x20] sm:$0xff] %vm423, %v5363
      %5396 = vst.msk [vmem:[%s177 + $0x28] sm:$0xff] %vm423, %v5364
      %5397 = vst.msk [vmem:[%s177 + $0x30] sm:$0xff] %vm423, %v5365
      %5398 = vst.msk [vmem:[%s177 + $0x38] sm:$0xff] %vm423, %v5366
      %5399 = vst.msk [vmem:[%s177 + $0x40] sm:$0xff] %vm423, %v5367
      %5400 = vst.msk [vmem:[%s177 + $0x48] sm:$0xff] %vm423, %v5368
      %5401 = vst.msk [vmem:[%s177 + $0x50] sm:$0xff] %vm423, %v5369
      %5402 = vst.msk [vmem:[%s177 + $0x58] sm:$0xff] %vm423, %v5370
      %5403 = vst.msk [vmem:[%s177 + $0x60] sm:$0xff] %vm423, %v5371
      %5404 = vst.msk [vmem:[%s177 + $0x68] sm:$0xff] %vm423, %v5372
      %5405 = vst.msk [vmem:[%s177 + $0x70] sm:$0xff] %vm423, %v5373
      %5406 = vst.msk [vmem:[%s177 + $0x78] sm:$0xff] %vm423, %v5374
      %5407 = vst.msk [vmem:[%s177 + $0x80] sm:$0xff] %vm423, %v5375
      %5408 = vst.msk [vmem:[%s177 + $0x88] sm:$0xff] %vm423, %v5376
      %5409 = vst.msk [vmem:[%s177 + $0x90] sm:$0xff] %vm423, %v5377
      %5410 = vst.msk [vmem:[%s177 + $0x98] sm:$0xff] %vm423, %v5378
      %5411 = vst.msk [vmem:[%s177 + $0xa0] sm:$0xff] %vm423, %v5379
      %5412 = vst.msk [vmem:[%s177 + $0xa8] sm:$0xff] %vm423, %v5380
      %5413 = vst.msk [vmem:[%s177 + $0xb0] sm:$0xff] %vm423, %v5381
      %5414 = vst.msk [vmem:[%s177 + $0xb8] sm:$0xff] %vm423, %v5382
      %5415 = vst.msk [vmem:[%s177 + $0xc0] sm:$0xff] %vm423, %v5383
      %5416 = vst.msk [vmem:[%s177 + $0xc8] sm:$0xff] %vm423, %v5384
      %5417 = vst.msk [vmem:[%s177 + $0xd0] sm:$0xff] %vm423, %v5385
      %5418 = vst.msk [vmem:[%s177 + $0xd8] sm:$0xff] %vm423, %v5386
      %5419 = vst.msk [vmem:[%s177 + $0xe0] sm:$0xff] %vm423, %v5387
      %5420 = vst.msk [vmem:[%s177 + $0xe8] sm:$0xff] %vm423, %v5388
      %5421 = vst.msk [vmem:[%s177 + $0xf0] sm:$0xff] %vm423, %v5389
      %5422 = vst.msk [vmem:[%s177 + $0xf8] sm:$0xff] %vm423, %v5390
      %v5423 = vsel %vm423, %v5359, 0.0
      %v5424 = vsel %vm423, %v5361, 0.0
      %v5425 = vadd.f32 %v5423, %v5424
      %v5426 = vsel %vm423, %v5363, 0.0
      %v5427 = vadd.f32 %v5425, %v5426
      %v5428 = vsel %vm423, %v5365, 0.0
      %v5429 = vadd.f32 %v5427, %v5428
      %v5430 = vsel %vm423, %v5367, 0.0
      %v5431 = vadd.f32 %v5429, %v5430
      %v5432 = vsel %vm423, %v5369, 0.0
      %v5433 = vadd.f32 %v5431, %v5432
      %v5434 = vsel %vm423, %v5371, 0.0
      %v5435 = vadd.f32 %v5433, %v5434
      %v5436 = vsel %vm423, %v5373, 0.0
      %v5437 = vadd.f32 %v5435, %v5436
      %v5438 = vsel %vm423, %v5375, 0.0
      %v5439 = vadd.f32 %v5437, %v5438
      %v5440 = vsel %vm423, %v5377, 0.0
      %v5441 = vadd.f32 %v5439, %v5440
      %v5442 = vsel %vm423, %v5379, 0.0
      %v5443 = vadd.f32 %v5441, %v5442
      %v5444 = vsel %vm423, %v5381, 0.0
      %v5445 = vadd.f32 %v5443, %v5444
      %v5446 = vsel %vm423, %v5383, 0.0
      %v5447 = vadd.f32 %v5445, %v5446
      %v5448 = vsel %vm423, %v5385, 0.0
      %v5449 = vadd.f32 %v5447, %v5448
      %v5450 = vsel %vm423, %v5387, 0.0
      %v5451 = vadd.f32 %v5449, %v5450
      %v5452 = vsel %vm423, %v5389, 0.0
      %v5453 = vadd.f32 %v5451, %v5452
      %v5454 = vsel %vm423, %v5360, 0.0
      %v5455 = vsel %vm423, %v5362, 0.0
      %v5456 = vadd.f32 %v5454, %v5455
      %v5457 = vsel %vm423, %v5364, 0.0
      %v5458 = vadd.f32 %v5456, %v5457
      %v5459 = vsel %vm423, %v5366, 0.0
      %v5460 = vadd.f32 %v5458, %v5459
      %v5461 = vsel %vm423, %v5368, 0.0
      %v5462 = vadd.f32 %v5460, %v5461
      %v5463 = vsel %vm423, %v5370, 0.0
      %v5464 = vadd.f32 %v5462, %v5463
      %v5465 = vsel %vm423, %v5372, 0.0
      %v5466 = vadd.f32 %v5464, %v5465
      %v5467 = vsel %vm423, %v5374, 0.0
      %v5468 = vadd.f32 %v5466, %v5467
      %v5469 = vsel %vm423, %v5376, 0.0
      %v5470 = vadd.f32 %v5468, %v5469
      %v5471 = vsel %vm423, %v5378, 0.0
      %v5472 = vadd.f32 %v5470, %v5471
      %v5473 = vsel %vm423, %v5380, 0.0
      %v5474 = vadd.f32 %v5472, %v5473
      %v5475 = vsel %vm423, %v5382, 0.0
      %v5476 = vadd.f32 %v5474, %v5475
      %v5477 = vsel %vm423, %v5384, 0.0
      %v5478 = vadd.f32 %v5476, %v5477
      %v5479 = vsel %vm423, %v5386, 0.0
      %v5480 = vadd.f32 %v5478, %v5479
      %v5481 = vsel %vm423, %v5388, 0.0
      %v5482 = vadd.f32 %v5480, %v5481
      %v5483 = vsel %vm423, %v5390, 0.0
      %v5484 = vadd.f32 %v5482, %v5483
      %v5485 = vsel %vm423, %v5453, 0.0
      %v5486 = vsel %vm423, %v5484, 0.0
      %v5487 = vadd.f32 %v5485, %v5486
      %v5488 = vrot.slane %v5487, 4
      %v5489 = vadd.f32 %v5487, %v5488
      %v5490 = vrot.slane %v5489, 2
      %v5491 = vadd.f32 %v5489, %v5490
      %v5492 = vrot.slane %v5491, 1
      %v5493 = vadd.f32 %v5491, %v5492
      %v5494 = vmul.f32 %v5359, %v5359
      %v5495 = vmul.f32 %v5360, %v5360
      %v5496 = vmul.f32 %v5361, %v5361
      %v5497 = vmul.f32 %v5362, %v5362
      %v5498 = vmul.f32 %v5363, %v5363
      %v5499 = vmul.f32 %v5364, %v5364
      %v5500 = vmul.f32 %v5365, %v5365
      %v5501 = vmul.f32 %v5366, %v5366
      %v5502 = vmul.f32 %v5367, %v5367
      %v5503 = vmul.f32 %v5368, %v5368
      %v5504 = vmul.f32 %v5369, %v5369
      %v5505 = vmul.f32 %v5370, %v5370
      %v5506 = vmul.f32 %v5371, %v5371
      %v5507 = vmul.f32 %v5372, %v5372
      %v5508 = vmul.f32 %v5373, %v5373
      %v5509 = vmul.f32 %v5374, %v5374
      %v5510 = vmul.f32 %v5375, %v5375
      %v5511 = vmul.f32 %v5376, %v5376
      %v5512 = vmul.f32 %v5377, %v5377
      %v5513 = vmul.f32 %v5378, %v5378
      %v5514 = vmul.f32 %v5379, %v5379
      %v5515 = vmul.f32 %v5380, %v5380
      %v5516 = vmul.f32 %v5381, %v5381
      %v5517 = vmul.f32 %v5382, %v5382
      %v5518 = vmul.f32 %v5383, %v5383
      %v5519 = vmul.f32 %v5384, %v5384
      %v5520 = vmul.f32 %v5385, %v5385
      %v5521 = vmul.f32 %v5386, %v5386
      %v5522 = vmul.f32 %v5387, %v5387
      %v5523 = vmul.f32 %v5388, %v5388
      %v5524 = vmul.f32 %v5389, %v5389
      %v5525 = vmul.f32 %v5390, %v5390
      %v5526 = vsel %vm423, %v5494, 0.0
      %v5527 = vsel %vm423, %v5496, 0.0
      %v5528 = vadd.f32 %v5526, %v5527
      %v5529 = vsel %vm423, %v5498, 0.0
      %v5530 = vadd.f32 %v5528, %v5529
      %v5531 = vsel %vm423, %v5500, 0.0
      %v5532 = vadd.f32 %v5530, %v5531
      %v5533 = vsel %vm423, %v5502, 0.0
      %v5534 = vadd.f32 %v5532, %v5533
      %v5535 = vsel %vm423, %v5504, 0.0
      %v5536 = vadd.f32 %v5534, %v5535
      %v5537 = vsel %vm423, %v5506, 0.0
      %v5538 = vadd.f32 %v5536, %v5537
      %v5539 = vsel %vm423, %v5508, 0.0
      %v5540 = vadd.f32 %v5538, %v5539
      %v5541 = vsel %vm423, %v5510, 0.0
      %v5542 = vadd.f32 %v5540, %v5541
      %v5543 = vsel %vm423, %v5512, 0.0
      %v5544 = vadd.f32 %v5542, %v5543
      %v5545 = vsel %vm423, %v5514, 0.0
      %v5546 = vadd.f32 %v5544, %v5545
      %v5547 = vsel %vm423, %v5516, 0.0
      %v5548 = vadd.f32 %v5546, %v5547
      %v5549 = vsel %vm423, %v5518, 0.0
      %v5550 = vadd.f32 %v5548, %v5549
      %v5551 = vsel %vm423, %v5520, 0.0
      %v5552 = vadd.f32 %v5550, %v5551
      %v5553 = vsel %vm423, %v5522, 0.0
      %v5554 = vadd.f32 %v5552, %v5553
      %v5555 = vsel %vm423, %v5524, 0.0
      %v5556 = vadd.f32 %v5554, %v5555
      %v5557 = vsel %vm423, %v5495, 0.0
      %v5558 = vsel %vm423, %v5497, 0.0
      %v5559 = vadd.f32 %v5557, %v5558
      %v5560 = vsel %vm423, %v5499, 0.0
      %v5561 = vadd.f32 %v5559, %v5560
      %v5562 = vsel %vm423, %v5501, 0.0
      %v5563 = vadd.f32 %v5561, %v5562
      %v5564 = vsel %vm423, %v5503, 0.0
      %v5565 = vadd.f32 %v5563, %v5564
      %v5566 = vsel %vm423, %v5505, 0.0
      %v5567 = vadd.f32 %v5565, %v5566
      %v5568 = vsel %vm423, %v5507, 0.0
      %v5569 = vadd.f32 %v5567, %v5568
      %v5570 = vsel %vm423, %v5509, 0.0
      %v5571 = vadd.f32 %v5569, %v5570
      %v5572 = vsel %vm423, %v5511, 0.0
      %v5573 = vadd.f32 %v5571, %v5572
      %v5574 = vsel %vm423, %v5513, 0.0
      %v5575 = vadd.f32 %v5573, %v5574
      %v5576 = vsel %vm423, %v5515, 0.0
      %v5577 = vadd.f32 %v5575, %v5576
      %v5578 = vsel %vm423, %v5517, 0.0
      %v5579 = vadd.f32 %v5577, %v5578
      %v5580 = vsel %vm423, %v5519, 0.0
      %v5581 = vadd.f32 %v5579, %v5580
      %v5582 = vsel %vm423, %v5521, 0.0
      %v5583 = vadd.f32 %v5581, %v5582
      %v5584 = vsel %vm423, %v5523, 0.0
      %v5585 = vadd.f32 %v5583, %v5584
      %v5586 = vsel %vm423, %v5525, 0.0
      %v5587 = vadd.f32 %v5585, %v5586
      %v5588 = vsel %vm423, %v5556, 0.0
      %v5589 = vsel %vm423, %v5587, 0.0
      %v5590 = vadd.f32 %v5588, %v5589
      %v5591 = vrot.slane %v5590, 4
      %v5592 = vadd.f32 %v5590, %v5591
      %v5593 = vrot.slane %v5592, 2
      %v5594 = vadd.f32 %v5592, %v5593
      %v5595 = vrot.slane %v5594, 1
      %v5596 = vadd.f32 %v5594, %v5595
      %vm5597 = vcmask 24576
      %5598 = vst.msk [vmem:[%s181] sm:$0x1] %vm5597, %v5493
      %5599 = vst.msk [vmem:[%s181 + $0x1] sm:$0x1] %vm5597, %v5596
      %p5600 = scmp.lt.s32.totalorder %s15, 1
      %s5601 = scalar_select %p5600, %s15, 1
      %s5602 = smul.addr %s5601, 32
      %s5603 = smul.addr %s5602, 8
      %s5604 = scalar_lea.vmem %s2, %s5603
      %p5605 = scmp.lt.s32.totalorder %s15, 1
      %s5606 = scalar_select %p5605, %s15, 1
      %s5607 = smul.addr %s5606, 2
      %s5608 = scalar_lea.vmem %s3, %s5607
      // Predicated region
      $region29: #{skip_block_forward.2} parent=27 // pred_check
        %p5609 = pneg %p80
      $region30: #{skip_block_forward.2} parent=27 // pred_check_branch
        %5611 = sbr.rel (%p5609) target = $region32
      $region31: #{skip_block_forward.2} parent=27 // pred_region
        _
      $region32: #{skip_block_forward.2} parent=27 // pred_fallthru
        _
      // Predicated region
      $region33: #{skip_block_forward.2} parent=27 // pred_check
        %p5612 = pneg %p106
      $region34: #{skip_block_forward.2} parent=27 // pred_check_branch
        %5614 = sbr.rel (%p5612) target = $region36
      $region35: #{skip_block_forward.2} parent=27 // pred_region
        _
      $region36: #{skip_block_forward.2} parent=27 // pred_fallthru
        _
    $region28: #{skip_block_forward.2} parent=5 // pred_fallthru
      _
    %p5615 = scmp.le.s32.totalorder 2, %s10
    // Predicated region
    $region37: #{skip_block_forward.2} parent=5 // pred_check
      %p5616 = pneg %p5615
    $region38: #{skip_block_forward.2} parent=5 // pred_check_branch
      %5618 = sbr.rel (%p5616) target = $region40
    $region39: #{skip_block_forward.2} parent=5 // pred_region
      %s5619 = ssub.s32 %s10, 2
      // Predicated region
      $region41: #{skip_block_forward.2} parent=39 // pred_check
        %p5620 = pneg %p86
      $region42: #{skip_block_forward.2} parent=39 // pred_check_branch
        %5622 = sbr.rel (%p5620) target = $region44
      $region43: #{skip_block_forward.2} parent=39 // pred_region
        %p5623 = scmp.lt.s32.totalorder %s16, 1
        %s5624 = scalar_select %p5623, %s16, 1
        %s5625 = smul.addr %s5624, 32
        %s5626 = smul.addr %s5625, 8
        %s5627 = scalar_lea.vmem %s2, %s5626
      $region44: #{skip_block_forward.2} parent=39 // pred_fallthru
        _
      // Predicated region
      $region45: #{skip_block_forward.2} parent=39 // pred_check
        %p5628 = pneg %p112
      $region46: #{skip_block_forward.2} parent=39 // pred_check_branch
        %5630 = sbr.rel (%p5628) target = $region48
      $region47: #{skip_block_forward.2} parent=39 // pred_region
        %p5631 = scmp.lt.s32.totalorder %s16, 1
        %s5632 = scalar_select %p5631, %s16, 1
        %s5633 = smul.addr %s5632, 2
        %s5634 = scalar_lea.vmem %s3, %s5633
      $region48: #{skip_block_forward.2} parent=39 // pred_fallthru
        _
    $region40: #{skip_block_forward.2} parent=5 // pred_fallthru
      _
  $region6: #{skip_block_forward.2} parent=0 // loop_footer
    %s14 = sadd.s32 1, %s10
  $region7: #{skip_block_forward.2} parent=0 // loop_footer_branch
    %9 = sbr.rel target = $region3
  $region8: #{skip_block_forward.2} parent=0 // loop_exit
    _

</llo_original>
